<compile_context>
chip_gen: v7x
topology: tpu7x:2x2x1
jax: 0.10.0
libtpu: 0.0.40
codegen_flags: <defaults>
</compile_context>

<pallas_src>
import jax
import jax.numpy as jnp
from jax import lax
from jax.experimental import pallas as pl
from jax.experimental.pallas import tpu as pltpu


def _round_up(x, m):
    return ((x + m - 1) // m) * m


# --------------------------------------------------------------------------- #
# Fused bidirectional LSTM recurrence kernel.
# Grid step g advances the forward direction over physical times
# [g*U, g*U+U) and the backward direction over [(nb-1-g)*U, (nb-1-g)*U+U)
# in descending order.  h/c state lives in VMEM scratch across grid steps.
# --------------------------------------------------------------------------- #
def _make_bilstm_kernel(U: int, nb: int, H: int):
    def kernel(gxf_ref, gxb_ref, lens_ref, whhf_ref, whhb_ref,
               outf_ref, outb_ref, hf_scr, cf_scr, hb_scr, cb_scr):
        g = pl.program_id(0)

        @pl.when(g == 0)
        def _():
            hf_scr[...] = jnp.zeros_like(hf_scr)
            cf_scr[...] = jnp.zeros_like(cf_scr)
            hb_scr[...] = jnp.zeros_like(hb_scr)
            cb_scr[...] = jnp.zeros_like(cb_scr)

        lens = lens_ref[...]                      # (B_p, 1) int32
        whh_f = whhf_ref[...]                     # (H, 4H) — resident, loaded once
        whh_b = whhb_ref[...]
        h_f, c_f = hf_scr[...], cf_scr[...]
        h_b, c_b = hb_scr[...], cb_scr[...]

        def cell(gx, whh, h, c):
            # ONE fused (B,H)x(H,4H) MXU matmul per cell; gx already holds
            # x@W_ih^T + b (hoisted).  Gate order i,f,g,o (PyTorch).
            gates = gx + jnp.dot(h, whh, preferred_element_type=jnp.float32)
            i_g = jax.nn.sigmoid(gates[:, 0 * H:1 * H])
            f_g = jax.nn.sigmoid(gates[:, 1 * H:2 * H])
            g_g = jnp.tanh(gates[:, 2 * H:3 * H])
            o_g = jax.nn.sigmoid(gates[:, 3 * H:4 * H])
            c_new = f_g * c + i_g * g_g
            h_new = o_g * jnp.tanh(c_new)
            return h_new, c_new

        # Static unroll; fwd & bwd interleaved so the two independent h-chains
        # overlap MXU/EUP latency.  (Tiny live set at these shapes — no spill.)
        for u in range(U):
            # ---- forward direction, physical time t_f ----
            t_f = g * U + u
            h_new, c_new = cell(gxf_ref[u], whh_f, h_f, c_f)
            valid = t_f < lens                    # (B_p, 1) bool
            h_f = jnp.where(valid, h_new, h_f)
            c_f = jnp.where(valid, c_new, c_f)
            outf_ref[u] = jnp.where(valid, h_new, 0.0)

            # ---- backward direction, physical time t_b (descending) ----
            v = U - 1 - u
            t_b = (nb - 1 - g) * U + v
            h_new, c_new = cell(gxb_ref[v], whh_b, h_b, c_b)
            valid = t_b < lens
            h_b = jnp.where(valid, h_new, h_b)
            c_b = jnp.where(valid, c_new, c_b)
            outb_ref[v] = jnp.where(valid, h_new, 0.0)

        hf_scr[...], cf_scr[...] = h_f, c_f
        hb_scr[...], cb_scr[...] = h_b, c_b

    return kernel


# --------------------------------------------------------------------------- #
# f_rnn forward (single bidirectional LSTM layer config).
# TODO(synk): GRU cells and multi-layer stacked configs are not implemented.
# --------------------------------------------------------------------------- #
def word_rnn_forward(ids, lens, params, *, unroll=8):
    """ids: (B, T, D) f32, lens: (B,) int (max(lens) == T). Returns (B, T, 2H)."""
    B, T, D = ids.shape
    H = params["whh_f"].shape[0]
    lens = lens.astype(jnp.int32)

    # --- pad batch to a sublane multiple (8); padded rows have len 0 → zeros ---
    B_p = max(8, _round_up(B, 8))
    if B_p != B:
        ids = jnp.pad(ids, ((0, B_p - B), (0, 0), (0, 0)))
        lens = jnp.pad(lens, (0, B_p - B))
    lens_col = lens[:, None]                                       # (B_p, 1)

    # --- hoisted input projection, emitted T-major directly ---
    # Transpose the SMALL (B,T,D) input before the GEMM (D << 4H) so the large
    # (T,B,4H) gates tensor never takes an extra HBM transpose pass.
    x_tm = jnp.transpose(ids, (1, 0, 2))                           # (T, B_p, D)

    def input_proj(wih_t, b):
        return jnp.einsum("tbd,dg->tbg", x_tm, wih_t,
                          preferred_element_type=jnp.float32) + b  # (T, B_p, 4H)

    gxf = input_proj(params["wih_f"], params["b_f"])
    gxb = input_proj(params["wih_b"], params["b_b"])

    # --- pad time to a multiple of the per-grid-step unroll U ---
    U = max(1, min(unroll, T))
    T_p = _round_up(T, U)
    if T_p != T:
        pad = ((0, T_p - T), (0, 0), (0, 0))
        gxf = jnp.pad(gxf, pad)
        gxb = jnp.pad(gxb, pad)
    nb = T_p // U

    kernel = _make_bilstm_kernel(U, nb, H)
    grid_spec = pltpu.PrefetchScalarGridSpec(
        num_scalar_prefetch=0,
        grid=(nb,),
        in_specs=[
            pl.BlockSpec((U, B_p, 4 * H), lambda g: (g, 0, 0)),           # gates_x fwd
            pl.BlockSpec((U, B_p, 4 * H), lambda g: (nb - 1 - g, 0, 0)),  # gates_x bwd (reversed)
            pl.BlockSpec((B_p, 1), lambda g: (0, 0)),                     # lens
            pl.BlockSpec((H, 4 * H), lambda g: (0, 0)),                   # W_hh fwd (H, 4H)
            pl.BlockSpec((H, 4 * H), lambda g: (0, 0)),                   # W_hh bwd
        ],
        out_specs=[
            pl.BlockSpec((U, B_p, H), lambda g: (g, 0, 0)),               # out fwd
            pl.BlockSpec((U, B_p, H), lambda g: (nb - 1 - g, 0, 0)),      # out bwd
        ],
        scratch_shapes=[pltpu.VMEM((B_p, H), jnp.float32)] * 4,           # h_f,c_f,h_b,c_b
    )
    out_f, out_b = pl.pallas_call(
        kernel,
        out_shape=(jax.ShapeDtypeStruct((T_p, B_p, H), jnp.float32),
                   jax.ShapeDtypeStruct((T_p, B_p, H), jnp.float32)),
        grid_spec=grid_spec,
        compiler_params=pltpu.CompilerParams(dimension_semantics=("arbitrary",)),
    )(gxf, gxb, lens_col, params["whh_f"], params["whh_b"])

    # nn.LSTM(bidirectional=True) concatenates [fwd, bwd] on the feature dim.
    out = jnp.concatenate([out_f[:T, :B], out_b[:T, :B]], axis=-1)  # (T, B, 2H)
    return jnp.transpose(out, (1, 0, 2))                            # (B, T, 2H)


# --------------------------------------------------------------------------- #
# Pure-JAX reference (lax.scan LSTM) for the correctness check.
# --------------------------------------------------------------------------- #
def _ref_lstm_dir(x, lens, w_ih, w_hh, b_ih, b_hh):
    B, T, D = x.shape
    H = w_hh.shape[1]

    def step(carry, inp):
        h, c = carry
        xt, t = inp
        gates = xt @ w_ih.T + h @ w_hh.T + b_ih + b_hh
        i = jax.nn.sigmoid(gates[:, 0 * H:1 * H])
        f = jax.nn.sigmoid(gates[:, 1 * H:2 * H])
        g = jnp.tanh(gates[:, 2 * H:3 * H])
        o = jax.nn.sigmoid(gates[:, 3 * H:4 * H])
        cn = f * c + i * g
        hn = o * jnp.tanh(cn)
        valid = (t < lens)[:, None]
        h2 = jnp.where(valid, hn, h)
        c2 = jnp.where(valid, cn, c)
        out = jnp.where(valid, hn, 0.0)
        return (h2, c2), out

    init = (jnp.zeros((B, H), jnp.float32), jnp.zeros((B, H), jnp.float32))
    _, outs = lax.scan(step, init, (jnp.transpose(x, (1, 0, 2)), jnp.arange(T)))
    return jnp.transpose(outs, (1, 0, 2))


def _ref_word_rnn(ids, lens, raw):
    B, T, D = ids.shape
    out_f = _ref_lstm_dir(ids, lens, raw["w_ih_f"], raw["w_hh_f"],
                          raw["b_ih_f"], raw["b_hh_f"])
    t_idx = jnp.arange(T)
    rev_idx = jnp.clip(lens[:, None] - 1 - t_idx[None, :], 0, T - 1)
    x_rev = jnp.take_along_axis(ids, rev_idx[:, :, None], axis=1)
    out_r = _ref_lstm_dir(x_rev, lens, raw["w_ih_b"], raw["w_hh_b"],
                          raw["b_ih_b"], raw["b_hh_b"])
    out_b = jnp.take_along_axis(out_r, rev_idx[:, :, None], axis=1)
    out_b = out_b * (t_idx[None, :, None] < lens[:, None, None]).astype(out_b.dtype)
    return jnp.concatenate([out_f, out_b], axis=-1)


# --------------------------------------------------------------------------- #
if __name__ == "__main__":
    # config: in_feats=D, conf=[{'cell':'lstm','dim':H,'n_layers':1,'bidirectional':True}]
    B, T, D, H = 4, 8, 16, 32

    key = jax.random.PRNGKey(0)
    k_ids, *k_w = jax.random.split(key, 9)

    ids = jax.random.normal(k_ids, (B, T, D), dtype=jnp.float32)
    lens = jnp.array([8, 5, 3, 6], dtype=jnp.int32)   # max(lens) == T

    # Deterministic LSTM parameters, PyTorch-style uniform(-1/sqrt(H), 1/sqrt(H)).
    bound = 1.0 / (H ** 0.5)
    u = lambda k, s: jax.random.uniform(k, s, jnp.float32, -bound, bound)
    raw = {
        "w_ih_f": u(k_w[0], (4 * H, D)), "w_hh_f": u(k_w[1], (4 * H, H)),
        "b_ih_f": u(k_w[2], (4 * H,)),   "b_hh_f": u(k_w[3], (4 * H,)),
        "w_ih_b": u(k_w[4], (4 * H, D)), "w_hh_b": u(k_w[5], (4 * H, H)),
        "b_ih_b": u(k_w[6], (4 * H,)),   "b_hh_b": u(k_w[7], (4 * H,)),
    }
    # Kernel-side layouts: transposed W_ih (D,4H), transposed W_hh (H,4H), fused biases.
    params = {
        "wih_f": raw["w_ih_f"].T,                    # (D, 4H)
        "whh_f": raw["w_hh_f"].T,                    # (H, 4H)
        "b_f":  raw["b_ih_f"] + raw["b_hh_f"],       # (4H,)
        "wih_b": raw["w_ih_b"].T,
        "whh_b": raw["w_hh_b"].T,
        "b_b":  raw["b_ih_b"] + raw["b_hh_b"],
    }

    fwd = jax.jit(word_rnn_forward)
    out = jax.block_until_ready(fwd(ids, lens, params))
    assert out.shape == (B, T, 2 * H), out.shape

    ref = jax.block_until_ready(_ref_word_rnn(ids, lens, raw))
    max_err = float(jnp.max(jnp.abs(out - ref)))
    assert max_err < 2e-3, f"mismatch vs reference: {max_err}"

    print("KERNEL_OK")
</pallas_src>

<mosaic_0001>
module attributes {stable_mosaic.version = 11 : i64} {
  func.func @kernel(%arg0: i32, %arg1: memref<8x8x128xf32, #tpu.memory_space<vmem>>, %arg2: memref<8x8x128xf32, #tpu.memory_space<vmem>>, %arg3: memref<8x1xi32, #tpu.memory_space<vmem>>, %arg4: memref<32x128xf32, #tpu.memory_space<vmem>>, %arg5: memref<32x128xf32, #tpu.memory_space<vmem>>, %arg6: memref<8x8x32xf32, #tpu.memory_space<vmem>>, %arg7: memref<8x8x32xf32, #tpu.memory_space<vmem>>, %arg8: memref<8x32xf32, #tpu.memory_space<vmem>>, %arg9: memref<8x32xf32, #tpu.memory_space<vmem>>, %arg10: memref<8x32xf32, #tpu.memory_space<vmem>>, %arg11: memref<8x32xf32, #tpu.memory_space<vmem>>) attributes {dimension_semantics = [#tpu.dimension_semantics<arbitrary>], iteration_bounds = array<i64: 1>, scalar_prefetch = 0 : i64, scratch_operands = 4 : i64, tpu.core_type = #tpu.core_type<tc>, window_params = [{transform_indices = @transform_0, window_bounds = array<i64: 8, 8, 128>}, {transform_indices = @transform_1, window_bounds = array<i64: 8, 8, 128>}, {pipeline_mode = #tpu.pipeline_mode<synchronous>, transform_indices = @transform_2, window_bounds = array<i64: 8, 1>}, {pipeline_mode = #tpu.pipeline_mode<synchronous>, transform_indices = @transform_3, window_bounds = array<i64: 32, 128>}, {pipeline_mode = #tpu.pipeline_mode<synchronous>, transform_indices = @transform_4, window_bounds = array<i64: 32, 128>}, {transform_indices = @transform_5, window_bounds = array<i64: 8, 8, 32>}, {transform_indices = @transform_6, window_bounds = array<i64: 8, 8, 32>}]} {
    %c0_i32 = arith.constant 0 : i32
    %0 = arith.cmpi eq, %arg0, %c0_i32 : i32
    %1 = arith.extui %0 : i1 to i32
    %c0_i32_0 = arith.constant 0 : i32
    %2 = arith.cmpi ne, %1, %c0_i32_0 : i32
    scf.if %2 {
      %cst_222 = arith.constant 0.000000e+00 : f32
      %758 = vector.broadcast %cst_222 : f32 to vector<8x32xf32>
      %c0_223 = arith.constant 0 : index
      %c0_224 = arith.constant 0 : index
      %759 = vector.load %arg8[%c0_223, %c0_224] : memref<8x32xf32, #tpu.memory_space<vmem>>, vector<8x32xf32>
      tpu.vector_store %arg8[%c0_223, %c0_224], %758 {strides = array<i32>} : memref<8x32xf32, #tpu.memory_space<vmem>>, vector<8x32xf32>,
      %cst_225 = arith.constant 0.000000e+00 : f32
      %760 = vector.broadcast %cst_225 : f32 to vector<8x32xf32>
      %c0_226 = arith.constant 0 : index
      %c0_227 = arith.constant 0 : index
      %761 = vector.load %arg9[%c0_226, %c0_227] : memref<8x32xf32, #tpu.memory_space<vmem>>, vector<8x32xf32>
      tpu.vector_store %arg9[%c0_226, %c0_227], %760 {strides = array<i32>} : memref<8x32xf32, #tpu.memory_space<vmem>>, vector<8x32xf32>,
      %cst_228 = arith.constant 0.000000e+00 : f32
      %762 = vector.broadcast %cst_228 : f32 to vector<8x32xf32>
      %c0_229 = arith.constant 0 : index
      %c0_230 = arith.constant 0 : index
      %763 = vector.load %arg10[%c0_229, %c0_230] : memref<8x32xf32, #tpu.memory_space<vmem>>, vector<8x32xf32>
      tpu.vector_store %arg10[%c0_229, %c0_230], %762 {strides = array<i32>} : memref<8x32xf32, #tpu.memory_space<vmem>>, vector<8x32xf32>,
      %cst_231 = arith.constant 0.000000e+00 : f32
      %764 = vector.broadcast %cst_231 : f32 to vector<8x32xf32>
      %c0_232 = arith.constant 0 : index
      %c0_233 = arith.constant 0 : index
      %765 = vector.load %arg11[%c0_232, %c0_233] : memref<8x32xf32, #tpu.memory_space<vmem>>, vector<8x32xf32>
      tpu.vector_store %arg11[%c0_232, %c0_233], %764 {strides = array<i32>} : memref<8x32xf32, #tpu.memory_space<vmem>>, vector<8x32xf32>,
    } else {
    }
    %c0 = arith.constant 0 : index
    %c0_1 = arith.constant 0 : index
    %3 = vector.load %arg3[%c0, %c0_1] : memref<8x1xi32, #tpu.memory_space<vmem>>, vector<8x1xi32>
    %c0_2 = arith.constant 0 : index
    %c0_3 = arith.constant 0 : index
    %4 = vector.load %arg4[%c0_2, %c0_3] : memref<32x128xf32, #tpu.memory_space<vmem>>, vector<32x128xf32>
    %c0_4 = arith.constant 0 : index
    %c0_5 = arith.constant 0 : index
    %5 = vector.load %arg5[%c0_4, %c0_5] : memref<32x128xf32, #tpu.memory_space<vmem>>, vector<32x128xf32>
    %c0_6 = arith.constant 0 : index
    %c0_7 = arith.constant 0 : index
    %6 = vector.load %arg8[%c0_6, %c0_7] : memref<8x32xf32, #tpu.memory_space<vmem>>, vector<8x32xf32>
    %c0_8 = arith.constant 0 : index
    %c0_9 = arith.constant 0 : index
    %7 = vector.load %arg9[%c0_8, %c0_9] : memref<8x32xf32, #tpu.memory_space<vmem>>, vector<8x32xf32>
    %c0_10 = arith.constant 0 : index
    %c0_11 = arith.constant 0 : index
    %8 = vector.load %arg10[%c0_10, %c0_11] : memref<8x32xf32, #tpu.memory_space<vmem>>, vector<8x32xf32>
    %c0_12 = arith.constant 0 : index
    %c0_13 = arith.constant 0 : index
    %9 = vector.load %arg11[%c0_12, %c0_13] : memref<8x32xf32, #tpu.memory_space<vmem>>, vector<8x32xf32>
    %c8_i32 = arith.constant 8 : i32
    %10 = arith.muli %arg0, %c8_i32 : i32
    %c0_i32_14 = arith.constant 0 : i32
    %11 = arith.addi %10, %c0_i32_14 : i32
    %c0_15 = arith.constant 0 : index
    %c0_16 = arith.constant 0 : index
    %c0_17 = arith.constant 0 : index
    %12 = vector.load %arg1[%c0_15, %c0_16, %c0_17] : memref<8x8x128xf32, #tpu.memory_space<vmem>>, vector<1x8x128xf32>
    %13 = vector.shape_cast %12 : vector<1x8x128xf32> to vector<8x128xf32>
    %cst = arith.constant dense<0.000000e+00> : vector<8x128xf32>
    %14 = tpu.matmul %6, %4, %cst {dimension_numbers = #tpu.dot_dimension_numbers<[1], [0], [0], [1], [0, 0, 1, 1], [], []>} : vector<8x32xf32>, vector<32x128xf32>, vector<8x128xf32> -> vector<8x128xf32>
    %15 = arith.addf %13, %14 : vector<8x128xf32>
    %16 = vector.extract_strided_slice %15 {offsets = [0, 0], sizes = [8, 32], strides = [1, 1]} : vector<8x128xf32> to vector<8x32xf32>
    %17 = arith.negf %16 : vector<8x32xf32>
    %18 = math.exp %17 : vector<8x32xf32>
    %cst_18 = arith.constant 1.000000e+00 : f32
    %19 = vector.broadcast %cst_18 : f32 to vector<8x32xf32>
    %20 = arith.addf %19, %18 : vector<8x32xf32>
    %21 = arith.divf %19, %20 : vector<8x32xf32>
    %22 = vector.extract_strided_slice %15 {offsets = [0, 32], sizes = [8, 32], strides = [1, 1]} : vector<8x128xf32> to vector<8x32xf32>
    %23 = arith.negf %22 : vector<8x32xf32>
    %24 = math.exp %23 : vector<8x32xf32>
    %cst_19 = arith.constant 1.000000e+00 : f32
    %25 = vector.broadcast %cst_19 : f32 to vector<8x32xf32>
    %26 = arith.addf %25, %24 : vector<8x32xf32>
    %27 = arith.divf %25, %26 : vector<8x32xf32>
    %28 = vector.extract_strided_slice %15 {offsets = [0, 64], sizes = [8, 32], strides = [1, 1]} : vector<8x128xf32> to vector<8x32xf32>
    %29 = math.tanh %28 : vector<8x32xf32>
    %30 = vector.extract_strided_slice %15 {offsets = [0, 96], sizes = [8, 32], strides = [1, 1]} : vector<8x128xf32> to vector<8x32xf32>
    %31 = arith.negf %30 : vector<8x32xf32>
    %32 = math.exp %31 : vector<8x32xf32>
    %cst_20 = arith.constant 1.000000e+00 : f32
    %33 = vector.broadcast %cst_20 : f32 to vector<8x32xf32>
    %34 = arith.addf %33, %32 : vector<8x32xf32>
    %35 = arith.divf %33, %34 : vector<8x32xf32>
    %36 = arith.mulf %27, %7 : vector<8x32xf32>
    %37 = arith.mulf %21, %29 : vector<8x32xf32>
    %38 = arith.addf %36, %37 : vector<8x32xf32>
    %39 = math.tanh %38 : vector<8x32xf32>
    %40 = arith.mulf %35, %39 : vector<8x32xf32>
    %41 = vector.broadcast %11 : i32 to vector<8x1xi32>
    %42 = arith.cmpi slt, %41, %3 : vector<8x1xi32>
    %43 = vector.shape_cast %42 : vector<8x1xi1> to vector<8x1xi1>
    %44 = vector.broadcast %43 : vector<8x1xi1> to vector<8x32xi1>
    %45 = arith.select %44, %40, %6 : vector<8x32xi1>, vector<8x32xf32>
    %46 = vector.shape_cast %42 : vector<8x1xi1> to vector<8x1xi1>
    %47 = vector.broadcast %46 : vector<8x1xi1> to vector<8x32xi1>
    %48 = arith.select %47, %38, %7 : vector<8x32xi1>, vector<8x32xf32>
    %cst_21 = arith.constant 0.000000e+00 : f32
    %49 = vector.shape_cast %42 : vector<8x1xi1> to vector<8x1xi1>
    %50 = vector.broadcast %49 : vector<8x1xi1> to vector<8x32xi1>
    %51 = vector.broadcast %cst_21 : f32 to vector<8x32xf32>
    %52 = arith.select %50, %40, %51 : vector<8x32xi1>, vector<8x32xf32>
    %c0_22 = arith.constant 0 : index
    %c0_23 = arith.constant 0 : index
    %c0_24 = arith.constant 0 : index
    %53 = vector.load %arg6[%c0_22, %c0_23, %c0_24] : memref<8x8x32xf32, #tpu.memory_space<vmem>>, vector<1x8x32xf32>
    %54 = vector.shape_cast %53 : vector<1x8x32xf32> to vector<8x32xf32>
    %55 = vector.shape_cast %52 : vector<8x32xf32> to vector<1x8x32xf32>
    tpu.vector_store %arg6[%c0_22, %c0_23, %c0_24], %55 {strides = array<i32>} : memref<8x8x32xf32, #tpu.memory_space<vmem>>, vector<1x8x32xf32>,
    %c0_i32_25 = arith.constant 0 : i32
    %56 = arith.subi %c0_i32_25, %arg0 : i32
    %c8_i32_26 = arith.constant 8 : i32
    %57 = arith.muli %56, %c8_i32_26 : i32
    %c7_i32 = arith.constant 7 : i32
    %58 = arith.addi %57, %c7_i32 : i32
    %c7 = arith.constant 7 : index
    %c0_27 = arith.constant 0 : index
    %c0_28 = arith.constant 0 : index
    %59 = vector.load %arg2[%c7, %c0_27, %c0_28] : memref<8x8x128xf32, #tpu.memory_space<vmem>>, vector<1x8x128xf32>
    %60 = vector.shape_cast %59 : vector<1x8x128xf32> to vector<8x128xf32>
    %cst_29 = arith.constant dense<0.000000e+00> : vector<8x128xf32>
    %61 = tpu.matmul %8, %5, %cst_29 {dimension_numbers = #tpu.dot_dimension_numbers<[1], [0], [0], [1], [0, 0, 1, 1], [], []>} : vector<8x32xf32>, vector<32x128xf32>, vector<8x128xf32> -> vector<8x128xf32>
    %62 = arith.addf %60, %61 : vector<8x128xf32>
    %63 = vector.extract_strided_slice %62 {offsets = [0, 0], sizes = [8, 32], strides = [1, 1]} : vector<8x128xf32> to vector<8x32xf32>
    %64 = arith.negf %63 : vector<8x32xf32>
    %65 = math.exp %64 : vector<8x32xf32>
    %cst_30 = arith.constant 1.000000e+00 : f32
    %66 = vector.broadcast %cst_30 : f32 to vector<8x32xf32>
    %67 = arith.addf %66, %65 : vector<8x32xf32>
    %68 = arith.divf %66, %67 : vector<8x32xf32>
    %69 = vector.extract_strided_slice %62 {offsets = [0, 32], sizes = [8, 32], strides = [1, 1]} : vector<8x128xf32> to vector<8x32xf32>
    %70 = arith.negf %69 : vector<8x32xf32>
    %71 = math.exp %70 : vector<8x32xf32>
    %cst_31 = arith.constant 1.000000e+00 : f32
    %72 = vector.broadcast %cst_31 : f32 to vector<8x32xf32>
    %73 = arith.addf %72, %71 : vector<8x32xf32>
    %74 = arith.divf %72, %73 : vector<8x32xf32>
    %75 = vector.extract_strided_slice %62 {offsets = [0, 64], sizes = [8, 32], strides = [1, 1]} : vector<8x128xf32> to vector<8x32xf32>
    %76 = math.tanh %75 : vector<8x32xf32>
    %77 = vector.extract_strided_slice %62 {offsets = [0, 96], sizes = [8, 32], strides = [1, 1]} : vector<8x128xf32> to vector<8x32xf32>
    %78 = arith.negf %77 : vector<8x32xf32>
    %79 = math.exp %78 : vector<8x32xf32>
    %cst_32 = arith.constant 1.000000e+00 : f32
    %80 = vector.broadcast %cst_32 : f32 to vector<8x32xf32>
    %81 = arith.addf %80, %79 : vector<8x32xf32>
    %82 = arith.divf %80, %81 : vector<8x32xf32>
    %83 = arith.mulf %74, %9 : vector<8x32xf32>
    %84 = arith.mulf %68, %76 : vector<8x32xf32>
    %85 = arith.addf %83, %84 : vector<8x32xf32>
    %86 = math.tanh %85 : vector<8x32xf32>
    %87 = arith.mulf %82, %86 : vector<8x32xf32>
    %88 = vector.broadcast %58 : i32 to vector<8x1xi32>
    %89 = arith.cmpi slt, %88, %3 : vector<8x1xi32>
    %90 = vector.shape_cast %89 : vector<8x1xi1> to vector<8x1xi1>
    %91 = vector.broadcast %90 : vector<8x1xi1> to vector<8x32xi1>
    %92 = arith.select %91, %87, %8 : vector<8x32xi1>, vector<8x32xf32>
    %93 = vector.shape_cast %89 : vector<8x1xi1> to vector<8x1xi1>
    %94 = vector.broadcast %93 : vector<8x1xi1> to vector<8x32xi1>
    %95 = arith.select %94, %85, %9 : vector<8x32xi1>, vector<8x32xf32>
    %cst_33 = arith.constant 0.000000e+00 : f32
    %96 = vector.shape_cast %89 : vector<8x1xi1> to vector<8x1xi1>
    %97 = vector.broadcast %96 : vector<8x1xi1> to vector<8x32xi1>
    %98 = vector.broadcast %cst_33 : f32 to vector<8x32xf32>
    %99 = arith.select %97, %87, %98 : vector<8x32xi1>, vector<8x32xf32>
    %c7_34 = arith.constant 7 : index
    %c0_35 = arith.constant 0 : index
    %c0_36 = arith.constant 0 : index
    %100 = vector.load %arg7[%c7_34, %c0_35, %c0_36] : memref<8x8x32xf32, #tpu.memory_space<vmem>>, vector<1x8x32xf32>
    %101 = vector.shape_cast %100 : vector<1x8x32xf32> to vector<8x32xf32>
    %102 = vector.shape_cast %99 : vector<8x32xf32> to vector<1x8x32xf32>
    tpu.vector_store %arg7[%c7_34, %c0_35, %c0_36], %102 {strides = array<i32>} : memref<8x8x32xf32, #tpu.memory_space<vmem>>, vector<1x8x32xf32>,
    %c8_i32_37 = arith.constant 8 : i32
    %103 = arith.muli %arg0, %c8_i32_37 : i32
    %c1_i32 = arith.constant 1 : i32
    %104 = arith.addi %103, %c1_i32 : i32
    %c1 = arith.constant 1 : index
    %c0_38 = arith.constant 0 : index
    %c0_39 = arith.constant 0 : index
    %105 = vector.load %arg1[%c1, %c0_38, %c0_39] : memref<8x8x128xf32, #tpu.memory_space<vmem>>, vector<1x8x128xf32>
    %106 = vector.shape_cast %105 : vector<1x8x128xf32> to vector<8x128xf32>
    %cst_40 = arith.constant dense<0.000000e+00> : vector<8x128xf32>
    %107 = tpu.matmul %45, %4, %cst_40 {dimension_numbers = #tpu.dot_dimension_numbers<[1], [0], [0], [1], [0, 0, 1, 1], [], []>} : vector<8x32xf32>, vector<32x128xf32>, vector<8x128xf32> -> vector<8x128xf32>
    %108 = arith.addf %106, %107 : vector<8x128xf32>
    %109 = vector.extract_strided_slice %108 {offsets = [0, 0], sizes = [8, 32], strides = [1, 1]} : vector<8x128xf32> to vector<8x32xf32>
    %110 = arith.negf %109 : vector<8x32xf32>
    %111 = math.exp %110 : vector<8x32xf32>
    %cst_41 = arith.constant 1.000000e+00 : f32
    %112 = vector.broadcast %cst_41 : f32 to vector<8x32xf32>
    %113 = arith.addf %112, %111 : vector<8x32xf32>
    %114 = arith.divf %112, %113 : vector<8x32xf32>
    %115 = vector.extract_strided_slice %108 {offsets = [0, 32], sizes = [8, 32], strides = [1, 1]} : vector<8x128xf32> to vector<8x32xf32>
    %116 = arith.negf %115 : vector<8x32xf32>
    %117 = math.exp %116 : vector<8x32xf32>
    %cst_42 = arith.constant 1.000000e+00 : f32
    %118 = vector.broadcast %cst_42 : f32 to vector<8x32xf32>
    %119 = arith.addf %118, %117 : vector<8x32xf32>
    %120 = arith.divf %118, %119 : vector<8x32xf32>
    %121 = vector.extract_strided_slice %108 {offsets = [0, 64], sizes = [8, 32], strides = [1, 1]} : vector<8x128xf32> to vector<8x32xf32>
    %122 = math.tanh %121 : vector<8x32xf32>
    %123 = vector.extract_strided_slice %108 {offsets = [0, 96], sizes = [8, 32], strides = [1, 1]} : vector<8x128xf32> to vector<8x32xf32>
    %124 = arith.negf %123 : vector<8x32xf32>
    %125 = math.exp %124 : vector<8x32xf32>
    %cst_43 = arith.constant 1.000000e+00 : f32
    %126 = vector.broadcast %cst_43 : f32 to vector<8x32xf32>
    %127 = arith.addf %126, %125 : vector<8x32xf32>
    %128 = arith.divf %126, %127 : vector<8x32xf32>
    %129 = arith.mulf %120, %48 : vector<8x32xf32>
    %130 = arith.mulf %114, %122 : vector<8x32xf32>
    %131 = arith.addf %129, %130 : vector<8x32xf32>
    %132 = math.tanh %131 : vector<8x32xf32>
    %133 = arith.mulf %128, %132 : vector<8x32xf32>
    %134 = vector.broadcast %104 : i32 to vector<8x1xi32>
    %135 = arith.cmpi slt, %134, %3 : vector<8x1xi32>
    %136 = vector.shape_cast %135 : vector<8x1xi1> to vector<8x1xi1>
    %137 = vector.broadcast %136 : vector<8x1xi1> to vector<8x32xi1>
    %138 = arith.select %137, %133, %45 : vector<8x32xi1>, vector<8x32xf32>
    %139 = vector.shape_cast %135 : vector<8x1xi1> to vector<8x1xi1>
    %140 = vector.broadcast %139 : vector<8x1xi1> to vector<8x32xi1>
    %141 = arith.select %140, %131, %48 : vector<8x32xi1>, vector<8x32xf32>
    %cst_44 = arith.constant 0.000000e+00 : f32
    %142 = vector.shape_cast %135 : vector<8x1xi1> to vector<8x1xi1>
    %143 = vector.broadcast %142 : vector<8x1xi1> to vector<8x32xi1>
    %144 = vector.broadcast %cst_44 : f32 to vector<8x32xf32>
    %145 = arith.select %143, %133, %144 : vector<8x32xi1>, vector<8x32xf32>
    %c1_45 = arith.constant 1 : index
    %c0_46 = arith.constant 0 : index
    %c0_47 = arith.constant 0 : index
    %146 = vector.load %arg6[%c1_45, %c0_46, %c0_47] : memref<8x8x32xf32, #tpu.memory_space<vmem>>, vector<1x8x32xf32>
    %147 = vector.shape_cast %146 : vector<1x8x32xf32> to vector<8x32xf32>
    %148 = vector.shape_cast %145 : vector<8x32xf32> to vector<1x8x32xf32>
    tpu.vector_store %arg6[%c1_45, %c0_46, %c0_47], %148 {strides = array<i32>} : memref<8x8x32xf32, #tpu.memory_space<vmem>>, vector<1x8x32xf32>,
    %c0_i32_48 = arith.constant 0 : i32
    %149 = arith.subi %c0_i32_48, %arg0 : i32
    %c8_i32_49 = arith.constant 8 : i32
    %150 = arith.muli %149, %c8_i32_49 : i32
    %c6_i32 = arith.constant 6 : i32
    %151 = arith.addi %150, %c6_i32 : i32
    %c6 = arith.constant 6 : index
    %c0_50 = arith.constant 0 : index
    %c0_51 = arith.constant 0 : index
    %152 = vector.load %arg2[%c6, %c0_50, %c0_51] : memref<8x8x128xf32, #tpu.memory_space<vmem>>, vector<1x8x128xf32>
    %153 = vector.shape_cast %152 : vector<1x8x128xf32> to vector<8x128xf32>
    %cst_52 = arith.constant dense<0.000000e+00> : vector<8x128xf32>
    %154 = tpu.matmul %92, %5, %cst_52 {dimension_numbers = #tpu.dot_dimension_numbers<[1], [0], [0], [1], [0, 0, 1, 1], [], []>} : vector<8x32xf32>, vector<32x128xf32>, vector<8x128xf32> -> vector<8x128xf32>
    %155 = arith.addf %153, %154 : vector<8x128xf32>
    %156 = vector.extract_strided_slice %155 {offsets = [0, 0], sizes = [8, 32], strides = [1, 1]} : vector<8x128xf32> to vector<8x32xf32>
    %157 = arith.negf %156 : vector<8x32xf32>
    %158 = math.exp %157 : vector<8x32xf32>
    %cst_53 = arith.constant 1.000000e+00 : f32
    %159 = vector.broadcast %cst_53 : f32 to vector<8x32xf32>
    %160 = arith.addf %159, %158 : vector<8x32xf32>
    %161 = arith.divf %159, %160 : vector<8x32xf32>
    %162 = vector.extract_strided_slice %155 {offsets = [0, 32], sizes = [8, 32], strides = [1, 1]} : vector<8x128xf32> to vector<8x32xf32>
    %163 = arith.negf %162 : vector<8x32xf32>
    %164 = math.exp %163 : vector<8x32xf32>
    %cst_54 = arith.constant 1.000000e+00 : f32
    %165 = vector.broadcast %cst_54 : f32 to vector<8x32xf32>
    %166 = arith.addf %165, %164 : vector<8x32xf32>
    %167 = arith.divf %165, %166 : vector<8x32xf32>
    %168 = vector.extract_strided_slice %155 {offsets = [0, 64], sizes = [8, 32], strides = [1, 1]} : vector<8x128xf32> to vector<8x32xf32>
    %169 = math.tanh %168 : vector<8x32xf32>
    %170 = vector.extract_strided_slice %155 {offsets = [0, 96], sizes = [8, 32], strides = [1, 1]} : vector<8x128xf32> to vector<8x32xf32>
    %171 = arith.negf %170 : vector<8x32xf32>
    %172 = math.exp %171 : vector<8x32xf32>
    %cst_55 = arith.constant 1.000000e+00 : f32
    %173 = vector.broadcast %cst_55 : f32 to vector<8x32xf32>
    %174 = arith.addf %173, %172 : vector<8x32xf32>
    %175 = arith.divf %173, %174 : vector<8x32xf32>
    %176 = arith.mulf %167, %95 : vector<8x32xf32>
    %177 = arith.mulf %161, %169 : vector<8x32xf32>
    %178 = arith.addf %176, %177 : vector<8x32xf32>
    %179 = math.tanh %178 : vector<8x32xf32>
    %180 = arith.mulf %175, %179 : vector<8x32xf32>
    %181 = vector.broadcast %151 : i32 to vector<8x1xi32>
    %182 = arith.cmpi slt, %181, %3 : vector<8x1xi32>
    %183 = vector.shape_cast %182 : vector<8x1xi1> to vector<8x1xi1>
    %184 = vector.broadcast %183 : vector<8x1xi1> to vector<8x32xi1>
    %185 = arith.select %184, %180, %92 : vector<8x32xi1>, vector<8x32xf32>
    %186 = vector.shape_cast %182 : vector<8x1xi1> to vector<8x1xi1>
    %187 = vector.broadcast %186 : vector<8x1xi1> to vector<8x32xi1>
    %188 = arith.select %187, %178, %95 : vector<8x32xi1>, vector<8x32xf32>
    %cst_56 = arith.constant 0.000000e+00 : f32
    %189 = vector.shape_cast %182 : vector<8x1xi1> to vector<8x1xi1>
    %190 = vector.broadcast %189 : vector<8x1xi1> to vector<8x32xi1>
    %191 = vector.broadcast %cst_56 : f32 to vector<8x32xf32>
    %192 = arith.select %190, %180, %191 : vector<8x32xi1>, vector<8x32xf32>
    %c6_57 = arith.constant 6 : index
    %c0_58 = arith.constant 0 : index
    %c0_59 = arith.constant 0 : index
    %193 = vector.load %arg7[%c6_57, %c0_58, %c0_59] : memref<8x8x32xf32, #tpu.memory_space<vmem>>, vector<1x8x32xf32>
    %194 = vector.shape_cast %193 : vector<1x8x32xf32> to vector<8x32xf32>
    %195 = vector.shape_cast %192 : vector<8x32xf32> to vector<1x8x32xf32>
    tpu.vector_store %arg7[%c6_57, %c0_58, %c0_59], %195 {strides = array<i32>} : memref<8x8x32xf32, #tpu.memory_space<vmem>>, vector<1x8x32xf32>,
    %c8_i32_60 = arith.constant 8 : i32
    %196 = arith.muli %arg0, %c8_i32_60 : i32
    %c2_i32 = arith.constant 2 : i32
    %197 = arith.addi %196, %c2_i32 : i32
    %c2 = arith.constant 2 : index
    %c0_61 = arith.constant 0 : index
    %c0_62 = arith.constant 0 : index
    %198 = vector.load %arg1[%c2, %c0_61, %c0_62] : memref<8x8x128xf32, #tpu.memory_space<vmem>>, vector<1x8x128xf32>
    %199 = vector.shape_cast %198 : vector<1x8x128xf32> to vector<8x128xf32>
    %cst_63 = arith.constant dense<0.000000e+00> : vector<8x128xf32>
    %200 = tpu.matmul %138, %4, %cst_63 {dimension_numbers = #tpu.dot_dimension_numbers<[1], [0], [0], [1], [0, 0, 1, 1], [], []>} : vector<8x32xf32>, vector<32x128xf32>, vector<8x128xf32> -> vector<8x128xf32>
    %201 = arith.addf %199, %200 : vector<8x128xf32>
    %202 = vector.extract_strided_slice %201 {offsets = [0, 0], sizes = [8, 32], strides = [1, 1]} : vector<8x128xf32> to vector<8x32xf32>
    %203 = arith.negf %202 : vector<8x32xf32>
    %204 = math.exp %203 : vector<8x32xf32>
    %cst_64 = arith.constant 1.000000e+00 : f32
    %205 = vector.broadcast %cst_64 : f32 to vector<8x32xf32>
    %206 = arith.addf %205, %204 : vector<8x32xf32>
    %207 = arith.divf %205, %206 : vector<8x32xf32>
    %208 = vector.extract_strided_slice %201 {offsets = [0, 32], sizes = [8, 32], strides = [1, 1]} : vector<8x128xf32> to vector<8x32xf32>
    %209 = arith.negf %208 : vector<8x32xf32>
    %210 = math.exp %209 : vector<8x32xf32>
    %cst_65 = arith.constant 1.000000e+00 : f32
    %211 = vector.broadcast %cst_65 : f32 to vector<8x32xf32>
    %212 = arith.addf %211, %210 : vector<8x32xf32>
    %213 = arith.divf %211, %212 : vector<8x32xf32>
    %214 = vector.extract_strided_slice %201 {offsets = [0, 64], sizes = [8, 32], strides = [1, 1]} : vector<8x128xf32> to vector<8x32xf32>
    %215 = math.tanh %214 : vector<8x32xf32>
    %216 = vector.extract_strided_slice %201 {offsets = [0, 96], sizes = [8, 32], strides = [1, 1]} : vector<8x128xf32> to vector<8x32xf32>
    %217 = arith.negf %216 : vector<8x32xf32>
    %218 = math.exp %217 : vector<8x32xf32>
    %cst_66 = arith.constant 1.000000e+00 : f32
    %219 = vector.broadcast %cst_66 : f32 to vector<8x32xf32>
    %220 = arith.addf %219, %218 : vector<8x32xf32>
    %221 = arith.divf %219, %220 : vector<8x32xf32>
    %222 = arith.mulf %213, %141 : vector<8x32xf32>
    %223 = arith.mulf %207, %215 : vector<8x32xf32>
    %224 = arith.addf %222, %223 : vector<8x32xf32>
    %225 = math.tanh %224 : vector<8x32xf32>
    %226 = arith.mulf %221, %225 : vector<8x32xf32>
    %227 = vector.broadcast %197 : i32 to vector<8x1xi32>
    %228 = arith.cmpi slt, %227, %3 : vector<8x1xi32>
    %229 = vector.shape_cast %228 : vector<8x1xi1> to vector<8x1xi1>
    %230 = vector.broadcast %229 : vector<8x1xi1> to vector<8x32xi1>
    %231 = arith.select %230, %226, %138 : vector<8x32xi1>, vector<8x32xf32>
    %232 = vector.shape_cast %228 : vector<8x1xi1> to vector<8x1xi1>
    %233 = vector.broadcast %232 : vector<8x1xi1> to vector<8x32xi1>
    %234 = arith.select %233, %224, %141 : vector<8x32xi1>, vector<8x32xf32>
    %cst_67 = arith.constant 0.000000e+00 : f32
    %235 = vector.shape_cast %228 : vector<8x1xi1> to vector<8x1xi1>
    %236 = vector.broadcast %235 : vector<8x1xi1> to vector<8x32xi1>
    %237 = vector.broadcast %cst_67 : f32 to vector<8x32xf32>
    %238 = arith.select %236, %226, %237 : vector<8x32xi1>, vector<8x32xf32>
    %c2_68 = arith.constant 2 : index
    %c0_69 = arith.constant 0 : index
    %c0_70 = arith.constant 0 : index
    %239 = vector.load %arg6[%c2_68, %c0_69, %c0_70] : memref<8x8x32xf32, #tpu.memory_space<vmem>>, vector<1x8x32xf32>
    %240 = vector.shape_cast %239 : vector<1x8x32xf32> to vector<8x32xf32>
    %241 = vector.shape_cast %238 : vector<8x32xf32> to vector<1x8x32xf32>
    tpu.vector_store %arg6[%c2_68, %c0_69, %c0_70], %241 {strides = array<i32>} : memref<8x8x32xf32, #tpu.memory_space<vmem>>, vector<1x8x32xf32>,
    %c0_i32_71 = arith.constant 0 : i32
    %242 = arith.subi %c0_i32_71, %arg0 : i32
    %c8_i32_72 = arith.constant 8 : i32
    %243 = arith.muli %242, %c8_i32_72 : i32
    %c5_i32 = arith.constant 5 : i32
    %244 = arith.addi %243, %c5_i32 : i32
    %c5 = arith.constant 5 : index
    %c0_73 = arith.constant 0 : index
    %c0_74 = arith.constant 0 : index
    %245 = vector.load %arg2[%c5, %c0_73, %c0_74] : memref<8x8x128xf32, #tpu.memory_space<vmem>>, vector<1x8x128xf32>
    %246 = vector.shape_cast %245 : vector<1x8x128xf32> to vector<8x128xf32>
    %cst_75 = arith.constant dense<0.000000e+00> : vector<8x128xf32>
    %247 = tpu.matmul %185, %5, %cst_75 {dimension_numbers = #tpu.dot_dimension_numbers<[1], [0], [0], [1], [0, 0, 1, 1], [], []>} : vector<8x32xf32>, vector<32x128xf32>, vector<8x128xf32> -> vector<8x128xf32>
    %248 = arith.addf %246, %247 : vector<8x128xf32>
    %249 = vector.extract_strided_slice %248 {offsets = [0, 0], sizes = [8, 32], strides = [1, 1]} : vector<8x128xf32> to vector<8x32xf32>
    %250 = arith.negf %249 : vector<8x32xf32>
    %251 = math.exp %250 : vector<8x32xf32>
    %cst_76 = arith.constant 1.000000e+00 : f32
    %252 = vector.broadcast %cst_76 : f32 to vector<8x32xf32>
    %253 = arith.addf %252, %251 : vector<8x32xf32>
    %254 = arith.divf %252, %253 : vector<8x32xf32>
    %255 = vector.extract_strided_slice %248 {offsets = [0, 32], sizes = [8, 32], strides = [1, 1]} : vector<8x128xf32> to vector<8x32xf32>
    %256 = arith.negf %255 : vector<8x32xf32>
    %257 = math.exp %256 : vector<8x32xf32>
    %cst_77 = arith.constant 1.000000e+00 : f32
    %258 = vector.broadcast %cst_77 : f32 to vector<8x32xf32>
    %259 = arith.addf %258, %257 : vector<8x32xf32>
    %260 = arith.divf %258, %259 : vector<8x32xf32>
    %261 = vector.extract_strided_slice %248 {offsets = [0, 64], sizes = [8, 32], strides = [1, 1]} : vector<8x128xf32> to vector<8x32xf32>
    %262 = math.tanh %261 : vector<8x32xf32>
    %263 = vector.extract_strided_slice %248 {offsets = [0, 96], sizes = [8, 32], strides = [1, 1]} : vector<8x128xf32> to vector<8x32xf32>
    %264 = arith.negf %263 : vector<8x32xf32>
    %265 = math.exp %264 : vector<8x32xf32>
    %cst_78 = arith.constant 1.000000e+00 : f32
    %266 = vector.broadcast %cst_78 : f32 to vector<8x32xf32>
    %267 = arith.addf %266, %265 : vector<8x32xf32>
    %268 = arith.divf %266, %267 : vector<8x32xf32>
    %269 = arith.mulf %260, %188 : vector<8x32xf32>
    %270 = arith.mulf %254, %262 : vector<8x32xf32>
    %271 = arith.addf %269, %270 : vector<8x32xf32>
    %272 = math.tanh %271 : vector<8x32xf32>
    %273 = arith.mulf %268, %272 : vector<8x32xf32>
    %274 = vector.broadcast %244 : i32 to vector<8x1xi32>
    %275 = arith.cmpi slt, %274, %3 : vector<8x1xi32>
    %276 = vector.shape_cast %275 : vector<8x1xi1> to vector<8x1xi1>
    %277 = vector.broadcast %276 : vector<8x1xi1> to vector<8x32xi1>
    %278 = arith.select %277, %273, %185 : vector<8x32xi1>, vector<8x32xf32>
    %279 = vector.shape_cast %275 : vector<8x1xi1> to vector<8x1xi1>
    %280 = vector.broadcast %279 : vector<8x1xi1> to vector<8x32xi1>
    %281 = arith.select %280, %271, %188 : vector<8x32xi1>, vector<8x32xf32>
    %cst_79 = arith.constant 0.000000e+00 : f32
    %282 = vector.shape_cast %275 : vector<8x1xi1> to vector<8x1xi1>
    %283 = vector.broadcast %282 : vector<8x1xi1> to vector<8x32xi1>
    %284 = vector.broadcast %cst_79 : f32 to vector<8x32xf32>
    %285 = arith.select %283, %273, %284 : vector<8x32xi1>, vector<8x32xf32>
    %c5_80 = arith.constant 5 : index
    %c0_81 = arith.constant 0 : index
    %c0_82 = arith.constant 0 : index
    %286 = vector.load %arg7[%c5_80, %c0_81, %c0_82] : memref<8x8x32xf32, #tpu.memory_space<vmem>>, vector<1x8x32xf32>
    %287 = vector.shape_cast %286 : vector<1x8x32xf32> to vector<8x32xf32>
    %288 = vector.shape_cast %285 : vector<8x32xf32> to vector<1x8x32xf32>
    tpu.vector_store %arg7[%c5_80, %c0_81, %c0_82], %288 {strides = array<i32>} : memref<8x8x32xf32, #tpu.memory_space<vmem>>, vector<1x8x32xf32>,
    %c8_i32_83 = arith.constant 8 : i32
    %289 = arith.muli %arg0, %c8_i32_83 : i32
    %c3_i32 = arith.constant 3 : i32
    %290 = arith.addi %289, %c3_i32 : i32
    %c3 = arith.constant 3 : index
    %c0_84 = arith.constant 0 : index
    %c0_85 = arith.constant 0 : index
    %291 = vector.load %arg1[%c3, %c0_84, %c0_85] : memref<8x8x128xf32, #tpu.memory_space<vmem>>, vector<1x8x128xf32>
    %292 = vector.shape_cast %291 : vector<1x8x128xf32> to vector<8x128xf32>
    %cst_86 = arith.constant dense<0.000000e+00> : vector<8x128xf32>
    %293 = tpu.matmul %231, %4, %cst_86 {dimension_numbers = #tpu.dot_dimension_numbers<[1], [0], [0], [1], [0, 0, 1, 1], [], []>} : vector<8x32xf32>, vector<32x128xf32>, vector<8x128xf32> -> vector<8x128xf32>
    %294 = arith.addf %292, %293 : vector<8x128xf32>
    %295 = vector.extract_strided_slice %294 {offsets = [0, 0], sizes = [8, 32], strides = [1, 1]} : vector<8x128xf32> to vector<8x32xf32>
    %296 = arith.negf %295 : vector<8x32xf32>
    %297 = math.exp %296 : vector<8x32xf32>
    %cst_87 = arith.constant 1.000000e+00 : f32
    %298 = vector.broadcast %cst_87 : f32 to vector<8x32xf32>
    %299 = arith.addf %298, %297 : vector<8x32xf32>
    %300 = arith.divf %298, %299 : vector<8x32xf32>
    %301 = vector.extract_strided_slice %294 {offsets = [0, 32], sizes = [8, 32], strides = [1, 1]} : vector<8x128xf32> to vector<8x32xf32>
    %302 = arith.negf %301 : vector<8x32xf32>
    %303 = math.exp %302 : vector<8x32xf32>
    %cst_88 = arith.constant 1.000000e+00 : f32
    %304 = vector.broadcast %cst_88 : f32 to vector<8x32xf32>
    %305 = arith.addf %304, %303 : vector<8x32xf32>
    %306 = arith.divf %304, %305 : vector<8x32xf32>
    %307 = vector.extract_strided_slice %294 {offsets = [0, 64], sizes = [8, 32], strides = [1, 1]} : vector<8x128xf32> to vector<8x32xf32>
    %308 = math.tanh %307 : vector<8x32xf32>
    %309 = vector.extract_strided_slice %294 {offsets = [0, 96], sizes = [8, 32], strides = [1, 1]} : vector<8x128xf32> to vector<8x32xf32>
    %310 = arith.negf %309 : vector<8x32xf32>
    %311 = math.exp %310 : vector<8x32xf32>
    %cst_89 = arith.constant 1.000000e+00 : f32
    %312 = vector.broadcast %cst_89 : f32 to vector<8x32xf32>
    %313 = arith.addf %312, %311 : vector<8x32xf32>
    %314 = arith.divf %312, %313 : vector<8x32xf32>
    %315 = arith.mulf %306, %234 : vector<8x32xf32>
    %316 = arith.mulf %300, %308 : vector<8x32xf32>
    %317 = arith.addf %315, %316 : vector<8x32xf32>
    %318 = math.tanh %317 : vector<8x32xf32>
    %319 = arith.mulf %314, %318 : vector<8x32xf32>
    %320 = vector.broadcast %290 : i32 to vector<8x1xi32>
    %321 = arith.cmpi slt, %320, %3 : vector<8x1xi32>
    %322 = vector.shape_cast %321 : vector<8x1xi1> to vector<8x1xi1>
    %323 = vector.broadcast %322 : vector<8x1xi1> to vector<8x32xi1>
    %324 = arith.select %323, %319, %231 : vector<8x32xi1>, vector<8x32xf32>
    %325 = vector.shape_cast %321 : vector<8x1xi1> to vector<8x1xi1>
    %326 = vector.broadcast %325 : vector<8x1xi1> to vector<8x32xi1>
    %327 = arith.select %326, %317, %234 : vector<8x32xi1>, vector<8x32xf32>
    %cst_90 = arith.constant 0.000000e+00 : f32
    %328 = vector.shape_cast %321 : vector<8x1xi1> to vector<8x1xi1>
    %329 = vector.broadcast %328 : vector<8x1xi1> to vector<8x32xi1>
    %330 = vector.broadcast %cst_90 : f32 to vector<8x32xf32>
    %331 = arith.select %329, %319, %330 : vector<8x32xi1>, vector<8x32xf32>
    %c3_91 = arith.constant 3 : index
    %c0_92 = arith.constant 0 : index
    %c0_93 = arith.constant 0 : index
    %332 = vector.load %arg6[%c3_91, %c0_92, %c0_93] : memref<8x8x32xf32, #tpu.memory_space<vmem>>, vector<1x8x32xf32>
    %333 = vector.shape_cast %332 : vector<1x8x32xf32> to vector<8x32xf32>
    %334 = vector.shape_cast %331 : vector<8x32xf32> to vector<1x8x32xf32>
    tpu.vector_store %arg6[%c3_91, %c0_92, %c0_93], %334 {strides = array<i32>} : memref<8x8x32xf32, #tpu.memory_space<vmem>>, vector<1x8x32xf32>,
    %c0_i32_94 = arith.constant 0 : i32
    %335 = arith.subi %c0_i32_94, %arg0 : i32
    %c8_i32_95 = arith.constant 8 : i32
    %336 = arith.muli %335, %c8_i32_95 : i32
    %c4_i32 = arith.constant 4 : i32
    %337 = arith.addi %336, %c4_i32 : i32
    %c4 = arith.constant 4 : index
    %c0_96 = arith.constant 0 : index
    %c0_97 = arith.constant 0 : index
    %338 = vector.load %arg2[%c4, %c0_96, %c0_97] : memref<8x8x128xf32, #tpu.memory_space<vmem>>, vector<1x8x128xf32>
    %339 = vector.shape_cast %338 : vector<1x8x128xf32> to vector<8x128xf32>
    %cst_98 = arith.constant dense<0.000000e+00> : vector<8x128xf32>
    %340 = tpu.matmul %278, %5, %cst_98 {dimension_numbers = #tpu.dot_dimension_numbers<[1], [0], [0], [1], [0, 0, 1, 1], [], []>} : vector<8x32xf32>, vector<32x128xf32>, vector<8x128xf32> -> vector<8x128xf32>
    %341 = arith.addf %339, %340 : vector<8x128xf32>
    %342 = vector.extract_strided_slice %341 {offsets = [0, 0], sizes = [8, 32], strides = [1, 1]} : vector<8x128xf32> to vector<8x32xf32>
    %343 = arith.negf %342 : vector<8x32xf32>
    %344 = math.exp %343 : vector<8x32xf32>
    %cst_99 = arith.constant 1.000000e+00 : f32
    %345 = vector.broadcast %cst_99 : f32 to vector<8x32xf32>
    %346 = arith.addf %345, %344 : vector<8x32xf32>
    %347 = arith.divf %345, %346 : vector<8x32xf32>
    %348 = vector.extract_strided_slice %341 {offsets = [0, 32], sizes = [8, 32], strides = [1, 1]} : vector<8x128xf32> to vector<8x32xf32>
    %349 = arith.negf %348 : vector<8x32xf32>
    %350 = math.exp %349 : vector<8x32xf32>
    %cst_100 = arith.constant 1.000000e+00 : f32
    %351 = vector.broadcast %cst_100 : f32 to vector<8x32xf32>
    %352 = arith.addf %351, %350 : vector<8x32xf32>
    %353 = arith.divf %351, %352 : vector<8x32xf32>
    %354 = vector.extract_strided_slice %341 {offsets = [0, 64], sizes = [8, 32], strides = [1, 1]} : vector<8x128xf32> to vector<8x32xf32>
    %355 = math.tanh %354 : vector<8x32xf32>
    %356 = vector.extract_strided_slice %341 {offsets = [0, 96], sizes = [8, 32], strides = [1, 1]} : vector<8x128xf32> to vector<8x32xf32>
    %357 = arith.negf %356 : vector<8x32xf32>
    %358 = math.exp %357 : vector<8x32xf32>
    %cst_101 = arith.constant 1.000000e+00 : f32
    %359 = vector.broadcast %cst_101 : f32 to vector<8x32xf32>
    %360 = arith.addf %359, %358 : vector<8x32xf32>
    %361 = arith.divf %359, %360 : vector<8x32xf32>
    %362 = arith.mulf %353, %281 : vector<8x32xf32>
    %363 = arith.mulf %347, %355 : vector<8x32xf32>
    %364 = arith.addf %362, %363 : vector<8x32xf32>
    %365 = math.tanh %364 : vector<8x32xf32>
    %366 = arith.mulf %361, %365 : vector<8x32xf32>
    %367 = vector.broadcast %337 : i32 to vector<8x1xi32>
    %368 = arith.cmpi slt, %367, %3 : vector<8x1xi32>
    %369 = vector.shape_cast %368 : vector<8x1xi1> to vector<8x1xi1>
    %370 = vector.broadcast %369 : vector<8x1xi1> to vector<8x32xi1>
    %371 = arith.select %370, %366, %278 : vector<8x32xi1>, vector<8x32xf32>
    %372 = vector.shape_cast %368 : vector<8x1xi1> to vector<8x1xi1>
    %373 = vector.broadcast %372 : vector<8x1xi1> to vector<8x32xi1>
    %374 = arith.select %373, %364, %281 : vector<8x32xi1>, vector<8x32xf32>
    %cst_102 = arith.constant 0.000000e+00 : f32
    %375 = vector.shape_cast %368 : vector<8x1xi1> to vector<8x1xi1>
    %376 = vector.broadcast %375 : vector<8x1xi1> to vector<8x32xi1>
    %377 = vector.broadcast %cst_102 : f32 to vector<8x32xf32>
    %378 = arith.select %376, %366, %377 : vector<8x32xi1>, vector<8x32xf32>
    %c4_103 = arith.constant 4 : index
    %c0_104 = arith.constant 0 : index
    %c0_105 = arith.constant 0 : index
    %379 = vector.load %arg7[%c4_103, %c0_104, %c0_105] : memref<8x8x32xf32, #tpu.memory_space<vmem>>, vector<1x8x32xf32>
    %380 = vector.shape_cast %379 : vector<1x8x32xf32> to vector<8x32xf32>
    %381 = vector.shape_cast %378 : vector<8x32xf32> to vector<1x8x32xf32>
    tpu.vector_store %arg7[%c4_103, %c0_104, %c0_105], %381 {strides = array<i32>} : memref<8x8x32xf32, #tpu.memory_space<vmem>>, vector<1x8x32xf32>,
    %c8_i32_106 = arith.constant 8 : i32
    %382 = arith.muli %arg0, %c8_i32_106 : i32
    %c4_i32_107 = arith.constant 4 : i32
    %383 = arith.addi %382, %c4_i32_107 : i32
    %c4_108 = arith.constant 4 : index
    %c0_109 = arith.constant 0 : index
    %c0_110 = arith.constant 0 : index
    %384 = vector.load %arg1[%c4_108, %c0_109, %c0_110] : memref<8x8x128xf32, #tpu.memory_space<vmem>>, vector<1x8x128xf32>
    %385 = vector.shape_cast %384 : vector<1x8x128xf32> to vector<8x128xf32>
    %cst_111 = arith.constant dense<0.000000e+00> : vector<8x128xf32>
    %386 = tpu.matmul %324, %4, %cst_111 {dimension_numbers = #tpu.dot_dimension_numbers<[1], [0], [0], [1], [0, 0, 1, 1], [], []>} : vector<8x32xf32>, vector<32x128xf32>, vector<8x128xf32> -> vector<8x128xf32>
    %387 = arith.addf %385, %386 : vector<8x128xf32>
    %388 = vector.extract_strided_slice %387 {offsets = [0, 0], sizes = [8, 32], strides = [1, 1]} : vector<8x128xf32> to vector<8x32xf32>
    %389 = arith.negf %388 : vector<8x32xf32>
    %390 = math.exp %389 : vector<8x32xf32>
    %cst_112 = arith.constant 1.000000e+00 : f32
    %391 = vector.broadcast %cst_112 : f32 to vector<8x32xf32>
    %392 = arith.addf %391, %390 : vector<8x32xf32>
    %393 = arith.divf %391, %392 : vector<8x32xf32>
    %394 = vector.extract_strided_slice %387 {offsets = [0, 32], sizes = [8, 32], strides = [1, 1]} : vector<8x128xf32> to vector<8x32xf32>
    %395 = arith.negf %394 : vector<8x32xf32>
    %396 = math.exp %395 : vector<8x32xf32>
    %cst_113 = arith.constant 1.000000e+00 : f32
    %397 = vector.broadcast %cst_113 : f32 to vector<8x32xf32>
    %398 = arith.addf %397, %396 : vector<8x32xf32>
    %399 = arith.divf %397, %398 : vector<8x32xf32>
    %400 = vector.extract_strided_slice %387 {offsets = [0, 64], sizes = [8, 32], strides = [1, 1]} : vector<8x128xf32> to vector<8x32xf32>
    %401 = math.tanh %400 : vector<8x32xf32>
    %402 = vector.extract_strided_slice %387 {offsets = [0, 96], sizes = [8, 32], strides = [1, 1]} : vector<8x128xf32> to vector<8x32xf32>
    %403 = arith.negf %402 : vector<8x32xf32>
    %404 = math.exp %403 : vector<8x32xf32>
    %cst_114 = arith.constant 1.000000e+00 : f32
    %405 = vector.broadcast %cst_114 : f32 to vector<8x32xf32>
    %406 = arith.addf %405, %404 : vector<8x32xf32>
    %407 = arith.divf %405, %406 : vector<8x32xf32>
    %408 = arith.mulf %399, %327 : vector<8x32xf32>
    %409 = arith.mulf %393, %401 : vector<8x32xf32>
    %410 = arith.addf %408, %409 : vector<8x32xf32>
    %411 = math.tanh %410 : vector<8x32xf32>
    %412 = arith.mulf %407, %411 : vector<8x32xf32>
    %413 = vector.broadcast %383 : i32 to vector<8x1xi32>
    %414 = arith.cmpi slt, %413, %3 : vector<8x1xi32>
    %415 = vector.shape_cast %414 : vector<8x1xi1> to vector<8x1xi1>
    %416 = vector.broadcast %415 : vector<8x1xi1> to vector<8x32xi1>
    %417 = arith.select %416, %412, %324 : vector<8x32xi1>, vector<8x32xf32>
    %418 = vector.shape_cast %414 : vector<8x1xi1> to vector<8x1xi1>
    %419 = vector.broadcast %418 : vector<8x1xi1> to vector<8x32xi1>
    %420 = arith.select %419, %410, %327 : vector<8x32xi1>, vector<8x32xf32>
    %cst_115 = arith.constant 0.000000e+00 : f32
    %421 = vector.shape_cast %414 : vector<8x1xi1> to vector<8x1xi1>
    %422 = vector.broadcast %421 : vector<8x1xi1> to vector<8x32xi1>
    %423 = vector.broadcast %cst_115 : f32 to vector<8x32xf32>
    %424 = arith.select %422, %412, %423 : vector<8x32xi1>, vector<8x32xf32>
    %c4_116 = arith.constant 4 : index
    %c0_117 = arith.constant 0 : index
    %c0_118 = arith.constant 0 : index
    %425 = vector.load %arg6[%c4_116, %c0_117, %c0_118] : memref<8x8x32xf32, #tpu.memory_space<vmem>>, vector<1x8x32xf32>
    %426 = vector.shape_cast %425 : vector<1x8x32xf32> to vector<8x32xf32>
    %427 = vector.shape_cast %424 : vector<8x32xf32> to vector<1x8x32xf32>
    tpu.vector_store %arg6[%c4_116, %c0_117, %c0_118], %427 {strides = array<i32>} : memref<8x8x32xf32, #tpu.memory_space<vmem>>, vector<1x8x32xf32>,
    %c0_i32_119 = arith.constant 0 : i32
    %428 = arith.subi %c0_i32_119, %arg0 : i32
    %c8_i32_120 = arith.constant 8 : i32
    %429 = arith.muli %428, %c8_i32_120 : i32
    %c3_i32_121 = arith.constant 3 : i32
    %430 = arith.addi %429, %c3_i32_121 : i32
    %c3_122 = arith.constant 3 : index
    %c0_123 = arith.constant 0 : index
    %c0_124 = arith.constant 0 : index
    %431 = vector.load %arg2[%c3_122, %c0_123, %c0_124] : memref<8x8x128xf32, #tpu.memory_space<vmem>>, vector<1x8x128xf32>
    %432 = vector.shape_cast %431 : vector<1x8x128xf32> to vector<8x128xf32>
    %cst_125 = arith.constant dense<0.000000e+00> : vector<8x128xf32>
    %433 = tpu.matmul %371, %5, %cst_125 {dimension_numbers = #tpu.dot_dimension_numbers<[1], [0], [0], [1], [0, 0, 1, 1], [], []>} : vector<8x32xf32>, vector<32x128xf32>, vector<8x128xf32> -> vector<8x128xf32>
    %434 = arith.addf %432, %433 : vector<8x128xf32>
    %435 = vector.extract_strided_slice %434 {offsets = [0, 0], sizes = [8, 32], strides = [1, 1]} : vector<8x128xf32> to vector<8x32xf32>
    %436 = arith.negf %435 : vector<8x32xf32>
    %437 = math.exp %436 : vector<8x32xf32>
    %cst_126 = arith.constant 1.000000e+00 : f32
    %438 = vector.broadcast %cst_126 : f32 to vector<8x32xf32>
    %439 = arith.addf %438, %437 : vector<8x32xf32>
    %440 = arith.divf %438, %439 : vector<8x32xf32>
    %441 = vector.extract_strided_slice %434 {offsets = [0, 32], sizes = [8, 32], strides = [1, 1]} : vector<8x128xf32> to vector<8x32xf32>
    %442 = arith.negf %441 : vector<8x32xf32>
    %443 = math.exp %442 : vector<8x32xf32>
    %cst_127 = arith.constant 1.000000e+00 : f32
    %444 = vector.broadcast %cst_127 : f32 to vector<8x32xf32>
    %445 = arith.addf %444, %443 : vector<8x32xf32>
    %446 = arith.divf %444, %445 : vector<8x32xf32>
    %447 = vector.extract_strided_slice %434 {offsets = [0, 64], sizes = [8, 32], strides = [1, 1]} : vector<8x128xf32> to vector<8x32xf32>
    %448 = math.tanh %447 : vector<8x32xf32>
    %449 = vector.extract_strided_slice %434 {offsets = [0, 96], sizes = [8, 32], strides = [1, 1]} : vector<8x128xf32> to vector<8x32xf32>
    %450 = arith.negf %449 : vector<8x32xf32>
    %451 = math.exp %450 : vector<8x32xf32>
    %cst_128 = arith.constant 1.000000e+00 : f32
    %452 = vector.broadcast %cst_128 : f32 to vector<8x32xf32>
    %453 = arith.addf %452, %451 : vector<8x32xf32>
    %454 = arith.divf %452, %453 : vector<8x32xf32>
    %455 = arith.mulf %446, %374 : vector<8x32xf32>
    %456 = arith.mulf %440, %448 : vector<8x32xf32>
    %457 = arith.addf %455, %456 : vector<8x32xf32>
    %458 = math.tanh %457 : vector<8x32xf32>
    %459 = arith.mulf %454, %458 : vector<8x32xf32>
    %460 = vector.broadcast %430 : i32 to vector<8x1xi32>
    %461 = arith.cmpi slt, %460, %3 : vector<8x1xi32>
    %462 = vector.shape_cast %461 : vector<8x1xi1> to vector<8x1xi1>
    %463 = vector.broadcast %462 : vector<8x1xi1> to vector<8x32xi1>
    %464 = arith.select %463, %459, %371 : vector<8x32xi1>, vector<8x32xf32>
    %465 = vector.shape_cast %461 : vector<8x1xi1> to vector<8x1xi1>
    %466 = vector.broadcast %465 : vector<8x1xi1> to vector<8x32xi1>
    %467 = arith.select %466, %457, %374 : vector<8x32xi1>, vector<8x32xf32>
    %cst_129 = arith.constant 0.000000e+00 : f32
    %468 = vector.shape_cast %461 : vector<8x1xi1> to vector<8x1xi1>
    %469 = vector.broadcast %468 : vector<8x1xi1> to vector<8x32xi1>
    %470 = vector.broadcast %cst_129 : f32 to vector<8x32xf32>
    %471 = arith.select %469, %459, %470 : vector<8x32xi1>, vector<8x32xf32>
    %c3_130 = arith.constant 3 : index
    %c0_131 = arith.constant 0 : index
    %c0_132 = arith.constant 0 : index
    %472 = vector.load %arg7[%c3_130, %c0_131, %c0_132] : memref<8x8x32xf32, #tpu.memory_space<vmem>>, vector<1x8x32xf32>
    %473 = vector.shape_cast %472 : vector<1x8x32xf32> to vector<8x32xf32>
    %474 = vector.shape_cast %471 : vector<8x32xf32> to vector<1x8x32xf32>
    tpu.vector_store %arg7[%c3_130, %c0_131, %c0_132], %474 {strides = array<i32>} : memref<8x8x32xf32, #tpu.memory_space<vmem>>, vector<1x8x32xf32>,
    %c8_i32_133 = arith.constant 8 : i32
    %475 = arith.muli %arg0, %c8_i32_133 : i32
    %c5_i32_134 = arith.constant 5 : i32
    %476 = arith.addi %475, %c5_i32_134 : i32
    %c5_135 = arith.constant 5 : index
    %c0_136 = arith.constant 0 : index
    %c0_137 = arith.constant 0 : index
    %477 = vector.load %arg1[%c5_135, %c0_136, %c0_137] : memref<8x8x128xf32, #tpu.memory_space<vmem>>, vector<1x8x128xf32>
    %478 = vector.shape_cast %477 : vector<1x8x128xf32> to vector<8x128xf32>
    %cst_138 = arith.constant dense<0.000000e+00> : vector<8x128xf32>
    %479 = tpu.matmul %417, %4, %cst_138 {dimension_numbers = #tpu.dot_dimension_numbers<[1], [0], [0], [1], [0, 0, 1, 1], [], []>} : vector<8x32xf32>, vector<32x128xf32>, vector<8x128xf32> -> vector<8x128xf32>
    %480 = arith.addf %478, %479 : vector<8x128xf32>
    %481 = vector.extract_strided_slice %480 {offsets = [0, 0], sizes = [8, 32], strides = [1, 1]} : vector<8x128xf32> to vector<8x32xf32>
    %482 = arith.negf %481 : vector<8x32xf32>
    %483 = math.exp %482 : vector<8x32xf32>
    %cst_139 = arith.constant 1.000000e+00 : f32
    %484 = vector.broadcast %cst_139 : f32 to vector<8x32xf32>
    %485 = arith.addf %484, %483 : vector<8x32xf32>
    %486 = arith.divf %484, %485 : vector<8x32xf32>
    %487 = vector.extract_strided_slice %480 {offsets = [0, 32], sizes = [8, 32], strides = [1, 1]} : vector<8x128xf32> to vector<8x32xf32>
    %488 = arith.negf %487 : vector<8x32xf32>
    %489 = math.exp %488 : vector<8x32xf32>
    %cst_140 = arith.constant 1.000000e+00 : f32
    %490 = vector.broadcast %cst_140 : f32 to vector<8x32xf32>
    %491 = arith.addf %490, %489 : vector<8x32xf32>
    %492 = arith.divf %490, %491 : vector<8x32xf32>
    %493 = vector.extract_strided_slice %480 {offsets = [0, 64], sizes = [8, 32], strides = [1, 1]} : vector<8x128xf32> to vector<8x32xf32>
    %494 = math.tanh %493 : vector<8x32xf32>
    %495 = vector.extract_strided_slice %480 {offsets = [0, 96], sizes = [8, 32], strides = [1, 1]} : vector<8x128xf32> to vector<8x32xf32>
    %496 = arith.negf %495 : vector<8x32xf32>
    %497 = math.exp %496 : vector<8x32xf32>
    %cst_141 = arith.constant 1.000000e+00 : f32
    %498 = vector.broadcast %cst_141 : f32 to vector<8x32xf32>
    %499 = arith.addf %498, %497 : vector<8x32xf32>
    %500 = arith.divf %498, %499 : vector<8x32xf32>
    %501 = arith.mulf %492, %420 : vector<8x32xf32>
    %502 = arith.mulf %486, %494 : vector<8x32xf32>
    %503 = arith.addf %501, %502 : vector<8x32xf32>
    %504 = math.tanh %503 : vector<8x32xf32>
    %505 = arith.mulf %500, %504 : vector<8x32xf32>
    %506 = vector.broadcast %476 : i32 to vector<8x1xi32>
    %507 = arith.cmpi slt, %506, %3 : vector<8x1xi32>
    %508 = vector.shape_cast %507 : vector<8x1xi1> to vector<8x1xi1>
    %509 = vector.broadcast %508 : vector<8x1xi1> to vector<8x32xi1>
    %510 = arith.select %509, %505, %417 : vector<8x32xi1>, vector<8x32xf32>
    %511 = vector.shape_cast %507 : vector<8x1xi1> to vector<8x1xi1>
    %512 = vector.broadcast %511 : vector<8x1xi1> to vector<8x32xi1>
    %513 = arith.select %512, %503, %420 : vector<8x32xi1>, vector<8x32xf32>
    %cst_142 = arith.constant 0.000000e+00 : f32
    %514 = vector.shape_cast %507 : vector<8x1xi1> to vector<8x1xi1>
    %515 = vector.broadcast %514 : vector<8x1xi1> to vector<8x32xi1>
    %516 = vector.broadcast %cst_142 : f32 to vector<8x32xf32>
    %517 = arith.select %515, %505, %516 : vector<8x32xi1>, vector<8x32xf32>
    %c5_143 = arith.constant 5 : index
    %c0_144 = arith.constant 0 : index
    %c0_145 = arith.constant 0 : index
    %518 = vector.load %arg6[%c5_143, %c0_144, %c0_145] : memref<8x8x32xf32, #tpu.memory_space<vmem>>, vector<1x8x32xf32>
    %519 = vector.shape_cast %518 : vector<1x8x32xf32> to vector<8x32xf32>
    %520 = vector.shape_cast %517 : vector<8x32xf32> to vector<1x8x32xf32>
    tpu.vector_store %arg6[%c5_143, %c0_144, %c0_145], %520 {strides = array<i32>} : memref<8x8x32xf32, #tpu.memory_space<vmem>>, vector<1x8x32xf32>,
    %c0_i32_146 = arith.constant 0 : i32
    %521 = arith.subi %c0_i32_146, %arg0 : i32
    %c8_i32_147 = arith.constant 8 : i32
    %522 = arith.muli %521, %c8_i32_147 : i32
    %c2_i32_148 = arith.constant 2 : i32
    %523 = arith.addi %522, %c2_i32_148 : i32
    %c2_149 = arith.constant 2 : index
    %c0_150 = arith.constant 0 : index
    %c0_151 = arith.constant 0 : index
    %524 = vector.load %arg2[%c2_149, %c0_150, %c0_151] : memref<8x8x128xf32, #tpu.memory_space<vmem>>, vector<1x8x128xf32>
    %525 = vector.shape_cast %524 : vector<1x8x128xf32> to vector<8x128xf32>
    %cst_152 = arith.constant dense<0.000000e+00> : vector<8x128xf32>
    %526 = tpu.matmul %464, %5, %cst_152 {dimension_numbers = #tpu.dot_dimension_numbers<[1], [0], [0], [1], [0, 0, 1, 1], [], []>} : vector<8x32xf32>, vector<32x128xf32>, vector<8x128xf32> -> vector<8x128xf32>
    %527 = arith.addf %525, %526 : vector<8x128xf32>
    %528 = vector.extract_strided_slice %527 {offsets = [0, 0], sizes = [8, 32], strides = [1, 1]} : vector<8x128xf32> to vector<8x32xf32>
    %529 = arith.negf %528 : vector<8x32xf32>
    %530 = math.exp %529 : vector<8x32xf32>
    %cst_153 = arith.constant 1.000000e+00 : f32
    %531 = vector.broadcast %cst_153 : f32 to vector<8x32xf32>
    %532 = arith.addf %531, %530 : vector<8x32xf32>
    %533 = arith.divf %531, %532 : vector<8x32xf32>
    %534 = vector.extract_strided_slice %527 {offsets = [0, 32], sizes = [8, 32], strides = [1, 1]} : vector<8x128xf32> to vector<8x32xf32>
    %535 = arith.negf %534 : vector<8x32xf32>
    %536 = math.exp %535 : vector<8x32xf32>
    %cst_154 = arith.constant 1.000000e+00 : f32
    %537 = vector.broadcast %cst_154 : f32 to vector<8x32xf32>
    %538 = arith.addf %537, %536 : vector<8x32xf32>
    %539 = arith.divf %537, %538 : vector<8x32xf32>
    %540 = vector.extract_strided_slice %527 {offsets = [0, 64], sizes = [8, 32], strides = [1, 1]} : vector<8x128xf32> to vector<8x32xf32>
    %541 = math.tanh %540 : vector<8x32xf32>
    %542 = vector.extract_strided_slice %527 {offsets = [0, 96], sizes = [8, 32], strides = [1, 1]} : vector<8x128xf32> to vector<8x32xf32>
    %543 = arith.negf %542 : vector<8x32xf32>
    %544 = math.exp %543 : vector<8x32xf32>
    %cst_155 = arith.constant 1.000000e+00 : f32
    %545 = vector.broadcast %cst_155 : f32 to vector<8x32xf32>
    %546 = arith.addf %545, %544 : vector<8x32xf32>
    %547 = arith.divf %545, %546 : vector<8x32xf32>
    %548 = arith.mulf %539, %467 : vector<8x32xf32>
    %549 = arith.mulf %533, %541 : vector<8x32xf32>
    %550 = arith.addf %548, %549 : vector<8x32xf32>
    %551 = math.tanh %550 : vector<8x32xf32>
    %552 = arith.mulf %547, %551 : vector<8x32xf32>
    %553 = vector.broadcast %523 : i32 to vector<8x1xi32>
    %554 = arith.cmpi slt, %553, %3 : vector<8x1xi32>
    %555 = vector.shape_cast %554 : vector<8x1xi1> to vector<8x1xi1>
    %556 = vector.broadcast %555 : vector<8x1xi1> to vector<8x32xi1>
    %557 = arith.select %556, %552, %464 : vector<8x32xi1>, vector<8x32xf32>
    %558 = vector.shape_cast %554 : vector<8x1xi1> to vector<8x1xi1>
    %559 = vector.broadcast %558 : vector<8x1xi1> to vector<8x32xi1>
    %560 = arith.select %559, %550, %467 : vector<8x32xi1>, vector<8x32xf32>
    %cst_156 = arith.constant 0.000000e+00 : f32
    %561 = vector.shape_cast %554 : vector<8x1xi1> to vector<8x1xi1>
    %562 = vector.broadcast %561 : vector<8x1xi1> to vector<8x32xi1>
    %563 = vector.broadcast %cst_156 : f32 to vector<8x32xf32>
    %564 = arith.select %562, %552, %563 : vector<8x32xi1>, vector<8x32xf32>
    %c2_157 = arith.constant 2 : index
    %c0_158 = arith.constant 0 : index
    %c0_159 = arith.constant 0 : index
    %565 = vector.load %arg7[%c2_157, %c0_158, %c0_159] : memref<8x8x32xf32, #tpu.memory_space<vmem>>, vector<1x8x32xf32>
    %566 = vector.shape_cast %565 : vector<1x8x32xf32> to vector<8x32xf32>
    %567 = vector.shape_cast %564 : vector<8x32xf32> to vector<1x8x32xf32>
    tpu.vector_store %arg7[%c2_157, %c0_158, %c0_159], %567 {strides = array<i32>} : memref<8x8x32xf32, #tpu.memory_space<vmem>>, vector<1x8x32xf32>,
    %c8_i32_160 = arith.constant 8 : i32
    %568 = arith.muli %arg0, %c8_i32_160 : i32
    %c6_i32_161 = arith.constant 6 : i32
    %569 = arith.addi %568, %c6_i32_161 : i32
    %c6_162 = arith.constant 6 : index
    %c0_163 = arith.constant 0 : index
    %c0_164 = arith.constant 0 : index
    %570 = vector.load %arg1[%c6_162, %c0_163, %c0_164] : memref<8x8x128xf32, #tpu.memory_space<vmem>>, vector<1x8x128xf32>
    %571 = vector.shape_cast %570 : vector<1x8x128xf32> to vector<8x128xf32>
    %cst_165 = arith.constant dense<0.000000e+00> : vector<8x128xf32>
    %572 = tpu.matmul %510, %4, %cst_165 {dimension_numbers = #tpu.dot_dimension_numbers<[1], [0], [0], [1], [0, 0, 1, 1], [], []>} : vector<8x32xf32>, vector<32x128xf32>, vector<8x128xf32> -> vector<8x128xf32>
    %573 = arith.addf %571, %572 : vector<8x128xf32>
    %574 = vector.extract_strided_slice %573 {offsets = [0, 0], sizes = [8, 32], strides = [1, 1]} : vector<8x128xf32> to vector<8x32xf32>
    %575 = arith.negf %574 : vector<8x32xf32>
    %576 = math.exp %575 : vector<8x32xf32>
    %cst_166 = arith.constant 1.000000e+00 : f32
    %577 = vector.broadcast %cst_166 : f32 to vector<8x32xf32>
    %578 = arith.addf %577, %576 : vector<8x32xf32>
    %579 = arith.divf %577, %578 : vector<8x32xf32>
    %580 = vector.extract_strided_slice %573 {offsets = [0, 32], sizes = [8, 32], strides = [1, 1]} : vector<8x128xf32> to vector<8x32xf32>
    %581 = arith.negf %580 : vector<8x32xf32>
    %582 = math.exp %581 : vector<8x32xf32>
    %cst_167 = arith.constant 1.000000e+00 : f32
    %583 = vector.broadcast %cst_167 : f32 to vector<8x32xf32>
    %584 = arith.addf %583, %582 : vector<8x32xf32>
    %585 = arith.divf %583, %584 : vector<8x32xf32>
    %586 = vector.extract_strided_slice %573 {offsets = [0, 64], sizes = [8, 32], strides = [1, 1]} : vector<8x128xf32> to vector<8x32xf32>
    %587 = math.tanh %586 : vector<8x32xf32>
    %588 = vector.extract_strided_slice %573 {offsets = [0, 96], sizes = [8, 32], strides = [1, 1]} : vector<8x128xf32> to vector<8x32xf32>
    %589 = arith.negf %588 : vector<8x32xf32>
    %590 = math.exp %589 : vector<8x32xf32>
    %cst_168 = arith.constant 1.000000e+00 : f32
    %591 = vector.broadcast %cst_168 : f32 to vector<8x32xf32>
    %592 = arith.addf %591, %590 : vector<8x32xf32>
    %593 = arith.divf %591, %592 : vector<8x32xf32>
    %594 = arith.mulf %585, %513 : vector<8x32xf32>
    %595 = arith.mulf %579, %587 : vector<8x32xf32>
    %596 = arith.addf %594, %595 : vector<8x32xf32>
    %597 = math.tanh %596 : vector<8x32xf32>
    %598 = arith.mulf %593, %597 : vector<8x32xf32>
    %599 = vector.broadcast %569 : i32 to vector<8x1xi32>
    %600 = arith.cmpi slt, %599, %3 : vector<8x1xi32>
    %601 = vector.shape_cast %600 : vector<8x1xi1> to vector<8x1xi1>
    %602 = vector.broadcast %601 : vector<8x1xi1> to vector<8x32xi1>
    %603 = arith.select %602, %598, %510 : vector<8x32xi1>, vector<8x32xf32>
    %604 = vector.shape_cast %600 : vector<8x1xi1> to vector<8x1xi1>
    %605 = vector.broadcast %604 : vector<8x1xi1> to vector<8x32xi1>
    %606 = arith.select %605, %596, %513 : vector<8x32xi1>, vector<8x32xf32>
    %cst_169 = arith.constant 0.000000e+00 : f32
    %607 = vector.shape_cast %600 : vector<8x1xi1> to vector<8x1xi1>
    %608 = vector.broadcast %607 : vector<8x1xi1> to vector<8x32xi1>
    %609 = vector.broadcast %cst_169 : f32 to vector<8x32xf32>
    %610 = arith.select %608, %598, %609 : vector<8x32xi1>, vector<8x32xf32>
    %c6_170 = arith.constant 6 : index
    %c0_171 = arith.constant 0 : index
    %c0_172 = arith.constant 0 : index
    %611 = vector.load %arg6[%c6_170, %c0_171, %c0_172] : memref<8x8x32xf32, #tpu.memory_space<vmem>>, vector<1x8x32xf32>
    %612 = vector.shape_cast %611 : vector<1x8x32xf32> to vector<8x32xf32>
    %613 = vector.shape_cast %610 : vector<8x32xf32> to vector<1x8x32xf32>
    tpu.vector_store %arg6[%c6_170, %c0_171, %c0_172], %613 {strides = array<i32>} : memref<8x8x32xf32, #tpu.memory_space<vmem>>, vector<1x8x32xf32>,
    %c0_i32_173 = arith.constant 0 : i32
    %614 = arith.subi %c0_i32_173, %arg0 : i32
    %c8_i32_174 = arith.constant 8 : i32
    %615 = arith.muli %614, %c8_i32_174 : i32
    %c1_i32_175 = arith.constant 1 : i32
    %616 = arith.addi %615, %c1_i32_175 : i32
    %c1_176 = arith.constant 1 : index
    %c0_177 = arith.constant 0 : index
    %c0_178 = arith.constant 0 : index
    %617 = vector.load %arg2[%c1_176, %c0_177, %c0_178] : memref<8x8x128xf32, #tpu.memory_space<vmem>>, vector<1x8x128xf32>
    %618 = vector.shape_cast %617 : vector<1x8x128xf32> to vector<8x128xf32>
    %cst_179 = arith.constant dense<0.000000e+00> : vector<8x128xf32>
    %619 = tpu.matmul %557, %5, %cst_179 {dimension_numbers = #tpu.dot_dimension_numbers<[1], [0], [0], [1], [0, 0, 1, 1], [], []>} : vector<8x32xf32>, vector<32x128xf32>, vector<8x128xf32> -> vector<8x128xf32>
    %620 = arith.addf %618, %619 : vector<8x128xf32>
    %621 = vector.extract_strided_slice %620 {offsets = [0, 0], sizes = [8, 32], strides = [1, 1]} : vector<8x128xf32> to vector<8x32xf32>
    %622 = arith.negf %621 : vector<8x32xf32>
    %623 = math.exp %622 : vector<8x32xf32>
    %cst_180 = arith.constant 1.000000e+00 : f32
    %624 = vector.broadcast %cst_180 : f32 to vector<8x32xf32>
    %625 = arith.addf %624, %623 : vector<8x32xf32>
    %626 = arith.divf %624, %625 : vector<8x32xf32>
    %627 = vector.extract_strided_slice %620 {offsets = [0, 32], sizes = [8, 32], strides = [1, 1]} : vector<8x128xf32> to vector<8x32xf32>
    %628 = arith.negf %627 : vector<8x32xf32>
    %629 = math.exp %628 : vector<8x32xf32>
    %cst_181 = arith.constant 1.000000e+00 : f32
    %630 = vector.broadcast %cst_181 : f32 to vector<8x32xf32>
    %631 = arith.addf %630, %629 : vector<8x32xf32>
    %632 = arith.divf %630, %631 : vector<8x32xf32>
    %633 = vector.extract_strided_slice %620 {offsets = [0, 64], sizes = [8, 32], strides = [1, 1]} : vector<8x128xf32> to vector<8x32xf32>
    %634 = math.tanh %633 : vector<8x32xf32>
    %635 = vector.extract_strided_slice %620 {offsets = [0, 96], sizes = [8, 32], strides = [1, 1]} : vector<8x128xf32> to vector<8x32xf32>
    %636 = arith.negf %635 : vector<8x32xf32>
    %637 = math.exp %636 : vector<8x32xf32>
    %cst_182 = arith.constant 1.000000e+00 : f32
    %638 = vector.broadcast %cst_182 : f32 to vector<8x32xf32>
    %639 = arith.addf %638, %637 : vector<8x32xf32>
    %640 = arith.divf %638, %639 : vector<8x32xf32>
    %641 = arith.mulf %632, %560 : vector<8x32xf32>
    %642 = arith.mulf %626, %634 : vector<8x32xf32>
    %643 = arith.addf %641, %642 : vector<8x32xf32>
    %644 = math.tanh %643 : vector<8x32xf32>
    %645 = arith.mulf %640, %644 : vector<8x32xf32>
    %646 = vector.broadcast %616 : i32 to vector<8x1xi32>
    %647 = arith.cmpi slt, %646, %3 : vector<8x1xi32>
    %648 = vector.shape_cast %647 : vector<8x1xi1> to vector<8x1xi1>
    %649 = vector.broadcast %648 : vector<8x1xi1> to vector<8x32xi1>
    %650 = arith.select %649, %645, %557 : vector<8x32xi1>, vector<8x32xf32>
    %651 = vector.shape_cast %647 : vector<8x1xi1> to vector<8x1xi1>
    %652 = vector.broadcast %651 : vector<8x1xi1> to vector<8x32xi1>
    %653 = arith.select %652, %643, %560 : vector<8x32xi1>, vector<8x32xf32>
    %cst_183 = arith.constant 0.000000e+00 : f32
    %654 = vector.shape_cast %647 : vector<8x1xi1> to vector<8x1xi1>
    %655 = vector.broadcast %654 : vector<8x1xi1> to vector<8x32xi1>
    %656 = vector.broadcast %cst_183 : f32 to vector<8x32xf32>
    %657 = arith.select %655, %645, %656 : vector<8x32xi1>, vector<8x32xf32>
    %c1_184 = arith.constant 1 : index
    %c0_185 = arith.constant 0 : index
    %c0_186 = arith.constant 0 : index
    %658 = vector.load %arg7[%c1_184, %c0_185, %c0_186] : memref<8x8x32xf32, #tpu.memory_space<vmem>>, vector<1x8x32xf32>
    %659 = vector.shape_cast %658 : vector<1x8x32xf32> to vector<8x32xf32>
    %660 = vector.shape_cast %657 : vector<8x32xf32> to vector<1x8x32xf32>
    tpu.vector_store %arg7[%c1_184, %c0_185, %c0_186], %660 {strides = array<i32>} : memref<8x8x32xf32, #tpu.memory_space<vmem>>, vector<1x8x32xf32>,
    %c8_i32_187 = arith.constant 8 : i32
    %661 = arith.muli %arg0, %c8_i32_187 : i32
    %c7_i32_188 = arith.constant 7 : i32
    %662 = arith.addi %661, %c7_i32_188 : i32
    %c7_189 = arith.constant 7 : index
    %c0_190 = arith.constant 0 : index
    %c0_191 = arith.constant 0 : index
    %663 = vector.load %arg1[%c7_189, %c0_190, %c0_191] : memref<8x8x128xf32, #tpu.memory_space<vmem>>, vector<1x8x128xf32>
    %664 = vector.shape_cast %663 : vector<1x8x128xf32> to vector<8x128xf32>
    %cst_192 = arith.constant dense<0.000000e+00> : vector<8x128xf32>
    %665 = tpu.matmul %603, %4, %cst_192 {dimension_numbers = #tpu.dot_dimension_numbers<[1], [0], [0], [1], [0, 0, 1, 1], [], []>} : vector<8x32xf32>, vector<32x128xf32>, vector<8x128xf32> -> vector<8x128xf32>
    %666 = arith.addf %664, %665 : vector<8x128xf32>
    %667 = vector.extract_strided_slice %666 {offsets = [0, 0], sizes = [8, 32], strides = [1, 1]} : vector<8x128xf32> to vector<8x32xf32>
    %668 = arith.negf %667 : vector<8x32xf32>
    %669 = math.exp %668 : vector<8x32xf32>
    %cst_193 = arith.constant 1.000000e+00 : f32
    %670 = vector.broadcast %cst_193 : f32 to vector<8x32xf32>
    %671 = arith.addf %670, %669 : vector<8x32xf32>
    %672 = arith.divf %670, %671 : vector<8x32xf32>
    %673 = vector.extract_strided_slice %666 {offsets = [0, 32], sizes = [8, 32], strides = [1, 1]} : vector<8x128xf32> to vector<8x32xf32>
    %674 = arith.negf %673 : vector<8x32xf32>
    %675 = math.exp %674 : vector<8x32xf32>
    %cst_194 = arith.constant 1.000000e+00 : f32
    %676 = vector.broadcast %cst_194 : f32 to vector<8x32xf32>
    %677 = arith.addf %676, %675 : vector<8x32xf32>
    %678 = arith.divf %676, %677 : vector<8x32xf32>
    %679 = vector.extract_strided_slice %666 {offsets = [0, 64], sizes = [8, 32], strides = [1, 1]} : vector<8x128xf32> to vector<8x32xf32>
    %680 = math.tanh %679 : vector<8x32xf32>
    %681 = vector.extract_strided_slice %666 {offsets = [0, 96], sizes = [8, 32], strides = [1, 1]} : vector<8x128xf32> to vector<8x32xf32>
    %682 = arith.negf %681 : vector<8x32xf32>
    %683 = math.exp %682 : vector<8x32xf32>
    %cst_195 = arith.constant 1.000000e+00 : f32
    %684 = vector.broadcast %cst_195 : f32 to vector<8x32xf32>
    %685 = arith.addf %684, %683 : vector<8x32xf32>
    %686 = arith.divf %684, %685 : vector<8x32xf32>
    %687 = arith.mulf %678, %606 : vector<8x32xf32>
    %688 = arith.mulf %672, %680 : vector<8x32xf32>
    %689 = arith.addf %687, %688 : vector<8x32xf32>
    %690 = math.tanh %689 : vector<8x32xf32>
    %691 = arith.mulf %686, %690 : vector<8x32xf32>
    %692 = vector.broadcast %662 : i32 to vector<8x1xi32>
    %693 = arith.cmpi slt, %692, %3 : vector<8x1xi32>
    %694 = vector.shape_cast %693 : vector<8x1xi1> to vector<8x1xi1>
    %695 = vector.broadcast %694 : vector<8x1xi1> to vector<8x32xi1>
    %696 = arith.select %695, %691, %603 : vector<8x32xi1>, vector<8x32xf32>
    %697 = vector.shape_cast %693 : vector<8x1xi1> to vector<8x1xi1>
    %698 = vector.broadcast %697 : vector<8x1xi1> to vector<8x32xi1>
    %699 = arith.select %698, %689, %606 : vector<8x32xi1>, vector<8x32xf32>
    %cst_196 = arith.constant 0.000000e+00 : f32
    %700 = vector.shape_cast %693 : vector<8x1xi1> to vector<8x1xi1>
    %701 = vector.broadcast %700 : vector<8x1xi1> to vector<8x32xi1>
    %702 = vector.broadcast %cst_196 : f32 to vector<8x32xf32>
    %703 = arith.select %701, %691, %702 : vector<8x32xi1>, vector<8x32xf32>
    %c7_197 = arith.constant 7 : index
    %c0_198 = arith.constant 0 : index
    %c0_199 = arith.constant 0 : index
    %704 = vector.load %arg6[%c7_197, %c0_198, %c0_199] : memref<8x8x32xf32, #tpu.memory_space<vmem>>, vector<1x8x32xf32>
    %705 = vector.shape_cast %704 : vector<1x8x32xf32> to vector<8x32xf32>
    %706 = vector.shape_cast %703 : vector<8x32xf32> to vector<1x8x32xf32>
    tpu.vector_store %arg6[%c7_197, %c0_198, %c0_199], %706 {strides = array<i32>} : memref<8x8x32xf32, #tpu.memory_space<vmem>>, vector<1x8x32xf32>,
    %c0_i32_200 = arith.constant 0 : i32
    %707 = arith.subi %c0_i32_200, %arg0 : i32
    %c8_i32_201 = arith.constant 8 : i32
    %708 = arith.muli %707, %c8_i32_201 : i32
    %c0_i32_202 = arith.constant 0 : i32
    %709 = arith.addi %708, %c0_i32_202 : i32
    %c0_203 = arith.constant 0 : index
    %c0_204 = arith.constant 0 : index
    %c0_205 = arith.constant 0 : index
    %710 = vector.load %arg2[%c0_203, %c0_204, %c0_205] : memref<8x8x128xf32, #tpu.memory_space<vmem>>, vector<1x8x128xf32>
    %711 = vector.shape_cast %710 : vector<1x8x128xf32> to vector<8x128xf32>
    %cst_206 = arith.constant dense<0.000000e+00> : vector<8x128xf32>
    %712 = tpu.matmul %650, %5, %cst_206 {dimension_numbers = #tpu.dot_dimension_numbers<[1], [0], [0], [1], [0, 0, 1, 1], [], []>} : vector<8x32xf32>, vector<32x128xf32>, vector<8x128xf32> -> vector<8x128xf32>
    %713 = arith.addf %711, %712 : vector<8x128xf32>
    %714 = vector.extract_strided_slice %713 {offsets = [0, 0], sizes = [8, 32], strides = [1, 1]} : vector<8x128xf32> to vector<8x32xf32>
    %715 = arith.negf %714 : vector<8x32xf32>
    %716 = math.exp %715 : vector<8x32xf32>
    %cst_207 = arith.constant 1.000000e+00 : f32
    %717 = vector.broadcast %cst_207 : f32 to vector<8x32xf32>
    %718 = arith.addf %717, %716 : vector<8x32xf32>
    %719 = arith.divf %717, %718 : vector<8x32xf32>
    %720 = vector.extract_strided_slice %713 {offsets = [0, 32], sizes = [8, 32], strides = [1, 1]} : vector<8x128xf32> to vector<8x32xf32>
    %721 = arith.negf %720 : vector<8x32xf32>
    %722 = math.exp %721 : vector<8x32xf32>
    %cst_208 = arith.constant 1.000000e+00 : f32
    %723 = vector.broadcast %cst_208 : f32 to vector<8x32xf32>
    %724 = arith.addf %723, %722 : vector<8x32xf32>
    %725 = arith.divf %723, %724 : vector<8x32xf32>
    %726 = vector.extract_strided_slice %713 {offsets = [0, 64], sizes = [8, 32], strides = [1, 1]} : vector<8x128xf32> to vector<8x32xf32>
    %727 = math.tanh %726 : vector<8x32xf32>
    %728 = vector.extract_strided_slice %713 {offsets = [0, 96], sizes = [8, 32], strides = [1, 1]} : vector<8x128xf32> to vector<8x32xf32>
    %729 = arith.negf %728 : vector<8x32xf32>
    %730 = math.exp %729 : vector<8x32xf32>
    %cst_209 = arith.constant 1.000000e+00 : f32
    %731 = vector.broadcast %cst_209 : f32 to vector<8x32xf32>
    %732 = arith.addf %731, %730 : vector<8x32xf32>
    %733 = arith.divf %731, %732 : vector<8x32xf32>
    %734 = arith.mulf %725, %653 : vector<8x32xf32>
    %735 = arith.mulf %719, %727 : vector<8x32xf32>
    %736 = arith.addf %734, %735 : vector<8x32xf32>
    %737 = math.tanh %736 : vector<8x32xf32>
    %738 = arith.mulf %733, %737 : vector<8x32xf32>
    %739 = vector.broadcast %709 : i32 to vector<8x1xi32>
    %740 = arith.cmpi slt, %739, %3 : vector<8x1xi32>
    %741 = vector.shape_cast %740 : vector<8x1xi1> to vector<8x1xi1>
    %742 = vector.broadcast %741 : vector<8x1xi1> to vector<8x32xi1>
    %743 = arith.select %742, %738, %650 : vector<8x32xi1>, vector<8x32xf32>
    %744 = vector.shape_cast %740 : vector<8x1xi1> to vector<8x1xi1>
    %745 = vector.broadcast %744 : vector<8x1xi1> to vector<8x32xi1>
    %746 = arith.select %745, %736, %653 : vector<8x32xi1>, vector<8x32xf32>
    %cst_210 = arith.constant 0.000000e+00 : f32
    %747 = vector.shape_cast %740 : vector<8x1xi1> to vector<8x1xi1>
    %748 = vector.broadcast %747 : vector<8x1xi1> to vector<8x32xi1>
    %749 = vector.broadcast %cst_210 : f32 to vector<8x32xf32>
    %750 = arith.select %748, %738, %749 : vector<8x32xi1>, vector<8x32xf32>
    %c0_211 = arith.constant 0 : index
    %c0_212 = arith.constant 0 : index
    %c0_213 = arith.constant 0 : index
    %751 = vector.load %arg7[%c0_211, %c0_212, %c0_213] : memref<8x8x32xf32, #tpu.memory_space<vmem>>, vector<1x8x32xf32>
    %752 = vector.shape_cast %751 : vector<1x8x32xf32> to vector<8x32xf32>
    %753 = vector.shape_cast %750 : vector<8x32xf32> to vector<1x8x32xf32>
    tpu.vector_store %arg7[%c0_211, %c0_212, %c0_213], %753 {strides = array<i32>} : memref<8x8x32xf32, #tpu.memory_space<vmem>>, vector<1x8x32xf32>,
    %c0_214 = arith.constant 0 : index
    %c0_215 = arith.constant 0 : index
    %754 = vector.load %arg8[%c0_214, %c0_215] : memref<8x32xf32, #tpu.memory_space<vmem>>, vector<8x32xf32>
    tpu.vector_store %arg8[%c0_214, %c0_215], %696 {strides = array<i32>} : memref<8x32xf32, #tpu.memory_space<vmem>>, vector<8x32xf32>,
    %c0_216 = arith.constant 0 : index
    %c0_217 = arith.constant 0 : index
    %755 = vector.load %arg9[%c0_216, %c0_217] : memref<8x32xf32, #tpu.memory_space<vmem>>, vector<8x32xf32>
    tpu.vector_store %arg9[%c0_216, %c0_217], %699 {strides = array<i32>} : memref<8x32xf32, #tpu.memory_space<vmem>>, vector<8x32xf32>,
    %c0_218 = arith.constant 0 : index
    %c0_219 = arith.constant 0 : index
    %756 = vector.load %arg10[%c0_218, %c0_219] : memref<8x32xf32, #tpu.memory_space<vmem>>, vector<8x32xf32>
    tpu.vector_store %arg10[%c0_218, %c0_219], %743 {strides = array<i32>} : memref<8x32xf32, #tpu.memory_space<vmem>>, vector<8x32xf32>,
    %c0_220 = arith.constant 0 : index
    %c0_221 = arith.constant 0 : index
    %757 = vector.load %arg11[%c0_220, %c0_221] : memref<8x32xf32, #tpu.memory_space<vmem>>, vector<8x32xf32>
    tpu.vector_store %arg11[%c0_220, %c0_221], %746 {strides = array<i32>} : memref<8x32xf32, #tpu.memory_space<vmem>>, vector<8x32xf32>,
    return
  }
  func.func @transform_0(%arg0: i32) -> (i32, i32, i32) {
    %c0_i32 = arith.constant 0 : i32
    %c0_i32_0 = arith.constant 0 : i32
    %c0_i32_1 = arith.constant 0 : i32
    return %arg0, %c0_i32, %c0_i32_0 : i32, i32, i32
  }
  func.func @transform_1(%arg0: i32) -> (i32, i32, i32) {
    %c0_i32 = arith.constant 0 : i32
    %0 = arith.subi %c0_i32, %arg0 : i32
    %c0_i32_0 = arith.constant 0 : i32
    %c0_i32_1 = arith.constant 0 : i32
    %c0_i32_2 = arith.constant 0 : i32
    return %0, %c0_i32_0, %c0_i32_1 : i32, i32, i32
  }
  func.func @transform_2(%arg0: i32) -> (i32, i32) {
    %c0_i32 = arith.constant 0 : i32
    %c0_i32_0 = arith.constant 0 : i32
    %c0_i32_1 = arith.constant 0 : i32
    return %c0_i32, %c0_i32_0 : i32, i32
  }
  func.func @transform_3(%arg0: i32) -> (i32, i32) {
    %c0_i32 = arith.constant 0 : i32
    %c0_i32_0 = arith.constant 0 : i32
    %c0_i32_1 = arith.constant 0 : i32
    return %c0_i32, %c0_i32_0 : i32, i32
  }
  func.func @transform_4(%arg0: i32) -> (i32, i32) {
    %c0_i32 = arith.constant 0 : i32
    %c0_i32_0 = arith.constant 0 : i32
    %c0_i32_1 = arith.constant 0 : i32
    return %c0_i32, %c0_i32_0 : i32, i32
  }
  func.func @transform_5(%arg0: i32) -> (i32, i32, i32) {
    %c0_i32 = arith.constant 0 : i32
    %c0_i32_0 = arith.constant 0 : i32
    %c0_i32_1 = arith.constant 0 : i32
    return %arg0, %c0_i32, %c0_i32_0 : i32, i32, i32
  }
  func.func @transform_6(%arg0: i32) -> (i32, i32, i32) {
    %c0_i32 = arith.constant 0 : i32
    %0 = arith.subi %c0_i32, %arg0 : i32
    %c0_i32_0 = arith.constant 0 : i32
    %c0_i32_1 = arith.constant 0 : i32
    %c0_i32_2 = arith.constant 0 : i32
    return %0, %c0_i32_0, %c0_i32_1 : i32, i32, i32
  }
}

</mosaic_0001>

<llo_original>
// kernel: word_rnn_forward.1
$region0: #{word_rnn_forward.1}
  #allocation0 [shape = 'u32[]', space=smem, size = 0x4, offset = 0x4, fixed_abs, tag = 'smem constant byte address 0x4 - core index']
  #allocation1 [shape = 'u32[144,128]{1,0:T(1,128)}', space=vmem, size = 0x12000, scoped, tag = 'internal scratch']
  #allocation2 [shape = 'f32[8,32]{1,0:T(8,128)}', space=vmem, size = 0x1000, scoped, tag = 'scratch operand']
  #allocation3 [shape = 'f32[8,32]{1,0:T(8,128)}', space=vmem, size = 0x1000, scoped, tag = 'scratch operand']
  #allocation4 [shape = 'f32[8,32]{1,0:T(8,128)}', space=vmem, size = 0x1000, scoped, tag = 'scratch operand']
  #allocation5 [shape = 'f32[8,32]{1,0:T(8,128)}', space=vmem, size = 0x1000, scoped, tag = 'scratch operand']
  %s0 = inlined_call_operand.vmem [shape: f32[8,8,128], index: 0, kind: input, shape index: {}]
  %s1 = inlined_call_operand.vmem [shape: f32[8,8,128], index: 1, kind: input, shape index: {}]
  %s2 = inlined_call_operand.vmem [shape: s32[8,1], index: 2, kind: input, shape index: {}]
  %s3 = inlined_call_operand.vmem [shape: f32[32,128], index: 3, kind: input, shape index: {}]
  %s4 = inlined_call_operand.vmem [shape: f32[32,128], index: 4, kind: input, shape index: {}]
  %s5 = inlined_call_operand.vmem [shape: f32[8,8,32], index: 5, kind: output, shape index: {0}]
  %s6 = inlined_call_operand.vmem [shape: f32[8,8,32], index: 6, kind: output, shape index: {1}]
  %7 = xla_tuple %s5, %s6
  %s8 = sld [smem:[#allocation0]]
  $region42: #{word_rnn_forward.1} parent=0
    _
  %s10 = ssub.s32 1, %s8
  %s11 = scalar_select 0, %s10, %s8
  // Predicated region
  $region2: #{word_rnn_forward.1} parent=0 // pred_check
    _
  $region3: #{word_rnn_forward.1} parent=0 // pred_check_branch
    %13 = sbr.rel (0) target = $region5
  $region4: #{word_rnn_forward.1} parent=0 // pred_region
    _
  $region5: #{word_rnn_forward.1} parent=0 // pred_fallthru
    _
  // Predicated region
  $region6: #{word_rnn_forward.1} parent=0 // pred_check
    _
  $region7: #{word_rnn_forward.1} parent=0 // pred_check_branch
    %15 = sbr.rel (0) target = $region9
  $region8: #{word_rnn_forward.1} parent=0 // pred_region
    %s16 = ssub.s32 0, 0
    %s17 = smul.u32 8, %s16
    %p18 = scmp.lt.s32.totalorder %s17, 7
    %s19 = scalar_select %p18, %s17, 7
    %s20 = smul.addr %s19, 8
    %s21 = scalar_lea.vmem %s1, %s20
    %s22 = ssub.s32 0, 0
    %s23 = smul.u32 8, %s22
  $region9: #{word_rnn_forward.1} parent=0 // pred_fallthru
    _
  // Predicated region
  $region10: #{word_rnn_forward.1} parent=0 // pred_check
    _
  $region11: #{word_rnn_forward.1} parent=0 // pred_check_branch
    %25 = sbr.rel (0) target = $region13
  $region12: #{word_rnn_forward.1} parent=0 // pred_region
    _
  $region13: #{word_rnn_forward.1} parent=0 // pred_fallthru
    _
  // Predicated region
  $region14: #{word_rnn_forward.1} parent=0 // pred_check
    _
  $region15: #{word_rnn_forward.1} parent=0 // pred_check_branch
    %27 = sbr.rel (0) target = $region17
  $region16: #{word_rnn_forward.1} parent=0 // pred_region
    _
  $region17: #{word_rnn_forward.1} parent=0 // pred_fallthru
    _
  // Predicated region
  $region18: #{word_rnn_forward.1} parent=0 // pred_check
    _
  $region19: #{word_rnn_forward.1} parent=0 // pred_check_branch
    %29 = sbr.rel (0) target = $region21
  $region20: #{word_rnn_forward.1} parent=0 // pred_region
    _
  $region21: #{word_rnn_forward.1} parent=0 // pred_fallthru
    _
  %s30 = ssub.s32 0, 0
  %s31 = smul.u32 8, %s30
  %p32 = scmp.lt.s32.totalorder %s31, 7
  %s33 = scalar_select %p32, %s31, 7
  %s34 = smul.addr %s33, 8
  %s35 = scalar_lea.vmem %s1, %s34
  %s36 = ssub.s32 0, 0
  %s37 = smul.u32 8, %s36
  %p38 = scmp.lt.s32.totalorder %s37, 7
  %s39 = scalar_select %p38, %s37, 7
  %s40 = smul.addr %s39, 8
  %s41 = scalar_lea.vmem %s6, %s40
  %s42 = ssub.s32 0, 0
  %s43 = smul.u32 8, %s42
  %p44 = scmp.lt.s32.totalorder %s43, 7
  %s45 = scalar_select %p44, %s43, 7
  %s46 = smul.addr %s45, 8
  %s47 = scalar_lea.vmem %s1, %s46
  %s48 = ssub.s32 0, 0
  %s49 = smul.u32 8, %s48
  %s50 = ssub.s32 0, 0
  %s51 = smul.u32 8, %s50
  %p52 = scmp.lt.s32.totalorder %s51, 7
  %s53 = scalar_select %p52, %s51, 7
  %s54 = smul.addr %s53, 8
  %s55 = scalar_lea.vmem %s6, %s54
  %s56 = ssub.s32 0, 0
  %s57 = smul.u32 8, %s56
  %p58 = scmp.eq.s32.totalorder 0, 0
  // Predicated region
  $region22: #{word_rnn_forward.1} parent=0 // pred_check
    %p59 = pneg %p58
  $region23: #{word_rnn_forward.1} parent=0 // pred_check_branch
    %61 = sbr.rel (%p59) target = $region25
  $region24: #{word_rnn_forward.1} parent=0 // pred_region
    %vm62 = vcmask 261120
    %63 = vst.msk [vmem:[#allocation2] sm:$0xff] %vm62, 0.0
    %64 = vst.msk [vmem:[#allocation3] sm:$0xff] %vm62, 0.0
    %65 = vst.msk [vmem:[#allocation4] sm:$0xff] %vm62, 0.0
    %66 = vst.msk [vmem:[#allocation5] sm:$0xff] %vm62, 0.0
  $region25: #{word_rnn_forward.1} parent=0 // pred_fallthru
    _
  %v67 = vld [vmem:[%s2] sm:$0xff]
  %v68 = vld [vmem:[%s3] sm:$0xff]
  %v69 = vld [vmem:[%s3 + $0x8] sm:$0xff]
  %v70 = vld [vmem:[%s3 + $0x10] sm:$0xff]
  %v71 = vld [vmem:[%s3 + $0x18] sm:$0xff]
  %v72 = vld [vmem:[%s4] sm:$0xff]
  %v73 = vld [vmem:[%s4 + $0x8] sm:$0xff]
  %v74 = vld [vmem:[%s4 + $0x10] sm:$0xff]
  %v75 = vld [vmem:[%s4 + $0x18] sm:$0xff]
  %v76 = vld [vmem:[#allocation2] sm:$0xff]
  %v77 = vld [vmem:[#allocation3] sm:$0xff]
  %v78 = vld [vmem:[#allocation4] sm:$0xff]
  %v79 = vld [vmem:[#allocation5] sm:$0xff]
  %s80 = smul.u32 0, 8
  %v81 = vld [vmem:[%s0] sm:$0xff]
  %vm82 = vcmask 261120
  %v84 = vsel %vm82, %v76, 0
  %86 = vmatprep.subr.mxu0 0.0
  %87 = vmatpush1.msra.mxu0 %v68
  %88 = vmatprep.subr.mxu0 0.0
  %89 = vmatpush1.msra.mxu0 %v69
  %90 = vmatprep.subr.mxu0 0.0
  %91 = vmatpush1.msra.mxu0 %v70
  %92 = vmatprep.subr.mxu0 0.0
  %93 = vmatpush1.msra.mxu0 %v71
  %94 = vmatprep.subr.mxu0 0.0
  %95 = vmatpush1.msra.mxu0 0.0
  %96 = vmatprep.subr.mxu0 0.0
  %97 = vmatpush1.msra.mxu0 0.0
  %98 = vmatprep.subr.mxu0 0.0
  %99 = vmatpush1.msra.mxu0 0.0
  %100 = vmatprep.subr.mxu0 0.0
  %101 = vmatpush1.msra.mxu0 0.0
  %102 = vmatprep.subr.mxu0 0.0
  %103 = vmatpush1.msra.mxu0 0.0
  %104 = vmatprep.subr.mxu0 0.0
  %105 = vmatpush1.msra.mxu0 0.0
  %106 = vmatprep.subr.mxu0 0.0
  %107 = vmatpush1.msra.mxu0 0.0
  %108 = vmatprep.subr.mxu0 0.0
  %109 = vmatpush1.msra.mxu0 0.0
  %110 = vmatprep.subr.mxu0 0.0
  %111 = vmatpush1.msra.mxu0 0.0
  %112 = vmatprep.subr.mxu0 0.0
  %113 = vmatpush1.msra.mxu0 0.0
  %114 = vmatprep.subr.mxu0 0.0
  %115 = vmatpush1.msra.mxu0 0.0
  %116 = vmatprep.subr.mxu0 0.0
  %117 = vmatpush1.msra.mxu0 0.0
  %118 = vmatprep.subr.mxu0 0.0
  %119 = vmatpush1.msra.mxu0 0.0
  %120 = vmatprep.subr.mxu0 0.0
  %121 = vmatpush1.msra.mxu0 0.0
  %122 = vmatprep.subr.mxu0 0.0
  %123 = vmatpush1.msra.mxu0 0.0
  %124 = vmatprep.subr.mxu0 0.0
  %125 = vmatpush1.msra.mxu0 0.0
  %126 = vmatprep.subr.mxu0 0.0
  %127 = vmatpush1.msra.mxu0 0.0
  %128 = vmatprep.subr.mxu0 0.0
  %129 = vmatpush1.msra.mxu0 0.0
  %130 = vmatprep.subr.mxu0 0.0
  %131 = vmatpush1.msra.mxu0 0.0
  %132 = vmatprep.subr.mxu0 0.0
  %133 = vmatpush1.msra.mxu0 0.0
  %134 = vmatprep.subr.mxu0 0.0
  %135 = vmatpush1.msra.mxu0 0.0
  %136 = vmatprep.subr.mxu0 0.0
  %137 = vmatpush1.msra.mxu0 0.0
  %138 = vmatprep.subr.mxu0 0.0
  %139 = vmatpush1.msra.mxu0 0.0
  %140 = vmatprep.subr.mxu0 0.0
  %141 = vmatpush1.msra.mxu0 0.0
  %142 = vmatprep.subr.mxu0 0.0
  %143 = vmatpush1.msra.mxu0 0.0
  %144 = vmatprep.subr.mxu0 0.0
  %145 = vmatpush1.msra.mxu0 0.0
  %146 = vmatprep.subr.mxu0 0.0
  %147 = vmatpush1.msra.mxu0 0.0
  %148 = vmatprep.subr.mxu0 0.0
  %149 = vmatpush1.msra.mxu0 0.0
  %150 = vmatprep.mubr.f32.mxu0 0.0
  %151 = vmatmul.mubr.f32.gmra.mrb[0].mxu0 %v84
  %v152 = vpop.f32.mrb[0].mxu0
  %v153 = vadd.f32 0.0, %v152
  %v154 = vpop.f32.mrb[0].mxu0
  %155 = vdwg.mxu0
  %v156 = vadd.f32 %v81, %v153
  %v157 = vxor.u32 %v156, 2147483648
  %v158 = vmul.f32 %v157, 1.442695
  %v159 = vpow.pop %v158
  %v160 = vadd.f32 %v159, 1.0
  %v161 = vrcp.pop %v160
  %v162 = vmul.f32 1.0, %v161
  %v163 = vtanh.pop %v156
  %165 = vrot.lane.b32.xlu0 %v77, 32
  %v166 = vpop.permute.xlu0 %165
  %v168 = vmul.f32 %v162, %v166
  %170 = vrot.lane.b32.xlu0 %v163, 64
  %v171 = vpop.permute.xlu0 %170
  %v173 = vmul.f32 %v162, %v171
  %175 = vrot.lane.b32.xlu0 %v173, 32
  %v176 = vpop.permute.xlu0 %175
  %v178 = vadd.f32 %v168, %v176
  %v179 = vtanh.pop %v178
  %181 = vrot.lane.b32.xlu0 %v179, 64
  %v182 = vpop.permute.xlu0 %181
  %v184 = vmul.f32 %v162, %v182
  %v185 = vstv %s80
  %vm186 = vcmp.lt.s32.totalorder %v185, %v67
  %v187 = vsel %vm186, 1, 0
  %188 = vset.pattern.permute.xlu0 0
  %189 = vperm.xlu0 %188, %v187
  %v190 = vpop.permute.xlu0 %189
  %vm191 = vcmp.eq.s32.totalorder %v190, 1
  %192 = vrot.lane.b32.xlu0 %v76, 96
  %v193 = vpop.permute.xlu0 %192
  %v195 = vsel %vm191, %v184, %v193
  %v196 = vsel %vm191, %v178, %v166
  %v197 = vsel %vm191, %v184, 0.0
  %199 = vrot.lane.b32.xlu0 %v197, 32
  %v200 = vpop.permute.xlu0 %199
  %202 = vst.msk [vmem:[%s5] sm:$0xff] %vm82, %v200
  %s203 = ssub.s32 0, 0
  %s204 = smul.u32 %s203, 8
  %s205 = sadd.s32 %s204, 7
  %s206 = scalar_lea.vmem %s47, 56
  %v207 = vld [vmem:[%s206] sm:$0xff]
  %v209 = vsel %vm82, %v78, 0
  %211 = vmatprep.subr.mxu0 0.0
  %212 = vmatpush1.msra.mxu0 %v72
  %213 = vmatprep.subr.mxu0 0.0
  %214 = vmatpush1.msra.mxu0 %v73
  %215 = vmatprep.subr.mxu0 0.0
  %216 = vmatpush1.msra.mxu0 %v74
  %217 = vmatprep.subr.mxu0 0.0
  %218 = vmatpush1.msra.mxu0 %v75
  %219 = vmatprep.subr.mxu0 0.0
  %220 = vmatpush1.msra.mxu0 0.0
  %221 = vmatprep.subr.mxu0 0.0
  %222 = vmatpush1.msra.mxu0 0.0
  %223 = vmatprep.subr.mxu0 0.0
  %224 = vmatpush1.msra.mxu0 0.0
  %225 = vmatprep.subr.mxu0 0.0
  %226 = vmatpush1.msra.mxu0 0.0
  %227 = vmatprep.subr.mxu0 0.0
  %228 = vmatpush1.msra.mxu0 0.0
  %229 = vmatprep.subr.mxu0 0.0
  %230 = vmatpush1.msra.mxu0 0.0
  %231 = vmatprep.subr.mxu0 0.0
  %232 = vmatpush1.msra.mxu0 0.0
  %233 = vmatprep.subr.mxu0 0.0
  %234 = vmatpush1.msra.mxu0 0.0
  %235 = vmatprep.subr.mxu0 0.0
  %236 = vmatpush1.msra.mxu0 0.0
  %237 = vmatprep.subr.mxu0 0.0
  %238 = vmatpush1.msra.mxu0 0.0
  %239 = vmatprep.subr.mxu0 0.0
  %240 = vmatpush1.msra.mxu0 0.0
  %241 = vmatprep.subr.mxu0 0.0
  %242 = vmatpush1.msra.mxu0 0.0
  %243 = vmatprep.subr.mxu0 0.0
  %244 = vmatpush1.msra.mxu0 0.0
  %245 = vmatprep.subr.mxu0 0.0
  %246 = vmatpush1.msra.mxu0 0.0
  %247 = vmatprep.subr.mxu0 0.0
  %248 = vmatpush1.msra.mxu0 0.0
  %249 = vmatprep.subr.mxu0 0.0
  %250 = vmatpush1.msra.mxu0 0.0
  %251 = vmatprep.subr.mxu0 0.0
  %252 = vmatpush1.msra.mxu0 0.0
  %253 = vmatprep.subr.mxu0 0.0
  %254 = vmatpush1.msra.mxu0 0.0
  %255 = vmatprep.subr.mxu0 0.0
  %256 = vmatpush1.msra.mxu0 0.0
  %257 = vmatprep.subr.mxu0 0.0
  %258 = vmatpush1.msra.mxu0 0.0
  %259 = vmatprep.subr.mxu0 0.0
  %260 = vmatpush1.msra.mxu0 0.0
  %261 = vmatprep.subr.mxu0 0.0
  %262 = vmatpush1.msra.mxu0 0.0
  %263 = vmatprep.subr.mxu0 0.0
  %264 = vmatpush1.msra.mxu0 0.0
  %265 = vmatprep.subr.mxu0 0.0
  %266 = vmatpush1.msra.mxu0 0.0
  %267 = vmatprep.subr.mxu0 0.0
  %268 = vmatpush1.msra.mxu0 0.0
  %269 = vmatprep.subr.mxu0 0.0
  %270 = vmatpush1.msra.mxu0 0.0
  %271 = vmatprep.subr.mxu0 0.0
  %272 = vmatpush1.msra.mxu0 0.0
  %273 = vmatprep.subr.mxu0 0.0
  %274 = vmatpush1.msra.mxu0 0.0
  %275 = vmatprep.mubr.f32.mxu0 0.0
  %276 = vmatmul.mubr.f32.gmra.mrb[0].mxu0 %v209
  %v277 = vpop.f32.mrb[0].mxu0
  %v278 = vadd.f32 0.0, %v277
  %v279 = vpop.f32.mrb[0].mxu0
  %280 = vdwg.mxu0
  %v281 = vadd.f32 %v207, %v278
  %v282 = vxor.u32 %v281, 2147483648
  %v283 = vmul.f32 %v282, 1.442695
  %v284 = vpow.pop %v283
  %v285 = vadd.f32 %v284, 1.0
  %v286 = vrcp.pop %v285
  %v287 = vmul.f32 1.0, %v286
  %v288 = vtanh.pop %v281
  %290 = vrot.lane.b32.xlu0 %v79, 32
  %v291 = vpop.permute.xlu0 %290
  %v293 = vmul.f32 %v287, %v291
  %295 = vrot.lane.b32.xlu0 %v288, 64
  %v296 = vpop.permute.xlu0 %295
  %v298 = vmul.f32 %v287, %v296
  %300 = vrot.lane.b32.xlu0 %v298, 32
  %v301 = vpop.permute.xlu0 %300
  %v303 = vadd.f32 %v293, %v301
  %v304 = vtanh.pop %v303
  %306 = vrot.lane.b32.xlu0 %v304, 64
  %v307 = vpop.permute.xlu0 %306
  %v309 = vmul.f32 %v287, %v307
  %v310 = vstv %s205
  %vm311 = vcmp.lt.s32.totalorder %v310, %v67
  %v312 = vsel %vm311, 1, 0
  %313 = vset.pattern.permute.xlu0 0
  %314 = vperm.xlu0 %313, %v312
  %v315 = vpop.permute.xlu0 %314
  %vm316 = vcmp.eq.s32.totalorder %v315, 1
  %317 = vrot.lane.b32.xlu0 %v78, 96
  %v318 = vpop.permute.xlu0 %317
  %v320 = vsel %vm316, %v309, %v318
  %v321 = vsel %vm316, %v303, %v291
  %v322 = vsel %vm316, %v309, 0.0
  %324 = vrot.lane.b32.xlu0 %v322, 32
  %v325 = vpop.permute.xlu0 %324
  %s327 = scalar_lea.vmem %s55, 56
  %328 = vst.msk [vmem:[%s327] sm:$0xff] %vm82, %v325
  %s329 = sadd.s32 %s80, 1
  %s330 = scalar_lea.vmem %s0, 8
  %v331 = vld [vmem:[%s330] sm:$0xff]
  %333 = vrot.lane.b32.xlu0 %v195, 32
  %v334 = vpop.permute.xlu0 %333
  %v335 = vsel %vm82, %v334, 0
  %337 = vmatprep.subr.mxu0 0.0
  %338 = vmatpush1.msra.mxu0 %v68
  %339 = vmatprep.subr.mxu0 0.0
  %340 = vmatpush1.msra.mxu0 %v69
  %341 = vmatprep.subr.mxu0 0.0
  %342 = vmatpush1.msra.mxu0 %v70
  %343 = vmatprep.subr.mxu0 0.0
  %344 = vmatpush1.msra.mxu0 %v71
  %345 = vmatprep.subr.mxu0 0.0
  %346 = vmatpush1.msra.mxu0 0.0
  %347 = vmatprep.subr.mxu0 0.0
  %348 = vmatpush1.msra.mxu0 0.0
  %349 = vmatprep.subr.mxu0 0.0
  %350 = vmatpush1.msra.mxu0 0.0
  %351 = vmatprep.subr.mxu0 0.0
  %352 = vmatpush1.msra.mxu0 0.0
  %353 = vmatprep.subr.mxu0 0.0
  %354 = vmatpush1.msra.mxu0 0.0
  %355 = vmatprep.subr.mxu0 0.0
  %356 = vmatpush1.msra.mxu0 0.0
  %357 = vmatprep.subr.mxu0 0.0
  %358 = vmatpush1.msra.mxu0 0.0
  %359 = vmatprep.subr.mxu0 0.0
  %360 = vmatpush1.msra.mxu0 0.0
  %361 = vmatprep.subr.mxu0 0.0
  %362 = vmatpush1.msra.mxu0 0.0
  %363 = vmatprep.subr.mxu0 0.0
  %364 = vmatpush1.msra.mxu0 0.0
  %365 = vmatprep.subr.mxu0 0.0
  %366 = vmatpush1.msra.mxu0 0.0
  %367 = vmatprep.subr.mxu0 0.0
  %368 = vmatpush1.msra.mxu0 0.0
  %369 = vmatprep.subr.mxu0 0.0
  %370 = vmatpush1.msra.mxu0 0.0
  %371 = vmatprep.subr.mxu0 0.0
  %372 = vmatpush1.msra.mxu0 0.0
  %373 = vmatprep.subr.mxu0 0.0
  %374 = vmatpush1.msra.mxu0 0.0
  %375 = vmatprep.subr.mxu0 0.0
  %376 = vmatpush1.msra.mxu0 0.0
  %377 = vmatprep.subr.mxu0 0.0
  %378 = vmatpush1.msra.mxu0 0.0
  %379 = vmatprep.subr.mxu0 0.0
  %380 = vmatpush1.msra.mxu0 0.0
  %381 = vmatprep.subr.mxu0 0.0
  %382 = vmatpush1.msra.mxu0 0.0
  %383 = vmatprep.subr.mxu0 0.0
  %384 = vmatpush1.msra.mxu0 0.0
  %385 = vmatprep.subr.mxu0 0.0
  %386 = vmatpush1.msra.mxu0 0.0
  %387 = vmatprep.subr.mxu0 0.0
  %388 = vmatpush1.msra.mxu0 0.0
  %389 = vmatprep.subr.mxu0 0.0
  %390 = vmatpush1.msra.mxu0 0.0
  %391 = vmatprep.subr.mxu0 0.0
  %392 = vmatpush1.msra.mxu0 0.0
  %393 = vmatprep.subr.mxu0 0.0
  %394 = vmatpush1.msra.mxu0 0.0
  %395 = vmatprep.subr.mxu0 0.0
  %396 = vmatpush1.msra.mxu0 0.0
  %397 = vmatprep.subr.mxu0 0.0
  %398 = vmatpush1.msra.mxu0 0.0
  %399 = vmatprep.subr.mxu0 0.0
  %400 = vmatpush1.msra.mxu0 0.0
  %401 = vmatprep.mubr.f32.mxu0 0.0
  %402 = vmatmul.mubr.f32.gmra.mrb[0].mxu0 %v335
  %v403 = vpop.f32.mrb[0].mxu0
  %v404 = vadd.f32 0.0, %v403
  %v405 = vpop.f32.mrb[0].mxu0
  %406 = vdwg.mxu0
  %v407 = vadd.f32 %v331, %v404
  %v408 = vxor.u32 %v407, 2147483648
  %v409 = vmul.f32 %v408, 1.442695
  %v410 = vpow.pop %v409
  %v411 = vadd.f32 %v410, 1.0
  %v412 = vrcp.pop %v411
  %v413 = vmul.f32 1.0, %v412
  %v414 = vtanh.pop %v407
  %v415 = vmul.f32 %v413, %v196
  %417 = vrot.lane.b32.xlu0 %v414, 64
  %v418 = vpop.permute.xlu0 %417
  %v420 = vmul.f32 %v413, %v418
  %422 = vrot.lane.b32.xlu0 %v420, 32
  %v423 = vpop.permute.xlu0 %422
  %v425 = vadd.f32 %v415, %v423
  %v426 = vtanh.pop %v425
  %428 = vrot.lane.b32.xlu0 %v426, 64
  %v429 = vpop.permute.xlu0 %428
  %v431 = vmul.f32 %v413, %v429
  %v432 = vstv %s329
  %vm433 = vcmp.lt.s32.totalorder %v432, %v67
  %v434 = vsel %vm433, 1, 0
  %435 = vset.pattern.permute.xlu0 0
  %436 = vperm.xlu0 %435, %v434
  %v437 = vpop.permute.xlu0 %436
  %vm438 = vcmp.eq.s32.totalorder %v437, 1
  %v439 = vsel %vm438, %v431, %v195
  %v440 = vsel %vm438, %v425, %v196
  %v441 = vsel %vm438, %v431, 0.0
  %443 = vrot.lane.b32.xlu0 %v441, 32
  %v444 = vpop.permute.xlu0 %443
  %s446 = scalar_lea.vmem %s5, 8
  %447 = vst.msk [vmem:[%s446] sm:$0xff] %vm82, %v444
  %s448 = sadd.s32 %s204, 6
  %s449 = scalar_lea.vmem %s47, 48
  %v450 = vld [vmem:[%s449] sm:$0xff]
  %452 = vrot.lane.b32.xlu0 %v320, 32
  %v453 = vpop.permute.xlu0 %452
  %v454 = vsel %vm82, %v453, 0
  %456 = vmatprep.subr.mxu0 0.0
  %457 = vmatpush1.msra.mxu0 %v72
  %458 = vmatprep.subr.mxu0 0.0
  %459 = vmatpush1.msra.mxu0 %v73
  %460 = vmatprep.subr.mxu0 0.0
  %461 = vmatpush1.msra.mxu0 %v74
  %462 = vmatprep.subr.mxu0 0.0
  %463 = vmatpush1.msra.mxu0 %v75
  %464 = vmatprep.subr.mxu0 0.0
  %465 = vmatpush1.msra.mxu0 0.0
  %466 = vmatprep.subr.mxu0 0.0
  %467 = vmatpush1.msra.mxu0 0.0
  %468 = vmatprep.subr.mxu0 0.0
  %469 = vmatpush1.msra.mxu0 0.0
  %470 = vmatprep.subr.mxu0 0.0
  %471 = vmatpush1.msra.mxu0 0.0
  %472 = vmatprep.subr.mxu0 0.0
  %473 = vmatpush1.msra.mxu0 0.0
  %474 = vmatprep.subr.mxu0 0.0
  %475 = vmatpush1.msra.mxu0 0.0
  %476 = vmatprep.subr.mxu0 0.0
  %477 = vmatpush1.msra.mxu0 0.0
  %478 = vmatprep.subr.mxu0 0.0
  %479 = vmatpush1.msra.mxu0 0.0
  %480 = vmatprep.subr.mxu0 0.0
  %481 = vmatpush1.msra.mxu0 0.0
  %482 = vmatprep.subr.mxu0 0.0
  %483 = vmatpush1.msra.mxu0 0.0
  %484 = vmatprep.subr.mxu0 0.0
  %485 = vmatpush1.msra.mxu0 0.0
  %486 = vmatprep.subr.mxu0 0.0
  %487 = vmatpush1.msra.mxu0 0.0
  %488 = vmatprep.subr.mxu0 0.0
  %489 = vmatpush1.msra.mxu0 0.0
  %490 = vmatprep.subr.mxu0 0.0
  %491 = vmatpush1.msra.mxu0 0.0
  %492 = vmatprep.subr.mxu0 0.0
  %493 = vmatpush1.msra.mxu0 0.0
  %494 = vmatprep.subr.mxu0 0.0
  %495 = vmatpush1.msra.mxu0 0.0
  %496 = vmatprep.subr.mxu0 0.0
  %497 = vmatpush1.msra.mxu0 0.0
  %498 = vmatprep.subr.mxu0 0.0
  %499 = vmatpush1.msra.mxu0 0.0
  %500 = vmatprep.subr.mxu0 0.0
  %501 = vmatpush1.msra.mxu0 0.0
  %502 = vmatprep.subr.mxu0 0.0
  %503 = vmatpush1.msra.mxu0 0.0
  %504 = vmatprep.subr.mxu0 0.0
  %505 = vmatpush1.msra.mxu0 0.0
  %506 = vmatprep.subr.mxu0 0.0
  %507 = vmatpush1.msra.mxu0 0.0
  %508 = vmatprep.subr.mxu0 0.0
  %509 = vmatpush1.msra.mxu0 0.0
  %510 = vmatprep.subr.mxu0 0.0
  %511 = vmatpush1.msra.mxu0 0.0
  %512 = vmatprep.subr.mxu0 0.0
  %513 = vmatpush1.msra.mxu0 0.0
  %514 = vmatprep.subr.mxu0 0.0
  %515 = vmatpush1.msra.mxu0 0.0
  %516 = vmatprep.subr.mxu0 0.0
  %517 = vmatpush1.msra.mxu0 0.0
  %518 = vmatprep.subr.mxu0 0.0
  %519 = vmatpush1.msra.mxu0 0.0
  %520 = vmatprep.mubr.f32.mxu0 0.0
  %521 = vmatmul.mubr.f32.gmra.mrb[0].mxu0 %v454
  %v522 = vpop.f32.mrb[0].mxu0
  %v523 = vadd.f32 0.0, %v522
  %v524 = vpop.f32.mrb[0].mxu0
  %525 = vdwg.mxu0
  %v526 = vadd.f32 %v450, %v523
  %v527 = vxor.u32 %v526, 2147483648
  %v528 = vmul.f32 %v527, 1.442695
  %v529 = vpow.pop %v528
  %v530 = vadd.f32 %v529, 1.0
  %v531 = vrcp.pop %v530
  %v532 = vmul.f32 1.0, %v531
  %v533 = vtanh.pop %v526
  %v534 = vmul.f32 %v532, %v321
  %536 = vrot.lane.b32.xlu0 %v533, 64
  %v537 = vpop.permute.xlu0 %536
  %v539 = vmul.f32 %v532, %v537
  %541 = vrot.lane.b32.xlu0 %v539, 32
  %v542 = vpop.permute.xlu0 %541
  %v544 = vadd.f32 %v534, %v542
  %v545 = vtanh.pop %v544
  %547 = vrot.lane.b32.xlu0 %v545, 64
  %v548 = vpop.permute.xlu0 %547
  %v550 = vmul.f32 %v532, %v548
  %v551 = vstv %s448
  %vm552 = vcmp.lt.s32.totalorder %v551, %v67
  %v553 = vsel %vm552, 1, 0
  %554 = vset.pattern.permute.xlu0 0
  %555 = vperm.xlu0 %554, %v553
  %v556 = vpop.permute.xlu0 %555
  %vm557 = vcmp.eq.s32.totalorder %v556, 1
  %v558 = vsel %vm557, %v550, %v320
  %v559 = vsel %vm557, %v544, %v321
  %v560 = vsel %vm557, %v550, 0.0
  %562 = vrot.lane.b32.xlu0 %v560, 32
  %v563 = vpop.permute.xlu0 %562
  %s565 = scalar_lea.vmem %s55, 48
  %566 = vst.msk [vmem:[%s565] sm:$0xff] %vm82, %v563
  %s567 = sadd.s32 %s80, 2
  %s568 = scalar_lea.vmem %s0, 16
  %v569 = vld [vmem:[%s568] sm:$0xff]
  %571 = vrot.lane.b32.xlu0 %v439, 32
  %v572 = vpop.permute.xlu0 %571
  %v573 = vsel %vm82, %v572, 0
  %575 = vmatprep.subr.mxu0 0.0
  %576 = vmatpush1.msra.mxu0 %v68
  %577 = vmatprep.subr.mxu0 0.0
  %578 = vmatpush1.msra.mxu0 %v69
  %579 = vmatprep.subr.mxu0 0.0
  %580 = vmatpush1.msra.mxu0 %v70
  %581 = vmatprep.subr.mxu0 0.0
  %582 = vmatpush1.msra.mxu0 %v71
  %583 = vmatprep.subr.mxu0 0.0
  %584 = vmatpush1.msra.mxu0 0.0
  %585 = vmatprep.subr.mxu0 0.0
  %586 = vmatpush1.msra.mxu0 0.0
  %587 = vmatprep.subr.mxu0 0.0
  %588 = vmatpush1.msra.mxu0 0.0
  %589 = vmatprep.subr.mxu0 0.0
  %590 = vmatpush1.msra.mxu0 0.0
  %591 = vmatprep.subr.mxu0 0.0
  %592 = vmatpush1.msra.mxu0 0.0
  %593 = vmatprep.subr.mxu0 0.0
  %594 = vmatpush1.msra.mxu0 0.0
  %595 = vmatprep.subr.mxu0 0.0
  %596 = vmatpush1.msra.mxu0 0.0
  %597 = vmatprep.subr.mxu0 0.0
  %598 = vmatpush1.msra.mxu0 0.0
  %599 = vmatprep.subr.mxu0 0.0
  %600 = vmatpush1.msra.mxu0 0.0
  %601 = vmatprep.subr.mxu0 0.0
  %602 = vmatpush1.msra.mxu0 0.0
  %603 = vmatprep.subr.mxu0 0.0
  %604 = vmatpush1.msra.mxu0 0.0
  %605 = vmatprep.subr.mxu0 0.0
  %606 = vmatpush1.msra.mxu0 0.0
  %607 = vmatprep.subr.mxu0 0.0
  %608 = vmatpush1.msra.mxu0 0.0
  %609 = vmatprep.subr.mxu0 0.0
  %610 = vmatpush1.msra.mxu0 0.0
  %611 = vmatprep.subr.mxu0 0.0
  %612 = vmatpush1.msra.mxu0 0.0
  %613 = vmatprep.subr.mxu0 0.0
  %614 = vmatpush1.msra.mxu0 0.0
  %615 = vmatprep.subr.mxu0 0.0
  %616 = vmatpush1.msra.mxu0 0.0
  %617 = vmatprep.subr.mxu0 0.0
  %618 = vmatpush1.msra.mxu0 0.0
  %619 = vmatprep.subr.mxu0 0.0
  %620 = vmatpush1.msra.mxu0 0.0
  %621 = vmatprep.subr.mxu0 0.0
  %622 = vmatpush1.msra.mxu0 0.0
  %623 = vmatprep.subr.mxu0 0.0
  %624 = vmatpush1.msra.mxu0 0.0
  %625 = vmatprep.subr.mxu0 0.0
  %626 = vmatpush1.msra.mxu0 0.0
  %627 = vmatprep.subr.mxu0 0.0
  %628 = vmatpush1.msra.mxu0 0.0
  %629 = vmatprep.subr.mxu0 0.0
  %630 = vmatpush1.msra.mxu0 0.0
  %631 = vmatprep.subr.mxu0 0.0
  %632 = vmatpush1.msra.mxu0 0.0
  %633 = vmatprep.subr.mxu0 0.0
  %634 = vmatpush1.msra.mxu0 0.0
  %635 = vmatprep.subr.mxu0 0.0
  %636 = vmatpush1.msra.mxu0 0.0
  %637 = vmatprep.subr.mxu0 0.0
  %638 = vmatpush1.msra.mxu0 0.0
  %639 = vmatprep.mubr.f32.mxu0 0.0
  %640 = vmatmul.mubr.f32.gmra.mrb[0].mxu0 %v573
  %v641 = vpop.f32.mrb[0].mxu0
  %v642 = vadd.f32 0.0, %v641
  %v643 = vpop.f32.mrb[0].mxu0
  %644 = vdwg.mxu0
  %v645 = vadd.f32 %v569, %v642
  %v646 = vxor.u32 %v645, 2147483648
  %v647 = vmul.f32 %v646, 1.442695
  %v648 = vpow.pop %v647
  %v649 = vadd.f32 %v648, 1.0
  %v650 = vrcp.pop %v649
  %v651 = vmul.f32 1.0, %v650
  %v652 = vtanh.pop %v645
  %v653 = vmul.f32 %v651, %v440
  %655 = vrot.lane.b32.xlu0 %v652, 64
  %v656 = vpop.permute.xlu0 %655
  %v658 = vmul.f32 %v651, %v656
  %660 = vrot.lane.b32.xlu0 %v658, 32
  %v661 = vpop.permute.xlu0 %660
  %v663 = vadd.f32 %v653, %v661
  %v664 = vtanh.pop %v663
  %666 = vrot.lane.b32.xlu0 %v664, 64
  %v667 = vpop.permute.xlu0 %666
  %v669 = vmul.f32 %v651, %v667
  %v670 = vstv %s567
  %vm671 = vcmp.lt.s32.totalorder %v670, %v67
  %v672 = vsel %vm671, 1, 0
  %673 = vset.pattern.permute.xlu0 0
  %674 = vperm.xlu0 %673, %v672
  %v675 = vpop.permute.xlu0 %674
  %vm676 = vcmp.eq.s32.totalorder %v675, 1
  %v677 = vsel %vm676, %v669, %v439
  %v678 = vsel %vm676, %v663, %v440
  %v679 = vsel %vm676, %v669, 0.0
  %681 = vrot.lane.b32.xlu0 %v679, 32
  %v682 = vpop.permute.xlu0 %681
  %s684 = scalar_lea.vmem %s5, 16
  %685 = vst.msk [vmem:[%s684] sm:$0xff] %vm82, %v682
  %s686 = sadd.s32 %s204, 5
  %s687 = scalar_lea.vmem %s47, 40
  %v688 = vld [vmem:[%s687] sm:$0xff]
  %690 = vrot.lane.b32.xlu0 %v558, 32
  %v691 = vpop.permute.xlu0 %690
  %v692 = vsel %vm82, %v691, 0
  %694 = vmatprep.subr.mxu0 0.0
  %695 = vmatpush1.msra.mxu0 %v72
  %696 = vmatprep.subr.mxu0 0.0
  %697 = vmatpush1.msra.mxu0 %v73
  %698 = vmatprep.subr.mxu0 0.0
  %699 = vmatpush1.msra.mxu0 %v74
  %700 = vmatprep.subr.mxu0 0.0
  %701 = vmatpush1.msra.mxu0 %v75
  %702 = vmatprep.subr.mxu0 0.0
  %703 = vmatpush1.msra.mxu0 0.0
  %704 = vmatprep.subr.mxu0 0.0
  %705 = vmatpush1.msra.mxu0 0.0
  %706 = vmatprep.subr.mxu0 0.0
  %707 = vmatpush1.msra.mxu0 0.0
  %708 = vmatprep.subr.mxu0 0.0
  %709 = vmatpush1.msra.mxu0 0.0
  %710 = vmatprep.subr.mxu0 0.0
  %711 = vmatpush1.msra.mxu0 0.0
  %712 = vmatprep.subr.mxu0 0.0
  %713 = vmatpush1.msra.mxu0 0.0
  %714 = vmatprep.subr.mxu0 0.0
  %715 = vmatpush1.msra.mxu0 0.0
  %716 = vmatprep.subr.mxu0 0.0
  %717 = vmatpush1.msra.mxu0 0.0
  %718 = vmatprep.subr.mxu0 0.0
  %719 = vmatpush1.msra.mxu0 0.0
  %720 = vmatprep.subr.mxu0 0.0
  %721 = vmatpush1.msra.mxu0 0.0
  %722 = vmatprep.subr.mxu0 0.0
  %723 = vmatpush1.msra.mxu0 0.0
  %724 = vmatprep.subr.mxu0 0.0
  %725 = vmatpush1.msra.mxu0 0.0
  %726 = vmatprep.subr.mxu0 0.0
  %727 = vmatpush1.msra.mxu0 0.0
  %728 = vmatprep.subr.mxu0 0.0
  %729 = vmatpush1.msra.mxu0 0.0
  %730 = vmatprep.subr.mxu0 0.0
  %731 = vmatpush1.msra.mxu0 0.0
  %732 = vmatprep.subr.mxu0 0.0
  %733 = vmatpush1.msra.mxu0 0.0
  %734 = vmatprep.subr.mxu0 0.0
  %735 = vmatpush1.msra.mxu0 0.0
  %736 = vmatprep.subr.mxu0 0.0
  %737 = vmatpush1.msra.mxu0 0.0
  %738 = vmatprep.subr.mxu0 0.0
  %739 = vmatpush1.msra.mxu0 0.0
  %740 = vmatprep.subr.mxu0 0.0
  %741 = vmatpush1.msra.mxu0 0.0
  %742 = vmatprep.subr.mxu0 0.0
  %743 = vmatpush1.msra.mxu0 0.0
  %744 = vmatprep.subr.mxu0 0.0
  %745 = vmatpush1.msra.mxu0 0.0
  %746 = vmatprep.subr.mxu0 0.0
  %747 = vmatpush1.msra.mxu0 0.0
  %748 = vmatprep.subr.mxu0 0.0
  %749 = vmatpush1.msra.mxu0 0.0
  %750 = vmatprep.subr.mxu0 0.0
  %751 = vmatpush1.msra.mxu0 0.0
  %752 = vmatprep.subr.mxu0 0.0
  %753 = vmatpush1.msra.mxu0 0.0
  %754 = vmatprep.subr.mxu0 0.0
  %755 = vmatpush1.msra.mxu0 0.0
  %756 = vmatprep.subr.mxu0 0.0
  %757 = vmatpush1.msra.mxu0 0.0
  %758 = vmatprep.mubr.f32.mxu0 0.0
  %759 = vmatmul.mubr.f32.gmra.mrb[0].mxu0 %v692
  %v760 = vpop.f32.mrb[0].mxu0
  %v761 = vadd.f32 0.0, %v760
  %v762 = vpop.f32.mrb[0].mxu0
  %763 = vdwg.mxu0
  %v764 = vadd.f32 %v688, %v761
  %v765 = vxor.u32 %v764, 2147483648
  %v766 = vmul.f32 %v765, 1.442695
  %v767 = vpow.pop %v766
  %v768 = vadd.f32 %v767, 1.0
  %v769 = vrcp.pop %v768
  %v770 = vmul.f32 1.0, %v769
  %v771 = vtanh.pop %v764
  %v772 = vmul.f32 %v770, %v559
  %774 = vrot.lane.b32.xlu0 %v771, 64
  %v775 = vpop.permute.xlu0 %774
  %v777 = vmul.f32 %v770, %v775
  %779 = vrot.lane.b32.xlu0 %v777, 32
  %v780 = vpop.permute.xlu0 %779
  %v782 = vadd.f32 %v772, %v780
  %v783 = vtanh.pop %v782
  %785 = vrot.lane.b32.xlu0 %v783, 64
  %v786 = vpop.permute.xlu0 %785
  %v788 = vmul.f32 %v770, %v786
  %v789 = vstv %s686
  %vm790 = vcmp.lt.s32.totalorder %v789, %v67
  %v791 = vsel %vm790, 1, 0
  %792 = vset.pattern.permute.xlu0 0
  %793 = vperm.xlu0 %792, %v791
  %v794 = vpop.permute.xlu0 %793
  %vm795 = vcmp.eq.s32.totalorder %v794, 1
  %v796 = vsel %vm795, %v788, %v558
  %v797 = vsel %vm795, %v782, %v559
  %v798 = vsel %vm795, %v788, 0.0
  %800 = vrot.lane.b32.xlu0 %v798, 32
  %v801 = vpop.permute.xlu0 %800
  %s803 = scalar_lea.vmem %s55, 40
  %804 = vst.msk [vmem:[%s803] sm:$0xff] %vm82, %v801
  %s805 = sadd.s32 %s80, 3
  %s806 = scalar_lea.vmem %s0, 24
  %v807 = vld [vmem:[%s806] sm:$0xff]
  %809 = vrot.lane.b32.xlu0 %v677, 32
  %v810 = vpop.permute.xlu0 %809
  %v811 = vsel %vm82, %v810, 0
  %813 = vmatprep.subr.mxu0 0.0
  %814 = vmatpush1.msra.mxu0 %v68
  %815 = vmatprep.subr.mxu0 0.0
  %816 = vmatpush1.msra.mxu0 %v69
  %817 = vmatprep.subr.mxu0 0.0
  %818 = vmatpush1.msra.mxu0 %v70
  %819 = vmatprep.subr.mxu0 0.0
  %820 = vmatpush1.msra.mxu0 %v71
  %821 = vmatprep.subr.mxu0 0.0
  %822 = vmatpush1.msra.mxu0 0.0
  %823 = vmatprep.subr.mxu0 0.0
  %824 = vmatpush1.msra.mxu0 0.0
  %825 = vmatprep.subr.mxu0 0.0
  %826 = vmatpush1.msra.mxu0 0.0
  %827 = vmatprep.subr.mxu0 0.0
  %828 = vmatpush1.msra.mxu0 0.0
  %829 = vmatprep.subr.mxu0 0.0
  %830 = vmatpush1.msra.mxu0 0.0
  %831 = vmatprep.subr.mxu0 0.0
  %832 = vmatpush1.msra.mxu0 0.0
  %833 = vmatprep.subr.mxu0 0.0
  %834 = vmatpush1.msra.mxu0 0.0
  %835 = vmatprep.subr.mxu0 0.0
  %836 = vmatpush1.msra.mxu0 0.0
  %837 = vmatprep.subr.mxu0 0.0
  %838 = vmatpush1.msra.mxu0 0.0
  %839 = vmatprep.subr.mxu0 0.0
  %840 = vmatpush1.msra.mxu0 0.0
  %841 = vmatprep.subr.mxu0 0.0
  %842 = vmatpush1.msra.mxu0 0.0
  %843 = vmatprep.subr.mxu0 0.0
  %844 = vmatpush1.msra.mxu0 0.0
  %845 = vmatprep.subr.mxu0 0.0
  %846 = vmatpush1.msra.mxu0 0.0
  %847 = vmatprep.subr.mxu0 0.0
  %848 = vmatpush1.msra.mxu0 0.0
  %849 = vmatprep.subr.mxu0 0.0
  %850 = vmatpush1.msra.mxu0 0.0
  %851 = vmatprep.subr.mxu0 0.0
  %852 = vmatpush1.msra.mxu0 0.0
  %853 = vmatprep.subr.mxu0 0.0
  %854 = vmatpush1.msra.mxu0 0.0
  %855 = vmatprep.subr.mxu0 0.0
  %856 = vmatpush1.msra.mxu0 0.0
  %857 = vmatprep.subr.mxu0 0.0
  %858 = vmatpush1.msra.mxu0 0.0
  %859 = vmatprep.subr.mxu0 0.0
  %860 = vmatpush1.msra.mxu0 0.0
  %861 = vmatprep.subr.mxu0 0.0
  %862 = vmatpush1.msra.mxu0 0.0
  %863 = vmatprep.subr.mxu0 0.0
  %864 = vmatpush1.msra.mxu0 0.0
  %865 = vmatprep.subr.mxu0 0.0
  %866 = vmatpush1.msra.mxu0 0.0
  %867 = vmatprep.subr.mxu0 0.0
  %868 = vmatpush1.msra.mxu0 0.0
  %869 = vmatprep.subr.mxu0 0.0
  %870 = vmatpush1.msra.mxu0 0.0
  %871 = vmatprep.subr.mxu0 0.0
  %872 = vmatpush1.msra.mxu0 0.0
  %873 = vmatprep.subr.mxu0 0.0
  %874 = vmatpush1.msra.mxu0 0.0
  %875 = vmatprep.subr.mxu0 0.0
  %876 = vmatpush1.msra.mxu0 0.0
  %877 = vmatprep.mubr.f32.mxu0 0.0
  %878 = vmatmul.mubr.f32.gmra.mrb[0].mxu0 %v811
  %v879 = vpop.f32.mrb[0].mxu0
  %v880 = vadd.f32 0.0, %v879
  %v881 = vpop.f32.mrb[0].mxu0
  %882 = vdwg.mxu0
  %v883 = vadd.f32 %v807, %v880
  %v884 = vxor.u32 %v883, 2147483648
  %v885 = vmul.f32 %v884, 1.442695
  %v886 = vpow.pop %v885
  %v887 = vadd.f32 %v886, 1.0
  %v888 = vrcp.pop %v887
  %v889 = vmul.f32 1.0, %v888
  %v890 = vtanh.pop %v883
  %v891 = vmul.f32 %v889, %v678
  %893 = vrot.lane.b32.xlu0 %v890, 64
  %v894 = vpop.permute.xlu0 %893
  %v896 = vmul.f32 %v889, %v894
  %898 = vrot.lane.b32.xlu0 %v896, 32
  %v899 = vpop.permute.xlu0 %898
  %v901 = vadd.f32 %v891, %v899
  %v902 = vtanh.pop %v901
  %904 = vrot.lane.b32.xlu0 %v902, 64
  %v905 = vpop.permute.xlu0 %904
  %v907 = vmul.f32 %v889, %v905
  %v908 = vstv %s805
  %vm909 = vcmp.lt.s32.totalorder %v908, %v67
  %v910 = vsel %vm909, 1, 0
  %911 = vset.pattern.permute.xlu0 0
  %912 = vperm.xlu0 %911, %v910
  %v913 = vpop.permute.xlu0 %912
  %vm914 = vcmp.eq.s32.totalorder %v913, 1
  %v915 = vsel %vm914, %v907, %v677
  %v916 = vsel %vm914, %v901, %v678
  %v917 = vsel %vm914, %v907, 0.0
  %919 = vrot.lane.b32.xlu0 %v917, 32
  %v920 = vpop.permute.xlu0 %919
  %s922 = scalar_lea.vmem %s5, 24
  %923 = vst.msk [vmem:[%s922] sm:$0xff] %vm82, %v920
  %s924 = sadd.s32 %s204, 4
  %s925 = scalar_lea.vmem %s47, 32
  %v926 = vld [vmem:[%s925] sm:$0xff]
  %928 = vrot.lane.b32.xlu0 %v796, 32
  %v929 = vpop.permute.xlu0 %928
  %v930 = vsel %vm82, %v929, 0
  %932 = vmatprep.subr.mxu0 0.0
  %933 = vmatpush1.msra.mxu0 %v72
  %934 = vmatprep.subr.mxu0 0.0
  %935 = vmatpush1.msra.mxu0 %v73
  %936 = vmatprep.subr.mxu0 0.0
  %937 = vmatpush1.msra.mxu0 %v74
  %938 = vmatprep.subr.mxu0 0.0
  %939 = vmatpush1.msra.mxu0 %v75
  %940 = vmatprep.subr.mxu0 0.0
  %941 = vmatpush1.msra.mxu0 0.0
  %942 = vmatprep.subr.mxu0 0.0
  %943 = vmatpush1.msra.mxu0 0.0
  %944 = vmatprep.subr.mxu0 0.0
  %945 = vmatpush1.msra.mxu0 0.0
  %946 = vmatprep.subr.mxu0 0.0
  %947 = vmatpush1.msra.mxu0 0.0
  %948 = vmatprep.subr.mxu0 0.0
  %949 = vmatpush1.msra.mxu0 0.0
  %950 = vmatprep.subr.mxu0 0.0
  %951 = vmatpush1.msra.mxu0 0.0
  %952 = vmatprep.subr.mxu0 0.0
  %953 = vmatpush1.msra.mxu0 0.0
  %954 = vmatprep.subr.mxu0 0.0
  %955 = vmatpush1.msra.mxu0 0.0
  %956 = vmatprep.subr.mxu0 0.0
  %957 = vmatpush1.msra.mxu0 0.0
  %958 = vmatprep.subr.mxu0 0.0
  %959 = vmatpush1.msra.mxu0 0.0
  %960 = vmatprep.subr.mxu0 0.0
  %961 = vmatpush1.msra.mxu0 0.0
  %962 = vmatprep.subr.mxu0 0.0
  %963 = vmatpush1.msra.mxu0 0.0
  %964 = vmatprep.subr.mxu0 0.0
  %965 = vmatpush1.msra.mxu0 0.0
  %966 = vmatprep.subr.mxu0 0.0
  %967 = vmatpush1.msra.mxu0 0.0
  %968 = vmatprep.subr.mxu0 0.0
  %969 = vmatpush1.msra.mxu0 0.0
  %970 = vmatprep.subr.mxu0 0.0
  %971 = vmatpush1.msra.mxu0 0.0
  %972 = vmatprep.subr.mxu0 0.0
  %973 = vmatpush1.msra.mxu0 0.0
  %974 = vmatprep.subr.mxu0 0.0
  %975 = vmatpush1.msra.mxu0 0.0
  %976 = vmatprep.subr.mxu0 0.0
  %977 = vmatpush1.msra.mxu0 0.0
  %978 = vmatprep.subr.mxu0 0.0
  %979 = vmatpush1.msra.mxu0 0.0
  %980 = vmatprep.subr.mxu0 0.0
  %981 = vmatpush1.msra.mxu0 0.0
  %982 = vmatprep.subr.mxu0 0.0
  %983 = vmatpush1.msra.mxu0 0.0
  %984 = vmatprep.subr.mxu0 0.0
  %985 = vmatpush1.msra.mxu0 0.0
  %986 = vmatprep.subr.mxu0 0.0
  %987 = vmatpush1.msra.mxu0 0.0
  %988 = vmatprep.subr.mxu0 0.0
  %989 = vmatpush1.msra.mxu0 0.0
  %990 = vmatprep.subr.mxu0 0.0
  %991 = vmatpush1.msra.mxu0 0.0
  %992 = vmatprep.subr.mxu0 0.0
  %993 = vmatpush1.msra.mxu0 0.0
  %994 = vmatprep.subr.mxu0 0.0
  %995 = vmatpush1.msra.mxu0 0.0
  %996 = vmatprep.mubr.f32.mxu0 0.0
  %997 = vmatmul.mubr.f32.gmra.mrb[0].mxu0 %v930
  %v998 = vpop.f32.mrb[0].mxu0
  %v999 = vadd.f32 0.0, %v998
  %v1000 = vpop.f32.mrb[0].mxu0
  %1001 = vdwg.mxu0
  %v1002 = vadd.f32 %v926, %v999
  %v1003 = vxor.u32 %v1002, 2147483648
  %v1004 = vmul.f32 %v1003, 1.442695
  %v1005 = vpow.pop %v1004
  %v1006 = vadd.f32 %v1005, 1.0
  %v1007 = vrcp.pop %v1006
  %v1008 = vmul.f32 1.0, %v1007
  %v1009 = vtanh.pop %v1002
  %v1010 = vmul.f32 %v1008, %v797
  %1012 = vrot.lane.b32.xlu0 %v1009, 64
  %v1013 = vpop.permute.xlu0 %1012
  %v1015 = vmul.f32 %v1008, %v1013
  %1017 = vrot.lane.b32.xlu0 %v1015, 32
  %v1018 = vpop.permute.xlu0 %1017
  %v1020 = vadd.f32 %v1010, %v1018
  %v1021 = vtanh.pop %v1020
  %1023 = vrot.lane.b32.xlu0 %v1021, 64
  %v1024 = vpop.permute.xlu0 %1023
  %v1026 = vmul.f32 %v1008, %v1024
  %v1027 = vstv %s924
  %vm1028 = vcmp.lt.s32.totalorder %v1027, %v67
  %v1029 = vsel %vm1028, 1, 0
  %1030 = vset.pattern.permute.xlu0 0
  %1031 = vperm.xlu0 %1030, %v1029
  %v1032 = vpop.permute.xlu0 %1031
  %vm1033 = vcmp.eq.s32.totalorder %v1032, 1
  %v1034 = vsel %vm1033, %v1026, %v796
  %v1035 = vsel %vm1033, %v1020, %v797
  %v1036 = vsel %vm1033, %v1026, 0.0
  %1038 = vrot.lane.b32.xlu0 %v1036, 32
  %v1039 = vpop.permute.xlu0 %1038
  %s1041 = scalar_lea.vmem %s55, 32
  %1042 = vst.msk [vmem:[%s1041] sm:$0xff] %vm82, %v1039
  %s1043 = sadd.s32 %s80, 4
  %s1044 = scalar_lea.vmem %s0, 32
  %v1045 = vld [vmem:[%s1044] sm:$0xff]
  %1047 = vrot.lane.b32.xlu0 %v915, 32
  %v1048 = vpop.permute.xlu0 %1047
  %v1049 = vsel %vm82, %v1048, 0
  %1051 = vmatprep.subr.mxu0 0.0
  %1052 = vmatpush1.msra.mxu0 %v68
  %1053 = vmatprep.subr.mxu0 0.0
  %1054 = vmatpush1.msra.mxu0 %v69
  %1055 = vmatprep.subr.mxu0 0.0
  %1056 = vmatpush1.msra.mxu0 %v70
  %1057 = vmatprep.subr.mxu0 0.0
  %1058 = vmatpush1.msra.mxu0 %v71
  %1059 = vmatprep.subr.mxu0 0.0
  %1060 = vmatpush1.msra.mxu0 0.0
  %1061 = vmatprep.subr.mxu0 0.0
  %1062 = vmatpush1.msra.mxu0 0.0
  %1063 = vmatprep.subr.mxu0 0.0
  %1064 = vmatpush1.msra.mxu0 0.0
  %1065 = vmatprep.subr.mxu0 0.0
  %1066 = vmatpush1.msra.mxu0 0.0
  %1067 = vmatprep.subr.mxu0 0.0
  %1068 = vmatpush1.msra.mxu0 0.0
  %1069 = vmatprep.subr.mxu0 0.0
  %1070 = vmatpush1.msra.mxu0 0.0
  %1071 = vmatprep.subr.mxu0 0.0
  %1072 = vmatpush1.msra.mxu0 0.0
  %1073 = vmatprep.subr.mxu0 0.0
  %1074 = vmatpush1.msra.mxu0 0.0
  %1075 = vmatprep.subr.mxu0 0.0
  %1076 = vmatpush1.msra.mxu0 0.0
  %1077 = vmatprep.subr.mxu0 0.0
  %1078 = vmatpush1.msra.mxu0 0.0
  %1079 = vmatprep.subr.mxu0 0.0
  %1080 = vmatpush1.msra.mxu0 0.0
  %1081 = vmatprep.subr.mxu0 0.0
  %1082 = vmatpush1.msra.mxu0 0.0
  %1083 = vmatprep.subr.mxu0 0.0
  %1084 = vmatpush1.msra.mxu0 0.0
  %1085 = vmatprep.subr.mxu0 0.0
  %1086 = vmatpush1.msra.mxu0 0.0
  %1087 = vmatprep.subr.mxu0 0.0
  %1088 = vmatpush1.msra.mxu0 0.0
  %1089 = vmatprep.subr.mxu0 0.0
  %1090 = vmatpush1.msra.mxu0 0.0
  %1091 = vmatprep.subr.mxu0 0.0
  %1092 = vmatpush1.msra.mxu0 0.0
  %1093 = vmatprep.subr.mxu0 0.0
  %1094 = vmatpush1.msra.mxu0 0.0
  %1095 = vmatprep.subr.mxu0 0.0
  %1096 = vmatpush1.msra.mxu0 0.0
  %1097 = vmatprep.subr.mxu0 0.0
  %1098 = vmatpush1.msra.mxu0 0.0
  %1099 = vmatprep.subr.mxu0 0.0
  %1100 = vmatpush1.msra.mxu0 0.0
  %1101 = vmatprep.subr.mxu0 0.0
  %1102 = vmatpush1.msra.mxu0 0.0
  %1103 = vmatprep.subr.mxu0 0.0
  %1104 = vmatpush1.msra.mxu0 0.0
  %1105 = vmatprep.subr.mxu0 0.0
  %1106 = vmatpush1.msra.mxu0 0.0
  %1107 = vmatprep.subr.mxu0 0.0
  %1108 = vmatpush1.msra.mxu0 0.0
  %1109 = vmatprep.subr.mxu0 0.0
  %1110 = vmatpush1.msra.mxu0 0.0
  %1111 = vmatprep.subr.mxu0 0.0
  %1112 = vmatpush1.msra.mxu0 0.0
  %1113 = vmatprep.subr.mxu0 0.0
  %1114 = vmatpush1.msra.mxu0 0.0
  %1115 = vmatprep.mubr.f32.mxu0 0.0
  %1116 = vmatmul.mubr.f32.gmra.mrb[0].mxu0 %v1049
  %v1117 = vpop.f32.mrb[0].mxu0
  %v1118 = vadd.f32 0.0, %v1117
  %v1119 = vpop.f32.mrb[0].mxu0
  %1120 = vdwg.mxu0
  %v1121 = vadd.f32 %v1045, %v1118
  %v1122 = vxor.u32 %v1121, 2147483648
  %v1123 = vmul.f32 %v1122, 1.442695
  %v1124 = vpow.pop %v1123
  %v1125 = vadd.f32 %v1124, 1.0
  %v1126 = vrcp.pop %v1125
  %v1127 = vmul.f32 1.0, %v1126
  %v1128 = vtanh.pop %v1121
  %v1129 = vmul.f32 %v1127, %v916
  %1131 = vrot.lane.b32.xlu0 %v1128, 64
  %v1132 = vpop.permute.xlu0 %1131
  %v1134 = vmul.f32 %v1127, %v1132
  %1136 = vrot.lane.b32.xlu0 %v1134, 32
  %v1137 = vpop.permute.xlu0 %1136
  %v1139 = vadd.f32 %v1129, %v1137
  %v1140 = vtanh.pop %v1139
  %1142 = vrot.lane.b32.xlu0 %v1140, 64
  %v1143 = vpop.permute.xlu0 %1142
  %v1145 = vmul.f32 %v1127, %v1143
  %v1146 = vstv %s1043
  %vm1147 = vcmp.lt.s32.totalorder %v1146, %v67
  %v1148 = vsel %vm1147, 1, 0
  %1149 = vset.pattern.permute.xlu0 0
  %1150 = vperm.xlu0 %1149, %v1148
  %v1151 = vpop.permute.xlu0 %1150
  %vm1152 = vcmp.eq.s32.totalorder %v1151, 1
  %v1153 = vsel %vm1152, %v1145, %v915
  %v1154 = vsel %vm1152, %v1139, %v916
  %v1155 = vsel %vm1152, %v1145, 0.0
  %1157 = vrot.lane.b32.xlu0 %v1155, 32
  %v1158 = vpop.permute.xlu0 %1157
  %s1160 = scalar_lea.vmem %s5, 32
  %1161 = vst.msk [vmem:[%s1160] sm:$0xff] %vm82, %v1158
  %s1162 = sadd.s32 %s204, 3
  %s1163 = scalar_lea.vmem %s47, 24
  %v1164 = vld [vmem:[%s1163] sm:$0xff]
  %1166 = vrot.lane.b32.xlu0 %v1034, 32
  %v1167 = vpop.permute.xlu0 %1166
  %v1168 = vsel %vm82, %v1167, 0
  %1170 = vmatprep.subr.mxu0 0.0
  %1171 = vmatpush1.msra.mxu0 %v72
  %1172 = vmatprep.subr.mxu0 0.0
  %1173 = vmatpush1.msra.mxu0 %v73
  %1174 = vmatprep.subr.mxu0 0.0
  %1175 = vmatpush1.msra.mxu0 %v74
  %1176 = vmatprep.subr.mxu0 0.0
  %1177 = vmatpush1.msra.mxu0 %v75
  %1178 = vmatprep.subr.mxu0 0.0
  %1179 = vmatpush1.msra.mxu0 0.0
  %1180 = vmatprep.subr.mxu0 0.0
  %1181 = vmatpush1.msra.mxu0 0.0
  %1182 = vmatprep.subr.mxu0 0.0
  %1183 = vmatpush1.msra.mxu0 0.0
  %1184 = vmatprep.subr.mxu0 0.0
  %1185 = vmatpush1.msra.mxu0 0.0
  %1186 = vmatprep.subr.mxu0 0.0
  %1187 = vmatpush1.msra.mxu0 0.0
  %1188 = vmatprep.subr.mxu0 0.0
  %1189 = vmatpush1.msra.mxu0 0.0
  %1190 = vmatprep.subr.mxu0 0.0
  %1191 = vmatpush1.msra.mxu0 0.0
  %1192 = vmatprep.subr.mxu0 0.0
  %1193 = vmatpush1.msra.mxu0 0.0
  %1194 = vmatprep.subr.mxu0 0.0
  %1195 = vmatpush1.msra.mxu0 0.0
  %1196 = vmatprep.subr.mxu0 0.0
  %1197 = vmatpush1.msra.mxu0 0.0
  %1198 = vmatprep.subr.mxu0 0.0
  %1199 = vmatpush1.msra.mxu0 0.0
  %1200 = vmatprep.subr.mxu0 0.0
  %1201 = vmatpush1.msra.mxu0 0.0
  %1202 = vmatprep.subr.mxu0 0.0
  %1203 = vmatpush1.msra.mxu0 0.0
  %1204 = vmatprep.subr.mxu0 0.0
  %1205 = vmatpush1.msra.mxu0 0.0
  %1206 = vmatprep.subr.mxu0 0.0
  %1207 = vmatpush1.msra.mxu0 0.0
  %1208 = vmatprep.subr.mxu0 0.0
  %1209 = vmatpush1.msra.mxu0 0.0
  %1210 = vmatprep.subr.mxu0 0.0
  %1211 = vmatpush1.msra.mxu0 0.0
  %1212 = vmatprep.subr.mxu0 0.0
  %1213 = vmatpush1.msra.mxu0 0.0
  %1214 = vmatprep.subr.mxu0 0.0
  %1215 = vmatpush1.msra.mxu0 0.0
  %1216 = vmatprep.subr.mxu0 0.0
  %1217 = vmatpush1.msra.mxu0 0.0
  %1218 = vmatprep.subr.mxu0 0.0
  %1219 = vmatpush1.msra.mxu0 0.0
  %1220 = vmatprep.subr.mxu0 0.0
  %1221 = vmatpush1.msra.mxu0 0.0
  %1222 = vmatprep.subr.mxu0 0.0
  %1223 = vmatpush1.msra.mxu0 0.0
  %1224 = vmatprep.subr.mxu0 0.0
  %1225 = vmatpush1.msra.mxu0 0.0
  %1226 = vmatprep.subr.mxu0 0.0
  %1227 = vmatpush1.msra.mxu0 0.0
  %1228 = vmatprep.subr.mxu0 0.0
  %1229 = vmatpush1.msra.mxu0 0.0
  %1230 = vmatprep.subr.mxu0 0.0
  %1231 = vmatpush1.msra.mxu0 0.0
  %1232 = vmatprep.subr.mxu0 0.0
  %1233 = vmatpush1.msra.mxu0 0.0
  %1234 = vmatprep.mubr.f32.mxu0 0.0
  %1235 = vmatmul.mubr.f32.gmra.mrb[0].mxu0 %v1168
  %v1236 = vpop.f32.mrb[0].mxu0
  %v1237 = vadd.f32 0.0, %v1236
  %v1238 = vpop.f32.mrb[0].mxu0
  %1239 = vdwg.mxu0
  %v1240 = vadd.f32 %v1164, %v1237
  %v1241 = vxor.u32 %v1240, 2147483648
  %v1242 = vmul.f32 %v1241, 1.442695
  %v1243 = vpow.pop %v1242
  %v1244 = vadd.f32 %v1243, 1.0
  %v1245 = vrcp.pop %v1244
  %v1246 = vmul.f32 1.0, %v1245
  %v1247 = vtanh.pop %v1240
  %v1248 = vmul.f32 %v1246, %v1035
  %1250 = vrot.lane.b32.xlu0 %v1247, 64
  %v1251 = vpop.permute.xlu0 %1250
  %v1253 = vmul.f32 %v1246, %v1251
  %1255 = vrot.lane.b32.xlu0 %v1253, 32
  %v1256 = vpop.permute.xlu0 %1255
  %v1258 = vadd.f32 %v1248, %v1256
  %v1259 = vtanh.pop %v1258
  %1261 = vrot.lane.b32.xlu0 %v1259, 64
  %v1262 = vpop.permute.xlu0 %1261
  %v1264 = vmul.f32 %v1246, %v1262
  %v1265 = vstv %s1162
  %vm1266 = vcmp.lt.s32.totalorder %v1265, %v67
  %v1267 = vsel %vm1266, 1, 0
  %1268 = vset.pattern.permute.xlu0 0
  %1269 = vperm.xlu0 %1268, %v1267
  %v1270 = vpop.permute.xlu0 %1269
  %vm1271 = vcmp.eq.s32.totalorder %v1270, 1
  %v1272 = vsel %vm1271, %v1264, %v1034
  %v1273 = vsel %vm1271, %v1258, %v1035
  %v1274 = vsel %vm1271, %v1264, 0.0
  %1276 = vrot.lane.b32.xlu0 %v1274, 32
  %v1277 = vpop.permute.xlu0 %1276
  %s1279 = scalar_lea.vmem %s55, 24
  %1280 = vst.msk [vmem:[%s1279] sm:$0xff] %vm82, %v1277
  %s1281 = sadd.s32 %s80, 5
  %s1282 = scalar_lea.vmem %s0, 40
  %v1283 = vld [vmem:[%s1282] sm:$0xff]
  %1285 = vrot.lane.b32.xlu0 %v1153, 32
  %v1286 = vpop.permute.xlu0 %1285
  %v1287 = vsel %vm82, %v1286, 0
  %1289 = vmatprep.subr.mxu0 0.0
  %1290 = vmatpush1.msra.mxu0 %v68
  %1291 = vmatprep.subr.mxu0 0.0
  %1292 = vmatpush1.msra.mxu0 %v69
  %1293 = vmatprep.subr.mxu0 0.0
  %1294 = vmatpush1.msra.mxu0 %v70
  %1295 = vmatprep.subr.mxu0 0.0
  %1296 = vmatpush1.msra.mxu0 %v71
  %1297 = vmatprep.subr.mxu0 0.0
  %1298 = vmatpush1.msra.mxu0 0.0
  %1299 = vmatprep.subr.mxu0 0.0
  %1300 = vmatpush1.msra.mxu0 0.0
  %1301 = vmatprep.subr.mxu0 0.0
  %1302 = vmatpush1.msra.mxu0 0.0
  %1303 = vmatprep.subr.mxu0 0.0
  %1304 = vmatpush1.msra.mxu0 0.0
  %1305 = vmatprep.subr.mxu0 0.0
  %1306 = vmatpush1.msra.mxu0 0.0
  %1307 = vmatprep.subr.mxu0 0.0
  %1308 = vmatpush1.msra.mxu0 0.0
  %1309 = vmatprep.subr.mxu0 0.0
  %1310 = vmatpush1.msra.mxu0 0.0
  %1311 = vmatprep.subr.mxu0 0.0
  %1312 = vmatpush1.msra.mxu0 0.0
  %1313 = vmatprep.subr.mxu0 0.0
  %1314 = vmatpush1.msra.mxu0 0.0
  %1315 = vmatprep.subr.mxu0 0.0
  %1316 = vmatpush1.msra.mxu0 0.0
  %1317 = vmatprep.subr.mxu0 0.0
  %1318 = vmatpush1.msra.mxu0 0.0
  %1319 = vmatprep.subr.mxu0 0.0
  %1320 = vmatpush1.msra.mxu0 0.0
  %1321 = vmatprep.subr.mxu0 0.0
  %1322 = vmatpush1.msra.mxu0 0.0
  %1323 = vmatprep.subr.mxu0 0.0
  %1324 = vmatpush1.msra.mxu0 0.0
  %1325 = vmatprep.subr.mxu0 0.0
  %1326 = vmatpush1.msra.mxu0 0.0
  %1327 = vmatprep.subr.mxu0 0.0
  %1328 = vmatpush1.msra.mxu0 0.0
  %1329 = vmatprep.subr.mxu0 0.0
  %1330 = vmatpush1.msra.mxu0 0.0
  %1331 = vmatprep.subr.mxu0 0.0
  %1332 = vmatpush1.msra.mxu0 0.0
  %1333 = vmatprep.subr.mxu0 0.0
  %1334 = vmatpush1.msra.mxu0 0.0
  %1335 = vmatprep.subr.mxu0 0.0
  %1336 = vmatpush1.msra.mxu0 0.0
  %1337 = vmatprep.subr.mxu0 0.0
  %1338 = vmatpush1.msra.mxu0 0.0
  %1339 = vmatprep.subr.mxu0 0.0
  %1340 = vmatpush1.msra.mxu0 0.0
  %1341 = vmatprep.subr.mxu0 0.0
  %1342 = vmatpush1.msra.mxu0 0.0
  %1343 = vmatprep.subr.mxu0 0.0
  %1344 = vmatpush1.msra.mxu0 0.0
  %1345 = vmatprep.subr.mxu0 0.0
  %1346 = vmatpush1.msra.mxu0 0.0
  %1347 = vmatprep.subr.mxu0 0.0
  %1348 = vmatpush1.msra.mxu0 0.0
  %1349 = vmatprep.subr.mxu0 0.0
  %1350 = vmatpush1.msra.mxu0 0.0
  %1351 = vmatprep.subr.mxu0 0.0
  %1352 = vmatpush1.msra.mxu0 0.0
  %1353 = vmatprep.mubr.f32.mxu0 0.0
  %1354 = vmatmul.mubr.f32.gmra.mrb[0].mxu0 %v1287
  %v1355 = vpop.f32.mrb[0].mxu0
  %v1356 = vadd.f32 0.0, %v1355
  %v1357 = vpop.f32.mrb[0].mxu0
  %1358 = vdwg.mxu0
  %v1359 = vadd.f32 %v1283, %v1356
  %v1360 = vxor.u32 %v1359, 2147483648
  %v1361 = vmul.f32 %v1360, 1.442695
  %v1362 = vpow.pop %v1361
  %v1363 = vadd.f32 %v1362, 1.0
  %v1364 = vrcp.pop %v1363
  %v1365 = vmul.f32 1.0, %v1364
  %v1366 = vtanh.pop %v1359
  %v1367 = vmul.f32 %v1365, %v1154
  %1369 = vrot.lane.b32.xlu0 %v1366, 64
  %v1370 = vpop.permute.xlu0 %1369
  %v1372 = vmul.f32 %v1365, %v1370
  %1374 = vrot.lane.b32.xlu0 %v1372, 32
  %v1375 = vpop.permute.xlu0 %1374
  %v1377 = vadd.f32 %v1367, %v1375
  %v1378 = vtanh.pop %v1377
  %1380 = vrot.lane.b32.xlu0 %v1378, 64
  %v1381 = vpop.permute.xlu0 %1380
  %v1383 = vmul.f32 %v1365, %v1381
  %v1384 = vstv %s1281
  %vm1385 = vcmp.lt.s32.totalorder %v1384, %v67
  %v1386 = vsel %vm1385, 1, 0
  %1387 = vset.pattern.permute.xlu0 0
  %1388 = vperm.xlu0 %1387, %v1386
  %v1389 = vpop.permute.xlu0 %1388
  %vm1390 = vcmp.eq.s32.totalorder %v1389, 1
  %v1391 = vsel %vm1390, %v1383, %v1153
  %v1392 = vsel %vm1390, %v1377, %v1154
  %v1393 = vsel %vm1390, %v1383, 0.0
  %1395 = vrot.lane.b32.xlu0 %v1393, 32
  %v1396 = vpop.permute.xlu0 %1395
  %s1398 = scalar_lea.vmem %s5, 40
  %1399 = vst.msk [vmem:[%s1398] sm:$0xff] %vm82, %v1396
  %s1400 = sadd.s32 %s204, 2
  %s1401 = scalar_lea.vmem %s47, 16
  %v1402 = vld [vmem:[%s1401] sm:$0xff]
  %1404 = vrot.lane.b32.xlu0 %v1272, 32
  %v1405 = vpop.permute.xlu0 %1404
  %v1406 = vsel %vm82, %v1405, 0
  %1408 = vmatprep.subr.mxu0 0.0
  %1409 = vmatpush1.msra.mxu0 %v72
  %1410 = vmatprep.subr.mxu0 0.0
  %1411 = vmatpush1.msra.mxu0 %v73
  %1412 = vmatprep.subr.mxu0 0.0
  %1413 = vmatpush1.msra.mxu0 %v74
  %1414 = vmatprep.subr.mxu0 0.0
  %1415 = vmatpush1.msra.mxu0 %v75
  %1416 = vmatprep.subr.mxu0 0.0
  %1417 = vmatpush1.msra.mxu0 0.0
  %1418 = vmatprep.subr.mxu0 0.0
  %1419 = vmatpush1.msra.mxu0 0.0
  %1420 = vmatprep.subr.mxu0 0.0
  %1421 = vmatpush1.msra.mxu0 0.0
  %1422 = vmatprep.subr.mxu0 0.0
  %1423 = vmatpush1.msra.mxu0 0.0
  %1424 = vmatprep.subr.mxu0 0.0
  %1425 = vmatpush1.msra.mxu0 0.0
  %1426 = vmatprep.subr.mxu0 0.0
  %1427 = vmatpush1.msra.mxu0 0.0
  %1428 = vmatprep.subr.mxu0 0.0
  %1429 = vmatpush1.msra.mxu0 0.0
  %1430 = vmatprep.subr.mxu0 0.0
  %1431 = vmatpush1.msra.mxu0 0.0
  %1432 = vmatprep.subr.mxu0 0.0
  %1433 = vmatpush1.msra.mxu0 0.0
  %1434 = vmatprep.subr.mxu0 0.0
  %1435 = vmatpush1.msra.mxu0 0.0
  %1436 = vmatprep.subr.mxu0 0.0
  %1437 = vmatpush1.msra.mxu0 0.0
  %1438 = vmatprep.subr.mxu0 0.0
  %1439 = vmatpush1.msra.mxu0 0.0
  %1440 = vmatprep.subr.mxu0 0.0
  %1441 = vmatpush1.msra.mxu0 0.0
  %1442 = vmatprep.subr.mxu0 0.0
  %1443 = vmatpush1.msra.mxu0 0.0
  %1444 = vmatprep.subr.mxu0 0.0
  %1445 = vmatpush1.msra.mxu0 0.0
  %1446 = vmatprep.subr.mxu0 0.0
  %1447 = vmatpush1.msra.mxu0 0.0
  %1448 = vmatprep.subr.mxu0 0.0
  %1449 = vmatpush1.msra.mxu0 0.0
  %1450 = vmatprep.subr.mxu0 0.0
  %1451 = vmatpush1.msra.mxu0 0.0
  %1452 = vmatprep.subr.mxu0 0.0
  %1453 = vmatpush1.msra.mxu0 0.0
  %1454 = vmatprep.subr.mxu0 0.0
  %1455 = vmatpush1.msra.mxu0 0.0
  %1456 = vmatprep.subr.mxu0 0.0
  %1457 = vmatpush1.msra.mxu0 0.0
  %1458 = vmatprep.subr.mxu0 0.0
  %1459 = vmatpush1.msra.mxu0 0.0
  %1460 = vmatprep.subr.mxu0 0.0
  %1461 = vmatpush1.msra.mxu0 0.0
  %1462 = vmatprep.subr.mxu0 0.0
  %1463 = vmatpush1.msra.mxu0 0.0
  %1464 = vmatprep.subr.mxu0 0.0
  %1465 = vmatpush1.msra.mxu0 0.0
  %1466 = vmatprep.subr.mxu0 0.0
  %1467 = vmatpush1.msra.mxu0 0.0
  %1468 = vmatprep.subr.mxu0 0.0
  %1469 = vmatpush1.msra.mxu0 0.0
  %1470 = vmatprep.subr.mxu0 0.0
  %1471 = vmatpush1.msra.mxu0 0.0
  %1472 = vmatprep.mubr.f32.mxu0 0.0
  %1473 = vmatmul.mubr.f32.gmra.mrb[0].mxu0 %v1406
  %v1474 = vpop.f32.mrb[0].mxu0
  %v1475 = vadd.f32 0.0, %v1474
  %v1476 = vpop.f32.mrb[0].mxu0
  %1477 = vdwg.mxu0
  %v1478 = vadd.f32 %v1402, %v1475
  %v1479 = vxor.u32 %v1478, 2147483648
  %v1480 = vmul.f32 %v1479, 1.442695
  %v1481 = vpow.pop %v1480
  %v1482 = vadd.f32 %v1481, 1.0
  %v1483 = vrcp.pop %v1482
  %v1484 = vmul.f32 1.0, %v1483
  %v1485 = vtanh.pop %v1478
  %v1486 = vmul.f32 %v1484, %v1273
  %1488 = vrot.lane.b32.xlu0 %v1485, 64
  %v1489 = vpop.permute.xlu0 %1488
  %v1491 = vmul.f32 %v1484, %v1489
  %1493 = vrot.lane.b32.xlu0 %v1491, 32
  %v1494 = vpop.permute.xlu0 %1493
  %v1496 = vadd.f32 %v1486, %v1494
  %v1497 = vtanh.pop %v1496
  %1499 = vrot.lane.b32.xlu0 %v1497, 64
  %v1500 = vpop.permute.xlu0 %1499
  %v1502 = vmul.f32 %v1484, %v1500
  %v1503 = vstv %s1400
  %vm1504 = vcmp.lt.s32.totalorder %v1503, %v67
  %v1505 = vsel %vm1504, 1, 0
  %1506 = vset.pattern.permute.xlu0 0
  %1507 = vperm.xlu0 %1506, %v1505
  %v1508 = vpop.permute.xlu0 %1507
  %vm1509 = vcmp.eq.s32.totalorder %v1508, 1
  %v1510 = vsel %vm1509, %v1502, %v1272
  %v1511 = vsel %vm1509, %v1496, %v1273
  %v1512 = vsel %vm1509, %v1502, 0.0
  %1514 = vrot.lane.b32.xlu0 %v1512, 32
  %v1515 = vpop.permute.xlu0 %1514
  %s1517 = scalar_lea.vmem %s55, 16
  %1518 = vst.msk [vmem:[%s1517] sm:$0xff] %vm82, %v1515
  %s1519 = sadd.s32 %s80, 6
  %s1520 = scalar_lea.vmem %s0, 48
  %v1521 = vld [vmem:[%s1520] sm:$0xff]
  %1523 = vrot.lane.b32.xlu0 %v1391, 32
  %v1524 = vpop.permute.xlu0 %1523
  %v1525 = vsel %vm82, %v1524, 0
  %1527 = vmatprep.subr.mxu0 0.0
  %1528 = vmatpush1.msra.mxu0 %v68
  %1529 = vmatprep.subr.mxu0 0.0
  %1530 = vmatpush1.msra.mxu0 %v69
  %1531 = vmatprep.subr.mxu0 0.0
  %1532 = vmatpush1.msra.mxu0 %v70
  %1533 = vmatprep.subr.mxu0 0.0
  %1534 = vmatpush1.msra.mxu0 %v71
  %1535 = vmatprep.subr.mxu0 0.0
  %1536 = vmatpush1.msra.mxu0 0.0
  %1537 = vmatprep.subr.mxu0 0.0
  %1538 = vmatpush1.msra.mxu0 0.0
  %1539 = vmatprep.subr.mxu0 0.0
  %1540 = vmatpush1.msra.mxu0 0.0
  %1541 = vmatprep.subr.mxu0 0.0
  %1542 = vmatpush1.msra.mxu0 0.0
  %1543 = vmatprep.subr.mxu0 0.0
  %1544 = vmatpush1.msra.mxu0 0.0
  %1545 = vmatprep.subr.mxu0 0.0
  %1546 = vmatpush1.msra.mxu0 0.0
  %1547 = vmatprep.subr.mxu0 0.0
  %1548 = vmatpush1.msra.mxu0 0.0
  %1549 = vmatprep.subr.mxu0 0.0
  %1550 = vmatpush1.msra.mxu0 0.0
  %1551 = vmatprep.subr.mxu0 0.0
  %1552 = vmatpush1.msra.mxu0 0.0
  %1553 = vmatprep.subr.mxu0 0.0
  %1554 = vmatpush1.msra.mxu0 0.0
  %1555 = vmatprep.subr.mxu0 0.0
  %1556 = vmatpush1.msra.mxu0 0.0
  %1557 = vmatprep.subr.mxu0 0.0
  %1558 = vmatpush1.msra.mxu0 0.0
  %1559 = vmatprep.subr.mxu0 0.0
  %1560 = vmatpush1.msra.mxu0 0.0
  %1561 = vmatprep.subr.mxu0 0.0
  %1562 = vmatpush1.msra.mxu0 0.0
  %1563 = vmatprep.subr.mxu0 0.0
  %1564 = vmatpush1.msra.mxu0 0.0
  %1565 = vmatprep.subr.mxu0 0.0
  %1566 = vmatpush1.msra.mxu0 0.0
  %1567 = vmatprep.subr.mxu0 0.0
  %1568 = vmatpush1.msra.mxu0 0.0
  %1569 = vmatprep.subr.mxu0 0.0
  %1570 = vmatpush1.msra.mxu0 0.0
  %1571 = vmatprep.subr.mxu0 0.0
  %1572 = vmatpush1.msra.mxu0 0.0
  %1573 = vmatprep.subr.mxu0 0.0
  %1574 = vmatpush1.msra.mxu0 0.0
  %1575 = vmatprep.subr.mxu0 0.0
  %1576 = vmatpush1.msra.mxu0 0.0
  %1577 = vmatprep.subr.mxu0 0.0
  %1578 = vmatpush1.msra.mxu0 0.0
  %1579 = vmatprep.subr.mxu0 0.0
  %1580 = vmatpush1.msra.mxu0 0.0
  %1581 = vmatprep.subr.mxu0 0.0
  %1582 = vmatpush1.msra.mxu0 0.0
  %1583 = vmatprep.subr.mxu0 0.0
  %1584 = vmatpush1.msra.mxu0 0.0
  %1585 = vmatprep.subr.mxu0 0.0
  %1586 = vmatpush1.msra.mxu0 0.0
  %1587 = vmatprep.subr.mxu0 0.0
  %1588 = vmatpush1.msra.mxu0 0.0
  %1589 = vmatprep.subr.mxu0 0.0
  %1590 = vmatpush1.msra.mxu0 0.0
  %1591 = vmatprep.mubr.f32.mxu0 0.0
  %1592 = vmatmul.mubr.f32.gmra.mrb[0].mxu0 %v1525
  %v1593 = vpop.f32.mrb[0].mxu0
  %v1594 = vadd.f32 0.0, %v1593
  %v1595 = vpop.f32.mrb[0].mxu0
  %1596 = vdwg.mxu0
  %v1597 = vadd.f32 %v1521, %v1594
  %v1598 = vxor.u32 %v1597, 2147483648
  %v1599 = vmul.f32 %v1598, 1.442695
  %v1600 = vpow.pop %v1599
  %v1601 = vadd.f32 %v1600, 1.0
  %v1602 = vrcp.pop %v1601
  %v1603 = vmul.f32 1.0, %v1602
  %v1604 = vtanh.pop %v1597
  %v1605 = vmul.f32 %v1603, %v1392
  %1607 = vrot.lane.b32.xlu0 %v1604, 64
  %v1608 = vpop.permute.xlu0 %1607
  %v1610 = vmul.f32 %v1603, %v1608
  %1612 = vrot.lane.b32.xlu0 %v1610, 32
  %v1613 = vpop.permute.xlu0 %1612
  %v1615 = vadd.f32 %v1605, %v1613
  %v1616 = vtanh.pop %v1615
  %1618 = vrot.lane.b32.xlu0 %v1616, 64
  %v1619 = vpop.permute.xlu0 %1618
  %v1621 = vmul.f32 %v1603, %v1619
  %v1622 = vstv %s1519
  %vm1623 = vcmp.lt.s32.totalorder %v1622, %v67
  %v1624 = vsel %vm1623, 1, 0
  %1625 = vset.pattern.permute.xlu0 0
  %1626 = vperm.xlu0 %1625, %v1624
  %v1627 = vpop.permute.xlu0 %1626
  %vm1628 = vcmp.eq.s32.totalorder %v1627, 1
  %v1629 = vsel %vm1628, %v1621, %v1391
  %v1630 = vsel %vm1628, %v1615, %v1392
  %v1631 = vsel %vm1628, %v1621, 0.0
  %1633 = vrot.lane.b32.xlu0 %v1631, 32
  %v1634 = vpop.permute.xlu0 %1633
  %s1636 = scalar_lea.vmem %s5, 48
  %1637 = vst.msk [vmem:[%s1636] sm:$0xff] %vm82, %v1634
  %s1638 = sadd.s32 %s204, 1
  %s1639 = scalar_lea.vmem %s47, 8
  %v1640 = vld [vmem:[%s1639] sm:$0xff]
  %1642 = vrot.lane.b32.xlu0 %v1510, 32
  %v1643 = vpop.permute.xlu0 %1642
  %v1644 = vsel %vm82, %v1643, 0
  %1646 = vmatprep.subr.mxu0 0.0
  %1647 = vmatpush1.msra.mxu0 %v72
  %1648 = vmatprep.subr.mxu0 0.0
  %1649 = vmatpush1.msra.mxu0 %v73
  %1650 = vmatprep.subr.mxu0 0.0
  %1651 = vmatpush1.msra.mxu0 %v74
  %1652 = vmatprep.subr.mxu0 0.0
  %1653 = vmatpush1.msra.mxu0 %v75
  %1654 = vmatprep.subr.mxu0 0.0
  %1655 = vmatpush1.msra.mxu0 0.0
  %1656 = vmatprep.subr.mxu0 0.0
  %1657 = vmatpush1.msra.mxu0 0.0
  %1658 = vmatprep.subr.mxu0 0.0
  %1659 = vmatpush1.msra.mxu0 0.0
  %1660 = vmatprep.subr.mxu0 0.0
  %1661 = vmatpush1.msra.mxu0 0.0
  %1662 = vmatprep.subr.mxu0 0.0
  %1663 = vmatpush1.msra.mxu0 0.0
  %1664 = vmatprep.subr.mxu0 0.0
  %1665 = vmatpush1.msra.mxu0 0.0
  %1666 = vmatprep.subr.mxu0 0.0
  %1667 = vmatpush1.msra.mxu0 0.0
  %1668 = vmatprep.subr.mxu0 0.0
  %1669 = vmatpush1.msra.mxu0 0.0
  %1670 = vmatprep.subr.mxu0 0.0
  %1671 = vmatpush1.msra.mxu0 0.0
  %1672 = vmatprep.subr.mxu0 0.0
  %1673 = vmatpush1.msra.mxu0 0.0
  %1674 = vmatprep.subr.mxu0 0.0
  %1675 = vmatpush1.msra.mxu0 0.0
  %1676 = vmatprep.subr.mxu0 0.0
  %1677 = vmatpush1.msra.mxu0 0.0
  %1678 = vmatprep.subr.mxu0 0.0
  %1679 = vmatpush1.msra.mxu0 0.0
  %1680 = vmatprep.subr.mxu0 0.0
  %1681 = vmatpush1.msra.mxu0 0.0
  %1682 = vmatprep.subr.mxu0 0.0
  %1683 = vmatpush1.msra.mxu0 0.0
  %1684 = vmatprep.subr.mxu0 0.0
  %1685 = vmatpush1.msra.mxu0 0.0
  %1686 = vmatprep.subr.mxu0 0.0
  %1687 = vmatpush1.msra.mxu0 0.0
  %1688 = vmatprep.subr.mxu0 0.0
  %1689 = vmatpush1.msra.mxu0 0.0
  %1690 = vmatprep.subr.mxu0 0.0
  %1691 = vmatpush1.msra.mxu0 0.0
  %1692 = vmatprep.subr.mxu0 0.0
  %1693 = vmatpush1.msra.mxu0 0.0
  %1694 = vmatprep.subr.mxu0 0.0
  %1695 = vmatpush1.msra.mxu0 0.0
  %1696 = vmatprep.subr.mxu0 0.0
  %1697 = vmatpush1.msra.mxu0 0.0
  %1698 = vmatprep.subr.mxu0 0.0
  %1699 = vmatpush1.msra.mxu0 0.0
  %1700 = vmatprep.subr.mxu0 0.0
  %1701 = vmatpush1.msra.mxu0 0.0
  %1702 = vmatprep.subr.mxu0 0.0
  %1703 = vmatpush1.msra.mxu0 0.0
  %1704 = vmatprep.subr.mxu0 0.0
  %1705 = vmatpush1.msra.mxu0 0.0
  %1706 = vmatprep.subr.mxu0 0.0
  %1707 = vmatpush1.msra.mxu0 0.0
  %1708 = vmatprep.subr.mxu0 0.0
  %1709 = vmatpush1.msra.mxu0 0.0
  %1710 = vmatprep.mubr.f32.mxu0 0.0
  %1711 = vmatmul.mubr.f32.gmra.mrb[0].mxu0 %v1644
  %v1712 = vpop.f32.mrb[0].mxu0
  %v1713 = vadd.f32 0.0, %v1712
  %v1714 = vpop.f32.mrb[0].mxu0
  %1715 = vdwg.mxu0
  %v1716 = vadd.f32 %v1640, %v1713
  %v1717 = vxor.u32 %v1716, 2147483648
  %v1718 = vmul.f32 %v1717, 1.442695
  %v1719 = vpow.pop %v1718
  %v1720 = vadd.f32 %v1719, 1.0
  %v1721 = vrcp.pop %v1720
  %v1722 = vmul.f32 1.0, %v1721
  %v1723 = vtanh.pop %v1716
  %v1724 = vmul.f32 %v1722, %v1511
  %1726 = vrot.lane.b32.xlu0 %v1723, 64
  %v1727 = vpop.permute.xlu0 %1726
  %v1729 = vmul.f32 %v1722, %v1727
  %1731 = vrot.lane.b32.xlu0 %v1729, 32
  %v1732 = vpop.permute.xlu0 %1731
  %v1734 = vadd.f32 %v1724, %v1732
  %v1735 = vtanh.pop %v1734
  %1737 = vrot.lane.b32.xlu0 %v1735, 64
  %v1738 = vpop.permute.xlu0 %1737
  %v1740 = vmul.f32 %v1722, %v1738
  %v1741 = vstv %s1638
  %vm1742 = vcmp.lt.s32.totalorder %v1741, %v67
  %v1743 = vsel %vm1742, 1, 0
  %1744 = vset.pattern.permute.xlu0 0
  %1745 = vperm.xlu0 %1744, %v1743
  %v1746 = vpop.permute.xlu0 %1745
  %vm1747 = vcmp.eq.s32.totalorder %v1746, 1
  %v1748 = vsel %vm1747, %v1740, %v1510
  %v1749 = vsel %vm1747, %v1734, %v1511
  %v1750 = vsel %vm1747, %v1740, 0.0
  %1752 = vrot.lane.b32.xlu0 %v1750, 32
  %v1753 = vpop.permute.xlu0 %1752
  %s1755 = scalar_lea.vmem %s55, 8
  %1756 = vst.msk [vmem:[%s1755] sm:$0xff] %vm82, %v1753
  %s1757 = sadd.s32 %s80, 7
  %s1758 = scalar_lea.vmem %s0, 56
  %v1759 = vld [vmem:[%s1758] sm:$0xff]
  %1761 = vrot.lane.b32.xlu0 %v1629, 32
  %v1762 = vpop.permute.xlu0 %1761
  %v1763 = vsel %vm82, %v1762, 0
  %1765 = vmatprep.subr.mxu0 0.0
  %1766 = vmatpush1.msra.mxu0 %v68
  %1767 = vmatprep.subr.mxu0 0.0
  %1768 = vmatpush1.msra.mxu0 %v69
  %1769 = vmatprep.subr.mxu0 0.0
  %1770 = vmatpush1.msra.mxu0 %v70
  %1771 = vmatprep.subr.mxu0 0.0
  %1772 = vmatpush1.msra.mxu0 %v71
  %1773 = vmatprep.subr.mxu0 0.0
  %1774 = vmatpush1.msra.mxu0 0.0
  %1775 = vmatprep.subr.mxu0 0.0
  %1776 = vmatpush1.msra.mxu0 0.0
  %1777 = vmatprep.subr.mxu0 0.0
  %1778 = vmatpush1.msra.mxu0 0.0
  %1779 = vmatprep.subr.mxu0 0.0
  %1780 = vmatpush1.msra.mxu0 0.0
  %1781 = vmatprep.subr.mxu0 0.0
  %1782 = vmatpush1.msra.mxu0 0.0
  %1783 = vmatprep.subr.mxu0 0.0
  %1784 = vmatpush1.msra.mxu0 0.0
  %1785 = vmatprep.subr.mxu0 0.0
  %1786 = vmatpush1.msra.mxu0 0.0
  %1787 = vmatprep.subr.mxu0 0.0
  %1788 = vmatpush1.msra.mxu0 0.0
  %1789 = vmatprep.subr.mxu0 0.0
  %1790 = vmatpush1.msra.mxu0 0.0
  %1791 = vmatprep.subr.mxu0 0.0
  %1792 = vmatpush1.msra.mxu0 0.0
  %1793 = vmatprep.subr.mxu0 0.0
  %1794 = vmatpush1.msra.mxu0 0.0
  %1795 = vmatprep.subr.mxu0 0.0
  %1796 = vmatpush1.msra.mxu0 0.0
  %1797 = vmatprep.subr.mxu0 0.0
  %1798 = vmatpush1.msra.mxu0 0.0
  %1799 = vmatprep.subr.mxu0 0.0
  %1800 = vmatpush1.msra.mxu0 0.0
  %1801 = vmatprep.subr.mxu0 0.0
  %1802 = vmatpush1.msra.mxu0 0.0
  %1803 = vmatprep.subr.mxu0 0.0
  %1804 = vmatpush1.msra.mxu0 0.0
  %1805 = vmatprep.subr.mxu0 0.0
  %1806 = vmatpush1.msra.mxu0 0.0
  %1807 = vmatprep.subr.mxu0 0.0
  %1808 = vmatpush1.msra.mxu0 0.0
  %1809 = vmatprep.subr.mxu0 0.0
  %1810 = vmatpush1.msra.mxu0 0.0
  %1811 = vmatprep.subr.mxu0 0.0
  %1812 = vmatpush1.msra.mxu0 0.0
  %1813 = vmatprep.subr.mxu0 0.0
  %1814 = vmatpush1.msra.mxu0 0.0
  %1815 = vmatprep.subr.mxu0 0.0
  %1816 = vmatpush1.msra.mxu0 0.0
  %1817 = vmatprep.subr.mxu0 0.0
  %1818 = vmatpush1.msra.mxu0 0.0
  %1819 = vmatprep.subr.mxu0 0.0
  %1820 = vmatpush1.msra.mxu0 0.0
  %1821 = vmatprep.subr.mxu0 0.0
  %1822 = vmatpush1.msra.mxu0 0.0
  %1823 = vmatprep.subr.mxu0 0.0
  %1824 = vmatpush1.msra.mxu0 0.0
  %1825 = vmatprep.subr.mxu0 0.0
  %1826 = vmatpush1.msra.mxu0 0.0
  %1827 = vmatprep.subr.mxu0 0.0
  %1828 = vmatpush1.msra.mxu0 0.0
  %1829 = vmatprep.mubr.f32.mxu0 0.0
  %1830 = vmatmul.mubr.f32.gmra.mrb[0].mxu0 %v1763
  %v1831 = vpop.f32.mrb[0].mxu0
  %v1832 = vadd.f32 0.0, %v1831
  %v1833 = vpop.f32.mrb[0].mxu0
  %1834 = vdwg.mxu0
  %v1835 = vadd.f32 %v1759, %v1832
  %v1836 = vxor.u32 %v1835, 2147483648
  %v1837 = vmul.f32 %v1836, 1.442695
  %v1838 = vpow.pop %v1837
  %v1839 = vadd.f32 %v1838, 1.0
  %v1840 = vrcp.pop %v1839
  %v1841 = vmul.f32 1.0, %v1840
  %v1842 = vtanh.pop %v1835
  %v1843 = vmul.f32 %v1841, %v1630
  %1845 = vrot.lane.b32.xlu0 %v1842, 64
  %v1846 = vpop.permute.xlu0 %1845
  %v1848 = vmul.f32 %v1841, %v1846
  %1850 = vrot.lane.b32.xlu0 %v1848, 32
  %v1851 = vpop.permute.xlu0 %1850
  %v1853 = vadd.f32 %v1843, %v1851
  %v1854 = vtanh.pop %v1853
  %1856 = vrot.lane.b32.xlu0 %v1854, 64
  %v1857 = vpop.permute.xlu0 %1856
  %v1859 = vmul.f32 %v1841, %v1857
  %v1860 = vstv %s1757
  %vm1861 = vcmp.lt.s32.totalorder %v1860, %v67
  %v1862 = vsel %vm1861, 1, 0
  %1863 = vset.pattern.permute.xlu0 0
  %1864 = vperm.xlu0 %1863, %v1862
  %v1865 = vpop.permute.xlu0 %1864
  %vm1866 = vcmp.eq.s32.totalorder %v1865, 1
  %v1867 = vsel %vm1866, %v1859, %v1629
  %v1868 = vsel %vm1866, %v1853, %v1630
  %v1869 = vsel %vm1866, %v1859, 0.0
  %1871 = vrot.lane.b32.xlu0 %v1869, 32
  %v1872 = vpop.permute.xlu0 %1871
  %s1874 = scalar_lea.vmem %s5, 56
  %1875 = vst.msk [vmem:[%s1874] sm:$0xff] %vm82, %v1872
  %v1876 = vld [vmem:[%s47] sm:$0xff]
  %1878 = vrot.lane.b32.xlu0 %v1748, 32
  %v1879 = vpop.permute.xlu0 %1878
  %v1880 = vsel %vm82, %v1879, 0
  %1882 = vmatprep.subr.mxu0 0.0
  %1883 = vmatpush1.msra.mxu0 %v72
  %1884 = vmatprep.subr.mxu0 0.0
  %1885 = vmatpush1.msra.mxu0 %v73
  %1886 = vmatprep.subr.mxu0 0.0
  %1887 = vmatpush1.msra.mxu0 %v74
  %1888 = vmatprep.subr.mxu0 0.0
  %1889 = vmatpush1.msra.mxu0 %v75
  %1890 = vmatprep.subr.mxu0 0.0
  %1891 = vmatpush1.msra.mxu0 0.0
  %1892 = vmatprep.subr.mxu0 0.0
  %1893 = vmatpush1.msra.mxu0 0.0
  %1894 = vmatprep.subr.mxu0 0.0
  %1895 = vmatpush1.msra.mxu0 0.0
  %1896 = vmatprep.subr.mxu0 0.0
  %1897 = vmatpush1.msra.mxu0 0.0
  %1898 = vmatprep.subr.mxu0 0.0
  %1899 = vmatpush1.msra.mxu0 0.0
  %1900 = vmatprep.subr.mxu0 0.0
  %1901 = vmatpush1.msra.mxu0 0.0
  %1902 = vmatprep.subr.mxu0 0.0
  %1903 = vmatpush1.msra.mxu0 0.0
  %1904 = vmatprep.subr.mxu0 0.0
  %1905 = vmatpush1.msra.mxu0 0.0
  %1906 = vmatprep.subr.mxu0 0.0
  %1907 = vmatpush1.msra.mxu0 0.0
  %1908 = vmatprep.subr.mxu0 0.0
  %1909 = vmatpush1.msra.mxu0 0.0
  %1910 = vmatprep.subr.mxu0 0.0
  %1911 = vmatpush1.msra.mxu0 0.0
  %1912 = vmatprep.subr.mxu0 0.0
  %1913 = vmatpush1.msra.mxu0 0.0
  %1914 = vmatprep.subr.mxu0 0.0
  %1915 = vmatpush1.msra.mxu0 0.0
  %1916 = vmatprep.subr.mxu0 0.0
  %1917 = vmatpush1.msra.mxu0 0.0
  %1918 = vmatprep.subr.mxu0 0.0
  %1919 = vmatpush1.msra.mxu0 0.0
  %1920 = vmatprep.subr.mxu0 0.0
  %1921 = vmatpush1.msra.mxu0 0.0
  %1922 = vmatprep.subr.mxu0 0.0
  %1923 = vmatpush1.msra.mxu0 0.0
  %1924 = vmatprep.subr.mxu0 0.0
  %1925 = vmatpush1.msra.mxu0 0.0
  %1926 = vmatprep.subr.mxu0 0.0
  %1927 = vmatpush1.msra.mxu0 0.0
  %1928 = vmatprep.subr.mxu0 0.0
  %1929 = vmatpush1.msra.mxu0 0.0
  %1930 = vmatprep.subr.mxu0 0.0
  %1931 = vmatpush1.msra.mxu0 0.0
  %1932 = vmatprep.subr.mxu0 0.0
  %1933 = vmatpush1.msra.mxu0 0.0
  %1934 = vmatprep.subr.mxu0 0.0
  %1935 = vmatpush1.msra.mxu0 0.0
  %1936 = vmatprep.subr.mxu0 0.0
  %1937 = vmatpush1.msra.mxu0 0.0
  %1938 = vmatprep.subr.mxu0 0.0
  %1939 = vmatpush1.msra.mxu0 0.0
  %1940 = vmatprep.subr.mxu0 0.0
  %1941 = vmatpush1.msra.mxu0 0.0
  %1942 = vmatprep.subr.mxu0 0.0
  %1943 = vmatpush1.msra.mxu0 0.0
  %1944 = vmatprep.subr.mxu0 0.0
  %1945 = vmatpush1.msra.mxu0 0.0
  %1946 = vmatprep.mubr.f32.mxu0 0.0
  %1947 = vmatmul.mubr.f32.gmra.mrb[0].mxu0 %v1880
  %v1948 = vpop.f32.mrb[0].mxu0
  %v1949 = vadd.f32 0.0, %v1948
  %v1950 = vpop.f32.mrb[0].mxu0
  %1951 = vdwg.mxu0
  %v1952 = vadd.f32 %v1876, %v1949
  %v1953 = vxor.u32 %v1952, 2147483648
  %v1954 = vmul.f32 %v1953, 1.442695
  %v1955 = vpow.pop %v1954
  %v1956 = vadd.f32 %v1955, 1.0
  %v1957 = vrcp.pop %v1956
  %v1958 = vmul.f32 1.0, %v1957
  %v1959 = vtanh.pop %v1952
  %v1960 = vmul.f32 %v1958, %v1749
  %1962 = vrot.lane.b32.xlu0 %v1959, 64
  %v1963 = vpop.permute.xlu0 %1962
  %v1965 = vmul.f32 %v1958, %v1963
  %1967 = vrot.lane.b32.xlu0 %v1965, 32
  %v1968 = vpop.permute.xlu0 %1967
  %v1970 = vadd.f32 %v1960, %v1968
  %v1971 = vtanh.pop %v1970
  %1973 = vrot.lane.b32.xlu0 %v1971, 64
  %v1974 = vpop.permute.xlu0 %1973
  %v1976 = vmul.f32 %v1958, %v1974
  %v1977 = vstv %s204
  %vm1978 = vcmp.lt.s32.totalorder %v1977, %v67
  %v1979 = vsel %vm1978, 1, 0
  %1980 = vset.pattern.permute.xlu0 0
  %1981 = vperm.xlu0 %1980, %v1979
  %v1982 = vpop.permute.xlu0 %1981
  %vm1983 = vcmp.eq.s32.totalorder %v1982, 1
  %v1984 = vsel %vm1983, %v1976, %v1748
  %v1985 = vsel %vm1983, %v1970, %v1749
  %v1986 = vsel %vm1983, %v1976, 0.0
  %1988 = vrot.lane.b32.xlu0 %v1986, 32
  %v1989 = vpop.permute.xlu0 %1988
  %1991 = vst.msk [vmem:[%s55] sm:$0xff] %vm82, %v1989
  %1993 = vrot.lane.b32.xlu0 %v1867, 32
  %v1994 = vpop.permute.xlu0 %1993
  %1996 = vst.msk [vmem:[#allocation2] sm:$0xff] %vm82, %v1994
  %1998 = vrot.lane.b32.xlu0 %v1868, 96
  %v1999 = vpop.permute.xlu0 %1998
  %2001 = vst.msk [vmem:[#allocation3] sm:$0xff] %vm82, %v1999
  %2003 = vrot.lane.b32.xlu0 %v1984, 32
  %v2004 = vpop.permute.xlu0 %2003
  %2006 = vst.msk [vmem:[#allocation4] sm:$0xff] %vm82, %v2004
  %2008 = vrot.lane.b32.xlu0 %v1985, 96
  %v2009 = vpop.permute.xlu0 %2008
  %2011 = vst.msk [vmem:[#allocation5] sm:$0xff] %vm82, %v2009
  %s2012 = ssub.s32 0, 0
  %s2013 = smul.u32 8, %s2012
  %p2014 = scmp.lt.s32.totalorder %s2013, 7
  %s2015 = scalar_select %p2014, %s2013, 7
  %s2016 = smul.addr %s2015, 8
  %s2017 = scalar_lea.vmem %s6, %s2016
  // Predicated region
  $region26: #{word_rnn_forward.1} parent=0 // pred_check
    _
  $region27: #{word_rnn_forward.1} parent=0 // pred_check_branch
    %2019 = sbr.rel (0) target = $region29
  $region28: #{word_rnn_forward.1} parent=0 // pred_region
    _
  $region29: #{word_rnn_forward.1} parent=0 // pred_fallthru
    _
  // Predicated region
  $region30: #{word_rnn_forward.1} parent=0 // pred_check
    _
  $region31: #{word_rnn_forward.1} parent=0 // pred_check_branch
    %2021 = sbr.rel (0) target = $region33
  $region32: #{word_rnn_forward.1} parent=0 // pred_region
    %s2022 = ssub.s32 0, 0
    %s2023 = smul.u32 8, %s2022
  $region33: #{word_rnn_forward.1} parent=0 // pred_fallthru
    _
  // Predicated region
  $region34: #{word_rnn_forward.1} parent=0 // pred_check
    _
  $region35: #{word_rnn_forward.1} parent=0 // pred_check_branch
    %2025 = sbr.rel (0) target = $region37
  $region36: #{word_rnn_forward.1} parent=0 // pred_region
    _
  $region37: #{word_rnn_forward.1} parent=0 // pred_fallthru
    _
  // Predicated region
  $region38: #{word_rnn_forward.1} parent=0 // pred_check
    _
  $region39: #{word_rnn_forward.1} parent=0 // pred_check_branch
    %2027 = sbr.rel (0) target = $region41
  $region40: #{word_rnn_forward.1} parent=0 // pred_region
    %s2028 = ssub.s32 0, 0
    %s2029 = smul.u32 8, %s2028
    %p2030 = scmp.lt.s32.totalorder %s2029, 7
    %s2031 = scalar_select %p2030, %s2029, 7
    %s2032 = smul.addr %s2031, 8
    %s2033 = scalar_lea.vmem %s6, %s2032
  $region41: #{word_rnn_forward.1} parent=0 // pred_fallthru
    _

</llo_original>
